<compile_context>
chip_gen: v6e
topology: v6e:2x2x1
jax: 0.10.0
libtpu: 0.0.40
codegen_flags: <defaults>
</compile_context>

<pallas_src>
import functools

import jax
import jax.numpy as jnp
from jax import lax
from jax.experimental import pallas as pl
from jax.experimental.pallas import tpu as pltpu


def mamba_block_kernel(*refs, diagonal_A: bool, unroll: int):
    f32, bf16 = jnp.float32, jnp.bfloat16
    if diagonal_A:
        (x_ref, w_in_x_ref, b_in_x_ref, w_in_g_ref, b_in_g_ref,
         w_conv_ref, b_conv_ref, w_ssm_ref, b_ssm_ref,
         a_diag_ref, d_vec_ref, w_out_ref, b_out_ref,
         out_ref, xwork_ref, scan_ref, h_ref) = refs
    else:
        (x_ref, w_in_x_ref, b_in_x_ref, w_in_g_ref, b_in_g_ref,
         w_conv_ref, b_conv_ref, w_ssm_ref, b_ssm_ref,
         a_t_ref, b_vec_ref, c_vec_ref, d_vec_ref, w_out_ref, b_out_ref,
         out_ref, xwork_ref, scan_ref, h_ref) = refs

    BB, TL, Din = x_ref.shape
    K, H = w_conv_ref.shape
    S = w_ssm_ref.shape[1]
    padl = xwork_ref.shape[1] - TL            # sublane-aligned conv halo pad
    l_idx = pl.program_id(1)

    # ---- reset per-sequence carries at the first L tile ----------------------
    @pl.when(l_idx == 0)
    def _():
        xwork_ref[:, :padl, :] = jnp.zeros((BB, padl, H), f32)
        scan_ref[:, :TL, :] = jnp.zeros((BB, TL, S), f32)   # zero-pad rows for scan
        h_ref[...] = jnp.zeros((BB, S), f32)

    # ---- in_proj: two lane-aligned matmuls (bf16 inputs, f32 accumulation) ---
    x2d = x_ref[...].reshape(BB * TL, Din)               # already bf16
    xh = (jnp.dot(x2d, w_in_x_ref[...], preferred_element_type=f32)
          + b_in_x_ref[...]).reshape(BB, TL, H)
    gate = (jnp.dot(x2d, w_in_g_ref[...], preferred_element_type=f32)
            + b_in_g_ref[...]).reshape(BB, TL, H)

    # ---- causal depthwise conv over L via a haloed scratch --------------------
    xwork_ref[:, padl:, :] = xh
    w_conv = w_conv_ref[...]                              # (K, H)
    s0 = padl - (K - 1)
    conv = xwork_ref[:, s0:s0 + TL, :] * w_conv[0:1, :].reshape(1, 1, H)
    for k in range(1, K):                                 # K is tiny: static unroll
        conv = conv + (xwork_ref[:, s0 + k:s0 + k + TL, :]
                       * w_conv[k:k + 1, :].reshape(1, 1, H))
    conv = conv + b_conv_ref[...].reshape(1, 1, H)
    x_act = jax.nn.silu(conv)                             # (BB, TL, H)
    if K > 1:
        # stash the last K-1 rows of this tile as the next tile's halo
        xwork_ref[:, s0:padl, :] = xwork_ref[:, s0 + TL:, :]

    # ---- ssm_proj (diagonal path: B*C already folded into w_ssm/b_ssm) --------
    x_ssm = (jnp.dot(x_act.reshape(BB * TL, H).astype(bf16),
                     w_ssm_ref[...], preferred_element_type=f32)
             + b_ssm_ref[...]).reshape(BB, TL, S)

    if diagonal_A:
        # g_t = a ⊙ g_{t-1} + u_t with constant a: log-depth doubling scan.
        # scan_ref rows [0:TL] are zeros (shift padding), rows [TL:2TL] hold g.
        a_diag = a_diag_ref[...]                          # (1, S)
        scan_ref[:, TL:, :] = x_ssm
        # inject the cross-tile carry into timestep 0: u0 += a ⊙ carry
        scan_ref[:, TL:TL + 1, :] = (scan_ref[:, TL:TL + 1, :]
                                     + (h_ref[...] * a_diag).reshape(BB, 1, S))
        decay = a_diag.reshape(1, 1, S)
        shift = 1
        while shift < TL:                                 # static Python loop
            prev = scan_ref[:, TL - shift:2 * TL - shift, :]
            scan_ref[:, TL:, :] = scan_ref[:, TL:, :] + decay * prev
            decay = decay * decay
            shift *= 2
        g = scan_ref[:, TL:, :]                           # g_t = C ⊙ h_t (folded)
        h_ref[...] = g[:, TL - 1, :]                      # carry to next tile
        scale = jnp.sum(g, axis=-1, keepdims=True)        # one full-tile reduce
    else:
        # General dense A fallback (BB rows per MXU matmul, reduce hoisted).
        a_t = a_t_ref[...]
        c_vec = c_vec_ref[...].reshape(1, 1, S)
        scan_ref[:, TL:, :] = x_ssm * b_vec_ref[...].reshape(1, 1, S)

        def step(t, h):
            u_t = scan_ref[:, pl.ds(TL + t, 1), :].reshape(BB, S)
            h_new = jnp.dot(h, a_t, preferred_element_type=f32) + u_t
            scan_ref[:, pl.ds(TL + t, 1), :] = h_new.reshape(BB, 1, S)
            return h_new

        h_ref[...] = lax.fori_loop(0, TL, step, h_ref[...], unroll=unroll)
        scale = jnp.sum(scan_ref[:, TL:, :] * c_vec, axis=-1, keepdims=True)

    # ---- y_t = (C.h_t + D) * x_act_t, gate, out_proj ---------------------------
    ssm_out = (scale + d_vec_ref[...].reshape(1, 1, H)) * x_act
    gated = ssm_out * jax.nn.silu(gate)                   # dropout = identity (eval)
    y = (jnp.dot(gated.reshape(BB * TL, H).astype(bf16),
                 w_out_ref[...], preferred_element_type=f32)
         + b_out_ref[...])
    out_ref[...] = y.reshape(BB, TL, Din).astype(out_ref.dtype)


def _round_up(n, m):
    return ((n + m - 1) // m) * m


def _pad2(a, rows, cols):
    r, c = a.shape
    if r == rows and c == cols:
        return a
    return jnp.pad(a, ((0, rows - r), (0, cols - c)))


def mamba_block_forward(x, params, *, tile_l=None, diagonal_A=None, unroll=8,
                        lane_multiple=128, batch_core_parallel=False):
    f32, bf16 = jnp.float32, jnp.bfloat16
    B, L, Din = x.shape
    H = params["d_vec"].shape[1]
    S = params["b_vec"].shape[1]
    K = params["w_conv"].shape[0]

    A = params["A"].astype(f32)
    if diagonal_A is None:
        try:   # auto-detect diagonal A; fall back to the dense path under tracing
            diagonal_A = bool(jnp.all(A == jnp.diag(jnp.diagonal(A))))
        except Exception:
            diagonal_A = False

    if tile_l is None:
        # TODO(synk): make generation-aware (512-1024 on 128 MiB v5e/v6e VMEM).
        tile_l = L if L <= 256 else 256
    assert L % tile_l == 0, "L must be a multiple of tile_l"
    assert tile_l % 8 == 0, "tile_l must be sublane aligned"
    assert tile_l >= K - 1, "tile_l must cover the conv halo"
    nl = L // tile_l
    padl = max(8, _round_up(K - 1, 8))
    unroll = max(1, min(unroll, tile_l))

    # batch blocking: largest divisor of B that fills the 8 sublanes
    bb = 1
    for cand in range(min(B, 8), 0, -1):
        if B % cand == 0:
            bb = cand
            break
    nb = B // bb

    # lane padding to full 128-lane vregs / MXU tiles (zero pad => same math)
    Din_p = _round_up(Din, lane_multiple)
    H_p = _round_up(H, lane_multiple)
    S_p = _round_up(S, lane_multiple)

    w_in, b_in = params["w_in"].astype(f32), params["b_in"].astype(f32)
    w_in_x = _pad2(w_in[:, :H], Din_p, H_p).astype(bf16)
    w_in_g = _pad2(w_in[:, H:], Din_p, H_p).astype(bf16)
    b_in_x = _pad2(b_in[:, :H], 1, H_p)
    b_in_g = _pad2(b_in[:, H:], 1, H_p)
    w_conv_p = _pad2(params["w_conv"].astype(f32), K, H_p)
    b_conv_p = _pad2(params["b_conv"].astype(f32), 1, H_p)
    d_vec_p = _pad2(params["d_vec"].astype(f32), 1, H_p)
    w_out_p = _pad2(params["w_out"].astype(f32), H_p, Din_p).astype(bf16)
    b_out_p = _pad2(params["b_out"].astype(f32), 1, Din_p)
    b_vec = params["b_vec"].astype(f32)
    c_vec = params["c_vec"].astype(f32)
    w_ssm = params["w_ssm"].astype(f32)
    b_ssm = params["b_ssm"].astype(f32)

    if diagonal_A:
        bc = b_vec * c_vec                         # fold B*C into ssm_proj
        w_ssm_p = _pad2(w_ssm * bc, H_p, S_p).astype(bf16)
        b_ssm_p = _pad2(b_ssm * bc, 1, S_p)
        a_extra = [_pad2(jnp.diagonal(A).reshape(1, S), 1, S_p)]
        a_extra_shapes = [(1, S_p)]
    else:
        w_ssm_p = _pad2(w_ssm, H_p, S_p).astype(bf16)
        b_ssm_p = _pad2(b_ssm, 1, S_p)
        a_extra = [_pad2(A.T, S_p, S_p), _pad2(b_vec, 1, S_p), _pad2(c_vec, 1, S_p)]
        a_extra_shapes = [(S_p, S_p), (1, S_p), (1, S_p)]

    # stream x as bf16 (matmuls are bf16-in / f32-acc anyway); pad lane dim
    x_p = jnp.pad(x.astype(bf16), ((0, 0), (0, 0), (0, Din_p - Din)))

    args = ([x_p, w_in_x, b_in_x, w_in_g, b_in_g, w_conv_p, b_conv_p,
             w_ssm_p, b_ssm_p] + a_extra + [d_vec_p, w_out_p, b_out_p])
    weight_shapes = ([(Din_p, H_p), (1, H_p), (Din_p, H_p), (1, H_p),
                      (K, H_p), (1, H_p), (H_p, S_p), (1, S_p)]
                     + a_extra_shapes + [(1, H_p), (H_p, Din_p), (1, Din_p)])

    x_map = lambda b, l: (b, l, 0)
    w_map = lambda b, l: (0, 0)                    # weights stay VMEM-resident

    scratch_shapes = [
        pltpu.VMEM((bb, padl + tile_l, H_p), f32),     # conv tile + halo
        pltpu.VMEM((bb, 2 * tile_l, S_p), f32),        # scan work / state history
        pltpu.VMEM((bb, S_p), f32),                    # recurrence carry
    ]

    def nbytes(shape, dt):
        n = 1
        for d in shape:
            n *= d
        return n * jnp.dtype(dt).itemsize

    weight_bytes = sum(nbytes(s, a.dtype) for s, a in zip(weight_shapes, args[1:]))
    x_bytes = 2 * nbytes((bb, tile_l, Din_p), bf16)
    out_bytes = 2 * nbytes((bb, tile_l, Din_p), f32)
    scratch_bytes = (nbytes((bb, padl + tile_l, H_p), f32)
                     + nbytes((bb, 2 * tile_l, S_p), f32)
                     + nbytes((bb, S_p), f32))

    flops = (2 * B * L * (2 * Din_p * H_p + K * H_p + H_p * S_p + H_p * Din_p)
             + 6 * B * L * S_p)
    transcendentals = 2 * B * L * H_p
    bytes_accessed = int(x_p.size * 2 + B * L * Din_p * 4
                         + sum(int(a.size) * a.dtype.itemsize for a in args[1:]))

    kernel = functools.partial(mamba_block_kernel, diagonal_A=diagonal_A,
                               unroll=unroll)
    batch_sem = pltpu.CORE_PARALLEL if batch_core_parallel else "parallel"

    def build_and_run(single_buffer_weights):
        if single_buffer_weights:
            wspec = lambda shp: pl.BlockSpec(shp, w_map,
                                             pipeline_mode=pl.Buffered(1))
        else:
            wspec = lambda shp: pl.BlockSpec(shp, w_map)
        in_specs = ([pl.BlockSpec((bb, tile_l, Din_p), x_map)]
                    + [wspec(s) for s in weight_shapes])
        out_specs = pl.BlockSpec((bb, tile_l, Din_p), x_map)
        wbuf = 1 if single_buffer_weights else 2
        vmem_limit = int(1.5 * (weight_bytes * wbuf + x_bytes + out_bytes
                                + scratch_bytes)) + (8 << 20)
        vmem_limit = max(32 << 20, min(vmem_limit, 128 << 20))
        return pl.pallas_call(
            kernel,
            out_shape=jax.ShapeDtypeStruct((B, L, Din_p), f32),
            grid=(nb, nl),
            in_specs=in_specs,
            out_specs=out_specs,
            scratch_shapes=scratch_shapes,
            compiler_params=pltpu.CompilerParams(
                dimension_semantics=(batch_sem, "arbitrary"),
                vmem_limit_bytes=vmem_limit),
            cost_estimate=pl.CostEstimate(
                flops=flops, transcendentals=transcendentals,
                bytes_accessed=bytes_accessed),
        )(*args)

    try:
        out_p = build_and_run(True)      # single-buffer VMEM-resident weights
    except Exception:
        out_p = build_and_run(False)     # fallback if pl.Buffered(1) unsupported

    return out_p[:, :, :Din]


def init_params(key, input_size, hidden_size, d_state, d_conv):
    ks = jax.random.split(key, 10)
    f32 = jnp.float32
    p = {}
    p["w_in"] = (jax.random.normal(ks[0], (input_size, 2 * hidden_size)) * 0.05).astype(f32)
    p["b_in"] = (jax.random.normal(ks[1], (1, 2 * hidden_size)) * 0.01).astype(f32)
    p["w_conv"] = (jax.random.normal(ks[2], (d_conv, hidden_size)) * 0.1).astype(f32)
    p["b_conv"] = (jax.random.normal(ks[3], (1, hidden_size)) * 0.01).astype(f32)
    p["w_ssm"] = (jax.random.normal(ks[4], (hidden_size, d_state)) * 0.05).astype(f32)
    p["b_ssm"] = (jax.random.normal(ks[5], (1, d_state)) * 0.01).astype(f32)
    p["A"] = jnp.diag(-jnp.ones((d_state,), f32))       # as in the torch module
    p["b_vec"] = (jax.random.normal(ks[6], (1, d_state)) * 0.5).astype(f32)
    p["c_vec"] = (jax.random.normal(ks[7], (1, d_state)) * 0.5).astype(f32)
    p["d_vec"] = jnp.ones((1, hidden_size), f32)
    p["w_out"] = (jax.random.normal(ks[8], (hidden_size, input_size)) * 0.05).astype(f32)
    p["b_out"] = (jax.random.normal(ks[9], (1, input_size)) * 0.01).astype(f32)
    return p


def reference_forward(x, p):
    """Pure-JAX (f32) mirror of the PyTorch forward (eval mode)."""
    B, L, Din = x.shape
    H = p["d_vec"].shape[1]
    S = p["b_vec"].shape[1]
    K = p["w_conv"].shape[0]
    proj = jnp.einsum("bld,dh->blh", x, p["w_in"]) + p["b_in"][0]
    xh, gate = proj[..., :H], proj[..., H:]
    xpad = jnp.pad(xh, ((0, 0), (K - 1, 0), (0, 0)))
    conv = sum(xpad[:, k:k + L, :] * p["w_conv"][k] for k in range(K)) + p["b_conv"][0]
    x_act = jax.nn.silu(conv)
    x_ssm = jnp.einsum("blh,hs->bls", x_act, p["w_ssm"]) + p["b_ssm"][0]
    A = p["A"]
    h = jnp.zeros((B, S), jnp.float32)
    outs = []
    for t in range(L):
        h = jnp.einsum("ij,bj->bi", A, h) + x_ssm[:, t, :] * p["b_vec"][0]
        y_t = jnp.einsum("j,bj->b", p["c_vec"][0], h)[:, None] * x_act[:, t, :] \
            + p["d_vec"][0] * x_act[:, t, :]
        outs.append(y_t)
    ssm_out = jnp.stack(outs, axis=1)
    y = ssm_out * jax.nn.silu(gate)                      # dropout identity (eval)
    return jnp.einsum("blh,hd->bld", y, p["w_out"]) + p["b_out"][0]


if __name__ == "__main__":
    B, L = 2, 16                                         # 2 L-tiles of 8 -> exercises carries
    input_size, hidden_size, d_state, d_conv = 16, 32, 32, 4

    key = jax.random.PRNGKey(0)
    kx, kp = jax.random.split(key)
    x = jax.random.normal(kx, (B, L, input_size), dtype=jnp.float32)
    params = init_params(kp, input_size, hidden_size, d_state, d_conv)

    out = mamba_block_forward(x, params, tile_l=8)       # diagonal A auto-detected
    out = jax.block_until_ready(out)

    ref = reference_forward(x, params)
    assert out.shape == (B, L, input_size)
    max_err = float(jnp.max(jnp.abs(out - ref)))
    assert jnp.allclose(out, ref, atol=2e-3, rtol=2e-3), f"mismatch, max_err={max_err}"

    print("KERNEL_OK")
</pallas_src>

<mosaic_0001>
module attributes {stable_mosaic.version = 11 : i64} {
  func.func @mamba_block_kernel(%arg0: i32, %arg1: i32, %arg2: memref<2x8x128xbf16, #tpu.memory_space<vmem>>, %arg3: memref<128x128xbf16, #tpu.memory_space<vmem>>, %arg4: memref<1x128xf32, #tpu.memory_space<vmem>>, %arg5: memref<128x128xbf16, #tpu.memory_space<vmem>>, %arg6: memref<1x128xf32, #tpu.memory_space<vmem>>, %arg7: memref<4x128xf32, #tpu.memory_space<vmem>>, %arg8: memref<1x128xf32, #tpu.memory_space<vmem>>, %arg9: memref<128x128xbf16, #tpu.memory_space<vmem>>, %arg10: memref<1x128xf32, #tpu.memory_space<vmem>>, %arg11: memref<1x128xf32, #tpu.memory_space<vmem>>, %arg12: memref<1x128xf32, #tpu.memory_space<vmem>>, %arg13: memref<128x128xbf16, #tpu.memory_space<vmem>>, %arg14: memref<1x128xf32, #tpu.memory_space<vmem>>, %arg15: memref<2x8x128xf32, #tpu.memory_space<vmem>>, %arg16: memref<2x16x128xf32, #tpu.memory_space<vmem>>, %arg17: memref<2x16x128xf32, #tpu.memory_space<vmem>>, %arg18: memref<2x128xf32, #tpu.memory_space<vmem>>) attributes {dimension_semantics = [#tpu.dimension_semantics<parallel>, #tpu.dimension_semantics<arbitrary>], iteration_bounds = array<i64: 1, 2>, scalar_prefetch = 0 : i64, scratch_operands = 3 : i64, tpu.core_type = #tpu.core_type<tc>, window_params = [{transform_indices = @transform_0, window_bounds = array<i64: 2, 8, 128>}, {pipeline_mode = #tpu.pipeline_mode<synchronous>, transform_indices = @transform_1, window_bounds = array<i64: 128, 128>}, {pipeline_mode = #tpu.pipeline_mode<synchronous>, transform_indices = @transform_2, window_bounds = array<i64: 1, 128>}, {pipeline_mode = #tpu.pipeline_mode<synchronous>, transform_indices = @transform_3, window_bounds = array<i64: 128, 128>}, {pipeline_mode = #tpu.pipeline_mode<synchronous>, transform_indices = @transform_4, window_bounds = array<i64: 1, 128>}, {pipeline_mode = #tpu.pipeline_mode<synchronous>, transform_indices = @transform_5, window_bounds = array<i64: 4, 128>}, {pipeline_mode = #tpu.pipeline_mode<synchronous>, transform_indices = @transform_6, window_bounds = array<i64: 1, 128>}, {pipeline_mode = #tpu.pipeline_mode<synchronous>, transform_indices = @transform_7, window_bounds = array<i64: 128, 128>}, {pipeline_mode = #tpu.pipeline_mode<synchronous>, transform_indices = @transform_8, window_bounds = array<i64: 1, 128>}, {pipeline_mode = #tpu.pipeline_mode<synchronous>, transform_indices = @transform_9, window_bounds = array<i64: 1, 128>}, {pipeline_mode = #tpu.pipeline_mode<synchronous>, transform_indices = @transform_10, window_bounds = array<i64: 1, 128>}, {pipeline_mode = #tpu.pipeline_mode<synchronous>, transform_indices = @transform_11, window_bounds = array<i64: 128, 128>}, {pipeline_mode = #tpu.pipeline_mode<synchronous>, transform_indices = @transform_12, window_bounds = array<i64: 1, 128>}, {transform_indices = @transform_13, window_bounds = array<i64: 2, 8, 128>}]} {
    %c0_i32 = arith.constant 0 : i32
    %0 = arith.cmpi eq, %arg1, %c0_i32 : i32
    %1 = arith.extui %0 : i1 to i32
    %c0_i32_0 = arith.constant 0 : i32
    %2 = arith.cmpi ne, %1, %c0_i32_0 : i32
    scf.if %2 {
      %cst_94 = arith.constant 0.000000e+00 : f32
      %120 = vector.broadcast %cst_94 : f32 to vector<2x8x128xf32>
      %c0_95 = arith.constant 0 : index
      %c0_96 = arith.constant 0 : index
      %c0_97 = arith.constant 0 : index
      %121 = vector.load %arg16[%c0_95, %c0_96, %c0_97] : memref<2x16x128xf32, #tpu.memory_space<vmem>>, vector<2x8x128xf32>
      tpu.vector_store %arg16[%c0_95, %c0_96, %c0_97], %120 {strides = array<i32>} : memref<2x16x128xf32, #tpu.memory_space<vmem>>, vector<2x8x128xf32>,
      %cst_98 = arith.constant 0.000000e+00 : f32
      %122 = vector.broadcast %cst_98 : f32 to vector<2x8x128xf32>
      %c0_99 = arith.constant 0 : index
      %c0_100 = arith.constant 0 : index
      %c0_101 = arith.constant 0 : index
      %123 = vector.load %arg17[%c0_99, %c0_100, %c0_101] : memref<2x16x128xf32, #tpu.memory_space<vmem>>, vector<2x8x128xf32>
      tpu.vector_store %arg17[%c0_99, %c0_100, %c0_101], %122 {strides = array<i32>} : memref<2x16x128xf32, #tpu.memory_space<vmem>>, vector<2x8x128xf32>,
      %cst_102 = arith.constant 0.000000e+00 : f32
      %124 = vector.broadcast %cst_102 : f32 to vector<2x128xf32>
      %c0_103 = arith.constant 0 : index
      %c0_104 = arith.constant 0 : index
      %125 = vector.load %arg18[%c0_103, %c0_104] : memref<2x128xf32, #tpu.memory_space<vmem>>, vector<2x128xf32>
      tpu.vector_store %arg18[%c0_103, %c0_104], %124 {strides = array<i32>} : memref<2x128xf32, #tpu.memory_space<vmem>>, vector<2x128xf32>,
    } else {
    }
    %c0 = arith.constant 0 : index
    %c0_1 = arith.constant 0 : index
    %c0_2 = arith.constant 0 : index
    %3 = vector.load %arg2[%c0, %c0_1, %c0_2] : memref<2x8x128xbf16, #tpu.memory_space<vmem>>, vector<2x8x128xbf16>
    %4 = vector.shape_cast %3 : vector<2x8x128xbf16> to vector<16x128xbf16>
    %c0_3 = arith.constant 0 : index
    %c0_4 = arith.constant 0 : index
    %5 = vector.load %arg3[%c0_3, %c0_4] : memref<128x128xbf16, #tpu.memory_space<vmem>>, vector<128x128xbf16>
    %cst = arith.constant dense<0.000000e+00> : vector<16x128xf32>
    %6 = tpu.matmul %4, %5, %cst {dimension_numbers = #tpu.dot_dimension_numbers<[1], [0], [0], [1], [0, 0, 1, 1], [], []>} : vector<16x128xbf16>, vector<128x128xbf16>, vector<16x128xf32> -> vector<16x128xf32>
    %c0_5 = arith.constant 0 : index
    %c0_6 = arith.constant 0 : index
    %7 = vector.load %arg4[%c0_5, %c0_6] : memref<1x128xf32, #tpu.memory_space<vmem>>, vector<1x128xf32>
    %8 = vector.broadcast %7 : vector<1x128xf32> to vector<16x128xf32>
    %9 = arith.addf %6, %8 : vector<16x128xf32>
    %10 = vector.shape_cast %9 : vector<16x128xf32> to vector<2x8x128xf32>
    %c0_7 = arith.constant 0 : index
    %c0_8 = arith.constant 0 : index
    %11 = vector.load %arg5[%c0_7, %c0_8] : memref<128x128xbf16, #tpu.memory_space<vmem>>, vector<128x128xbf16>
    %cst_9 = arith.constant dense<0.000000e+00> : vector<16x128xf32>
    %12 = tpu.matmul %4, %11, %cst_9 {dimension_numbers = #tpu.dot_dimension_numbers<[1], [0], [0], [1], [0, 0, 1, 1], [], []>} : vector<16x128xbf16>, vector<128x128xbf16>, vector<16x128xf32> -> vector<16x128xf32>
    %c0_10 = arith.constant 0 : index
    %c0_11 = arith.constant 0 : index
    %13 = vector.load %arg6[%c0_10, %c0_11] : memref<1x128xf32, #tpu.memory_space<vmem>>, vector<1x128xf32>
    %14 = vector.broadcast %13 : vector<1x128xf32> to vector<16x128xf32>
    %15 = arith.addf %12, %14 : vector<16x128xf32>
    %16 = vector.shape_cast %15 : vector<16x128xf32> to vector<2x8x128xf32>
    %c0_12 = arith.constant 0 : index
    %c8 = arith.constant 8 : index
    %c0_13 = arith.constant 0 : index
    %17 = vector.load %arg16[%c0_12, %c8, %c0_13] : memref<2x16x128xf32, #tpu.memory_space<vmem>>, vector<2x8x128xf32>
    tpu.vector_store %arg16[%c0_12, %c8, %c0_13], %10 {strides = array<i32>} : memref<2x16x128xf32, #tpu.memory_space<vmem>>, vector<2x8x128xf32>,
    %c0_14 = arith.constant 0 : index
    %c0_15 = arith.constant 0 : index
    %18 = vector.load %arg7[%c0_14, %c0_15] : memref<4x128xf32, #tpu.memory_space<vmem>>, vector<4x128xf32>
    %c0_16 = arith.constant 0 : index
    %c5 = arith.constant 5 : index
    %c0_17 = arith.constant 0 : index
    %19 = vector.load %arg16[%c0_16, %c5, %c0_17] : memref<2x16x128xf32, #tpu.memory_space<vmem>>, vector<2x8x128xf32>
    %20 = vector.extract_strided_slice %18 {offsets = [0, 0], sizes = [1, 128], strides = [1, 1]} : vector<4x128xf32> to vector<1x128xf32>
    %21 = vector.shape_cast %20 : vector<1x128xf32> to vector<1x1x128xf32>
    %22 = vector.broadcast %21 : vector<1x1x128xf32> to vector<2x8x128xf32>
    %23 = arith.mulf %19, %22 : vector<2x8x128xf32>
    %c0_18 = arith.constant 0 : index
    %c6 = arith.constant 6 : index
    %c0_19 = arith.constant 0 : index
    %24 = vector.load %arg16[%c0_18, %c6, %c0_19] : memref<2x16x128xf32, #tpu.memory_space<vmem>>, vector<2x8x128xf32>
    %25 = vector.extract_strided_slice %18 {offsets = [1, 0], sizes = [1, 128], strides = [1, 1]} : vector<4x128xf32> to vector<1x128xf32>
    %26 = vector.shape_cast %25 : vector<1x128xf32> to vector<1x1x128xf32>
    %27 = vector.broadcast %26 : vector<1x1x128xf32> to vector<2x8x128xf32>
    %28 = arith.mulf %24, %27 : vector<2x8x128xf32>
    %29 = arith.addf %23, %28 : vector<2x8x128xf32>
    %c0_20 = arith.constant 0 : index
    %c7 = arith.constant 7 : index
    %c0_21 = arith.constant 0 : index
    %30 = vector.load %arg16[%c0_20, %c7, %c0_21] : memref<2x16x128xf32, #tpu.memory_space<vmem>>, vector<2x8x128xf32>
    %31 = vector.extract_strided_slice %18 {offsets = [2, 0], sizes = [1, 128], strides = [1, 1]} : vector<4x128xf32> to vector<1x128xf32>
    %32 = vector.shape_cast %31 : vector<1x128xf32> to vector<1x1x128xf32>
    %33 = vector.broadcast %32 : vector<1x1x128xf32> to vector<2x8x128xf32>
    %34 = arith.mulf %30, %33 : vector<2x8x128xf32>
    %35 = arith.addf %29, %34 : vector<2x8x128xf32>
    %c0_22 = arith.constant 0 : index
    %c8_23 = arith.constant 8 : index
    %c0_24 = arith.constant 0 : index
    %36 = vector.load %arg16[%c0_22, %c8_23, %c0_24] : memref<2x16x128xf32, #tpu.memory_space<vmem>>, vector<2x8x128xf32>
    %37 = vector.extract_strided_slice %18 {offsets = [3, 0], sizes = [1, 128], strides = [1, 1]} : vector<4x128xf32> to vector<1x128xf32>
    %38 = vector.shape_cast %37 : vector<1x128xf32> to vector<1x1x128xf32>
    %39 = vector.broadcast %38 : vector<1x1x128xf32> to vector<2x8x128xf32>
    %40 = arith.mulf %36, %39 : vector<2x8x128xf32>
    %41 = arith.addf %35, %40 : vector<2x8x128xf32>
    %c0_25 = arith.constant 0 : index
    %c0_26 = arith.constant 0 : index
    %42 = vector.load %arg8[%c0_25, %c0_26] : memref<1x128xf32, #tpu.memory_space<vmem>>, vector<1x128xf32>
    %43 = vector.shape_cast %42 : vector<1x128xf32> to vector<1x1x128xf32>
    %44 = vector.broadcast %43 : vector<1x1x128xf32> to vector<2x8x128xf32>
    %45 = arith.addf %41, %44 : vector<2x8x128xf32>
    %46 = arith.negf %45 : vector<2x8x128xf32>
    %47 = math.exp %46 : vector<2x8x128xf32>
    %cst_27 = arith.constant 1.000000e+00 : f32
    %48 = vector.broadcast %cst_27 : f32 to vector<2x8x128xf32>
    %49 = arith.addf %48, %47 : vector<2x8x128xf32>
    %50 = arith.divf %48, %49 : vector<2x8x128xf32>
    %51 = arith.mulf %45, %50 : vector<2x8x128xf32>
    %c0_28 = arith.constant 0 : index
    %c13 = arith.constant 13 : index
    %c0_29 = arith.constant 0 : index
    %52 = vector.load %arg16[%c0_28, %c13, %c0_29] : memref<2x16x128xf32, #tpu.memory_space<vmem>>, vector<2x3x128xf32>
    %c0_30 = arith.constant 0 : index
    %c5_31 = arith.constant 5 : index
    %c0_32 = arith.constant 0 : index
    %53 = vector.load %arg16[%c0_30, %c5_31, %c0_32] : memref<2x16x128xf32, #tpu.memory_space<vmem>>, vector<2x3x128xf32>
    tpu.vector_store %arg16[%c0_30, %c5_31, %c0_32], %52 {strides = array<i32>} : memref<2x16x128xf32, #tpu.memory_space<vmem>>, vector<2x3x128xf32>,
    %54 = vector.shape_cast %51 : vector<2x8x128xf32> to vector<16x128xf32>
    %55 = arith.truncf %54 : vector<16x128xf32> to vector<16x128xbf16>
    %c0_33 = arith.constant 0 : index
    %c0_34 = arith.constant 0 : index
    %56 = vector.load %arg9[%c0_33, %c0_34] : memref<128x128xbf16, #tpu.memory_space<vmem>>, vector<128x128xbf16>
    %cst_35 = arith.constant dense<0.000000e+00> : vector<16x128xf32>
    %57 = tpu.matmul %55, %56, %cst_35 {dimension_numbers = #tpu.dot_dimension_numbers<[1], [0], [0], [1], [0, 0, 1, 1], [], []>} : vector<16x128xbf16>, vector<128x128xbf16>, vector<16x128xf32> -> vector<16x128xf32>
    %c0_36 = arith.constant 0 : index
    %c0_37 = arith.constant 0 : index
    %58 = vector.load %arg10[%c0_36, %c0_37] : memref<1x128xf32, #tpu.memory_space<vmem>>, vector<1x128xf32>
    %59 = vector.broadcast %58 : vector<1x128xf32> to vector<16x128xf32>
    %60 = arith.addf %57, %59 : vector<16x128xf32>
    %61 = vector.shape_cast %60 : vector<16x128xf32> to vector<2x8x128xf32>
    %c0_38 = arith.constant 0 : index
    %c0_39 = arith.constant 0 : index
    %62 = vector.load %arg11[%c0_38, %c0_39] : memref<1x128xf32, #tpu.memory_space<vmem>>, vector<1x128xf32>
    %c0_40 = arith.constant 0 : index
    %c8_41 = arith.constant 8 : index
    %c0_42 = arith.constant 0 : index
    %63 = vector.load %arg17[%c0_40, %c8_41, %c0_42] : memref<2x16x128xf32, #tpu.memory_space<vmem>>, vector<2x8x128xf32>
    tpu.vector_store %arg17[%c0_40, %c8_41, %c0_42], %61 {strides = array<i32>} : memref<2x16x128xf32, #tpu.memory_space<vmem>>, vector<2x8x128xf32>,
    %c0_43 = arith.constant 0 : index
    %c8_44 = arith.constant 8 : index
    %c0_45 = arith.constant 0 : index
    %64 = vector.load %arg17[%c0_43, %c8_44, %c0_45] : memref<2x16x128xf32, #tpu.memory_space<vmem>>, vector<2x1x128xf32>
    %c0_46 = arith.constant 0 : index
    %c0_47 = arith.constant 0 : index
    %65 = vector.load %arg18[%c0_46, %c0_47] : memref<2x128xf32, #tpu.memory_space<vmem>>, vector<2x128xf32>
    %66 = vector.broadcast %62 : vector<1x128xf32> to vector<2x128xf32>
    %67 = arith.mulf %65, %66 : vector<2x128xf32>
    %68 = vector.shape_cast %67 : vector<2x128xf32> to vector<2x1x128xf32>
    %69 = arith.addf %64, %68 : vector<2x1x128xf32>
    %c0_48 = arith.constant 0 : index
    %c8_49 = arith.constant 8 : index
    %c0_50 = arith.constant 0 : index
    %70 = vector.load %arg17[%c0_48, %c8_49, %c0_50] : memref<2x16x128xf32, #tpu.memory_space<vmem>>, vector<2x1x128xf32>
    tpu.vector_store %arg17[%c0_48, %c8_49, %c0_50], %69 {strides = array<i32>} : memref<2x16x128xf32, #tpu.memory_space<vmem>>, vector<2x1x128xf32>,
    %71 = vector.shape_cast %62 : vector<1x128xf32> to vector<1x1x128xf32>
    %c0_51 = arith.constant 0 : index
    %c7_52 = arith.constant 7 : index
    %c0_53 = arith.constant 0 : index
    %72 = vector.load %arg17[%c0_51, %c7_52, %c0_53] : memref<2x16x128xf32, #tpu.memory_space<vmem>>, vector<2x8x128xf32>
    %c0_54 = arith.constant 0 : index
    %c8_55 = arith.constant 8 : index
    %c0_56 = arith.constant 0 : index
    %73 = vector.load %arg17[%c0_54, %c8_55, %c0_56] : memref<2x16x128xf32, #tpu.memory_space<vmem>>, vector<2x8x128xf32>
    %74 = vector.broadcast %71 : vector<1x1x128xf32> to vector<2x8x128xf32>
    %75 = arith.mulf %74, %72 : vector<2x8x128xf32>
    %76 = arith.addf %73, %75 : vector<2x8x128xf32>
    %c0_57 = arith.constant 0 : index
    %c8_58 = arith.constant 8 : index
    %c0_59 = arith.constant 0 : index
    %77 = vector.load %arg17[%c0_57, %c8_58, %c0_59] : memref<2x16x128xf32, #tpu.memory_space<vmem>>, vector<2x8x128xf32>
    tpu.vector_store %arg17[%c0_57, %c8_58, %c0_59], %76 {strides = array<i32>} : memref<2x16x128xf32, #tpu.memory_space<vmem>>, vector<2x8x128xf32>,
    %78 = arith.mulf %71, %71 : vector<1x1x128xf32>
    %c0_60 = arith.constant 0 : index
    %c6_61 = arith.constant 6 : index
    %c0_62 = arith.constant 0 : index
    %79 = vector.load %arg17[%c0_60, %c6_61, %c0_62] : memref<2x16x128xf32, #tpu.memory_space<vmem>>, vector<2x8x128xf32>
    %c0_63 = arith.constant 0 : index
    %c8_64 = arith.constant 8 : index
    %c0_65 = arith.constant 0 : index
    %80 = vector.load %arg17[%c0_63, %c8_64, %c0_65] : memref<2x16x128xf32, #tpu.memory_space<vmem>>, vector<2x8x128xf32>
    %81 = vector.broadcast %78 : vector<1x1x128xf32> to vector<2x8x128xf32>
    %82 = arith.mulf %81, %79 : vector<2x8x128xf32>
    %83 = arith.addf %80, %82 : vector<2x8x128xf32>
    %c0_66 = arith.constant 0 : index
    %c8_67 = arith.constant 8 : index
    %c0_68 = arith.constant 0 : index
    %84 = vector.load %arg17[%c0_66, %c8_67, %c0_68] : memref<2x16x128xf32, #tpu.memory_space<vmem>>, vector<2x8x128xf32>
    tpu.vector_store %arg17[%c0_66, %c8_67, %c0_68], %83 {strides = array<i32>} : memref<2x16x128xf32, #tpu.memory_space<vmem>>, vector<2x8x128xf32>,
    %85 = arith.mulf %78, %78 : vector<1x1x128xf32>
    %c0_69 = arith.constant 0 : index
    %c4 = arith.constant 4 : index
    %c0_70 = arith.constant 0 : index
    %86 = vector.load %arg17[%c0_69, %c4, %c0_70] : memref<2x16x128xf32, #tpu.memory_space<vmem>>, vector<2x8x128xf32>
    %c0_71 = arith.constant 0 : index
    %c8_72 = arith.constant 8 : index
    %c0_73 = arith.constant 0 : index
    %87 = vector.load %arg17[%c0_71, %c8_72, %c0_73] : memref<2x16x128xf32, #tpu.memory_space<vmem>>, vector<2x8x128xf32>
    %88 = vector.broadcast %85 : vector<1x1x128xf32> to vector<2x8x128xf32>
    %89 = arith.mulf %88, %86 : vector<2x8x128xf32>
    %90 = arith.addf %87, %89 : vector<2x8x128xf32>
    %c0_74 = arith.constant 0 : index
    %c8_75 = arith.constant 8 : index
    %c0_76 = arith.constant 0 : index
    %91 = vector.load %arg17[%c0_74, %c8_75, %c0_76] : memref<2x16x128xf32, #tpu.memory_space<vmem>>, vector<2x8x128xf32>
    tpu.vector_store %arg17[%c0_74, %c8_75, %c0_76], %90 {strides = array<i32>} : memref<2x16x128xf32, #tpu.memory_space<vmem>>, vector<2x8x128xf32>,
    %c0_77 = arith.constant 0 : index
    %c8_78 = arith.constant 8 : index
    %c0_79 = arith.constant 0 : index
    %92 = vector.load %arg17[%c0_77, %c8_78, %c0_79] : memref<2x16x128xf32, #tpu.memory_space<vmem>>, vector<2x8x128xf32>
    %93 = vector.extract_strided_slice %92 {offsets = [0, 7, 0], sizes = [2, 1, 128], strides = [1, 1, 1]} : vector<2x8x128xf32> to vector<2x1x128xf32>
    %94 = vector.shape_cast %93 : vector<2x1x128xf32> to vector<2x128xf32>
    %c0_80 = arith.constant 0 : index
    %c0_81 = arith.constant 0 : index
    %95 = vector.load %arg18[%c0_80, %c0_81] : memref<2x128xf32, #tpu.memory_space<vmem>>, vector<2x128xf32>
    tpu.vector_store %arg18[%c0_80, %c0_81], %94 {strides = array<i32>} : memref<2x128xf32, #tpu.memory_space<vmem>>, vector<2x128xf32>,
    %cst_82 = arith.constant dense<0.000000e+00> : vector<2x8xf32>
    %96 = vector.multi_reduction <add>, %92, %cst_82 [2] : vector<2x8x128xf32> to vector<2x8xf32>
    %97 = vector.shape_cast %96 : vector<2x8xf32> to vector<2x8x1xf32>
    %c0_83 = arith.constant 0 : index
    %c0_84 = arith.constant 0 : index
    %98 = vector.load %arg12[%c0_83, %c0_84] : memref<1x128xf32, #tpu.memory_space<vmem>>, vector<1x128xf32>
    %99 = vector.shape_cast %98 : vector<1x128xf32> to vector<1x1x128xf32>
    %100 = vector.broadcast %97 : vector<2x8x1xf32> to vector<2x8x128xf32>
    %101 = vector.broadcast %99 : vector<1x1x128xf32> to vector<2x8x128xf32>
    %102 = arith.addf %100, %101 : vector<2x8x128xf32>
    %103 = arith.mulf %102, %51 : vector<2x8x128xf32>
    %104 = arith.negf %16 : vector<2x8x128xf32>
    %105 = math.exp %104 : vector<2x8x128xf32>
    %cst_85 = arith.constant 1.000000e+00 : f32
    %106 = vector.broadcast %cst_85 : f32 to vector<2x8x128xf32>
    %107 = arith.addf %106, %105 : vector<2x8x128xf32>
    %108 = arith.divf %106, %107 : vector<2x8x128xf32>
    %109 = arith.mulf %16, %108 : vector<2x8x128xf32>
    %110 = arith.mulf %103, %109 : vector<2x8x128xf32>
    %111 = vector.shape_cast %110 : vector<2x8x128xf32> to vector<16x128xf32>
    %112 = arith.truncf %111 : vector<16x128xf32> to vector<16x128xbf16>
    %c0_86 = arith.constant 0 : index
    %c0_87 = arith.constant 0 : index
    %113 = vector.load %arg13[%c0_86, %c0_87] : memref<128x128xbf16, #tpu.memory_space<vmem>>, vector<128x128xbf16>
    %cst_88 = arith.constant dense<0.000000e+00> : vector<16x128xf32>
    %114 = tpu.matmul %112, %113, %cst_88 {dimension_numbers = #tpu.dot_dimension_numbers<[1], [0], [0], [1], [0, 0, 1, 1], [], []>} : vector<16x128xbf16>, vector<128x128xbf16>, vector<16x128xf32> -> vector<16x128xf32>
    %c0_89 = arith.constant 0 : index
    %c0_90 = arith.constant 0 : index
    %115 = vector.load %arg14[%c0_89, %c0_90] : memref<1x128xf32, #tpu.memory_space<vmem>>, vector<1x128xf32>
    %116 = vector.broadcast %115 : vector<1x128xf32> to vector<16x128xf32>
    %117 = arith.addf %114, %116 : vector<16x128xf32>
    %118 = vector.shape_cast %117 : vector<16x128xf32> to vector<2x8x128xf32>
    %c0_91 = arith.constant 0 : index
    %c0_92 = arith.constant 0 : index
    %c0_93 = arith.constant 0 : index
    %119 = vector.load %arg15[%c0_91, %c0_92, %c0_93] : memref<2x8x128xf32, #tpu.memory_space<vmem>>, vector<2x8x128xf32>
    tpu.vector_store %arg15[%c0_91, %c0_92, %c0_93], %118 {strides = array<i32>} : memref<2x8x128xf32, #tpu.memory_space<vmem>>, vector<2x8x128xf32>,
    return
  }
  func.func @transform_0(%arg0: i32, %arg1: i32) -> (i32, i32, i32) {
    %c0_i32 = arith.constant 0 : i32
    %c0_i32_0 = arith.constant 0 : i32
    return %arg0, %arg1, %c0_i32 : i32, i32, i32
  }
  func.func @transform_1(%arg0: i32, %arg1: i32) -> (i32, i32) {
    %c0_i32 = arith.constant 0 : i32
    %c0_i32_0 = arith.constant 0 : i32
    %c0_i32_1 = arith.constant 0 : i32
    return %c0_i32, %c0_i32_0 : i32, i32
  }
  func.func @transform_2(%arg0: i32, %arg1: i32) -> (i32, i32) {
    %c0_i32 = arith.constant 0 : i32
    %c0_i32_0 = arith.constant 0 : i32
    %c0_i32_1 = arith.constant 0 : i32
    return %c0_i32, %c0_i32_0 : i32, i32
  }
  func.func @transform_3(%arg0: i32, %arg1: i32) -> (i32, i32) {
    %c0_i32 = arith.constant 0 : i32
    %c0_i32_0 = arith.constant 0 : i32
    %c0_i32_1 = arith.constant 0 : i32
    return %c0_i32, %c0_i32_0 : i32, i32
  }
  func.func @transform_4(%arg0: i32, %arg1: i32) -> (i32, i32) {
    %c0_i32 = arith.constant 0 : i32
    %c0_i32_0 = arith.constant 0 : i32
    %c0_i32_1 = arith.constant 0 : i32
    return %c0_i32, %c0_i32_0 : i32, i32
  }
  func.func @transform_5(%arg0: i32, %arg1: i32) -> (i32, i32) {
    %c0_i32 = arith.constant 0 : i32
    %c0_i32_0 = arith.constant 0 : i32
    %c0_i32_1 = arith.constant 0 : i32
    return %c0_i32, %c0_i32_0 : i32, i32
  }
  func.func @transform_6(%arg0: i32, %arg1: i32) -> (i32, i32) {
    %c0_i32 = arith.constant 0 : i32
    %c0_i32_0 = arith.constant 0 : i32
    %c0_i32_1 = arith.constant 0 : i32
    return %c0_i32, %c0_i32_0 : i32, i32
  }
  func.func @transform_7(%arg0: i32, %arg1: i32) -> (i32, i32) {
    %c0_i32 = arith.constant 0 : i32
    %c0_i32_0 = arith.constant 0 : i32
    %c0_i32_1 = arith.constant 0 : i32
    return %c0_i32, %c0_i32_0 : i32, i32
  }
  func.func @transform_8(%arg0: i32, %arg1: i32) -> (i32, i32) {
    %c0_i32 = arith.constant 0 : i32
    %c0_i32_0 = arith.constant 0 : i32
    %c0_i32_1 = arith.constant 0 : i32
    return %c0_i32, %c0_i32_0 : i32, i32
  }
  func.func @transform_9(%arg0: i32, %arg1: i32) -> (i32, i32) {
    %c0_i32 = arith.constant 0 : i32
    %c0_i32_0 = arith.constant 0 : i32
    %c0_i32_1 = arith.constant 0 : i32
    return %c0_i32, %c0_i32_0 : i32, i32
  }
  func.func @transform_10(%arg0: i32, %arg1: i32) -> (i32, i32) {
    %c0_i32 = arith.constant 0 : i32
    %c0_i32_0 = arith.constant 0 : i32
    %c0_i32_1 = arith.constant 0 : i32
    return %c0_i32, %c0_i32_0 : i32, i32
  }
  func.func @transform_11(%arg0: i32, %arg1: i32) -> (i32, i32) {
    %c0_i32 = arith.constant 0 : i32
    %c0_i32_0 = arith.constant 0 : i32
    %c0_i32_1 = arith.constant 0 : i32
    return %c0_i32, %c0_i32_0 : i32, i32
  }
  func.func @transform_12(%arg0: i32, %arg1: i32) -> (i32, i32) {
    %c0_i32 = arith.constant 0 : i32
    %c0_i32_0 = arith.constant 0 : i32
    %c0_i32_1 = arith.constant 0 : i32
    return %c0_i32, %c0_i32_0 : i32, i32
  }
  func.func @transform_13(%arg0: i32, %arg1: i32) -> (i32, i32, i32) {
    %c0_i32 = arith.constant 0 : i32
    %c0_i32_0 = arith.constant 0 : i32
    return %arg0, %arg1, %c0_i32 : i32, i32, i32
  }
}

module attributes {stable_mosaic.version = 11 : i64} {
  func.func @mamba_block_kernel(%arg0: i32, %arg1: i32, %arg2: memref<2x8x128xbf16, #tpu.memory_space<vmem>>, %arg3: memref<128x128xbf16, #tpu.memory_space<vmem>>, %arg4: memref<1x128xf32, #tpu.memory_space<vmem>>, %arg5: memref<128x128xbf16, #tpu.memory_space<vmem>>, %arg6: memref<1x128xf32, #tpu.memory_space<vmem>>, %arg7: memref<4x128xf32, #tpu.memory_space<vmem>>, %arg8: memref<1x128xf32, #tpu.memory_space<vmem>>, %arg9: memref<128x128xbf16, #tpu.memory_space<vmem>>, %arg10: memref<1x128xf32, #tpu.memory_space<vmem>>, %arg11: memref<1x128xf32, #tpu.memory_space<vmem>>, %arg12: memref<1x128xf32, #tpu.memory_space<vmem>>, %arg13: memref<128x128xbf16, #tpu.memory_space<vmem>>, %arg14: memref<1x128xf32, #tpu.memory_space<vmem>>, %arg15: memref<2x8x128xf32, #tpu.memory_space<vmem>>, %arg16: memref<2x16x128xf32, #tpu.memory_space<vmem>>, %arg17: memref<2x16x128xf32, #tpu.memory_space<vmem>>, %arg18: memref<2x128xf32, #tpu.memory_space<vmem>>) attributes {dimension_semantics = [#tpu.dimension_semantics<parallel>, #tpu.dimension_semantics<arbitrary>], iteration_bounds = array<i64: 1, 2>, scalar_prefetch = 0 : i64, scratch_operands = 3 : i64, tpu.core_type = #tpu.core_type<tc>, window_params = [{transform_indices = @transform_0, window_bounds = array<i64: 2, 8, 128>}, {pipeline_mode = #tpu.pipeline_mode<synchronous>, transform_indices = @transform_1, window_bounds = array<i64: 128, 128>}, {pipeline_mode = #tpu.pipeline_mode<synchronous>, transform_indices = @transform_2, window_bounds = array<i64: 1, 128>}, {pipeline_mode = #tpu.pipeline_mode<synchronous>, transform_indices = @transform_3, window_bounds = array<i64: 128, 128>}, {pipeline_mode = #tpu.pipeline_mode<synchronous>, transform_indices = @transform_4, window_bounds = array<i64: 1, 128>}, {pipeline_mode = #tpu.pipeline_mode<synchronous>, transform_indices = @transform_5, window_bounds = array<i64: 4, 128>}, {pipeline_mode = #tpu.pipeline_mode<synchronous>, transform_indices = @transform_6, window_bounds = array<i64: 1, 128>}, {pipeline_mode = #tpu.pipeline_mode<synchronous>, transform_indices = @transform_7, window_bounds = array<i64: 128, 128>}, {pipeline_mode = #tpu.pipeline_mode<synchronous>, transform_indices = @transform_8, window_bounds = array<i64: 1, 128>}, {pipeline_mode = #tpu.pipeline_mode<synchronous>, transform_indices = @transform_9, window_bounds = array<i64: 1, 128>}, {pipeline_mode = #tpu.pipeline_mode<synchronous>, transform_indices = @transform_10, window_bounds = array<i64: 1, 128>}, {pipeline_mode = #tpu.pipeline_mode<synchronous>, transform_indices = @transform_11, window_bounds = array<i64: 128, 128>}, {pipeline_mode = #tpu.pipeline_mode<synchronous>, transform_indices = @transform_12, window_bounds = array<i64: 1, 128>}, {transform_indices = @transform_13, window_bounds = array<i64: 2, 8, 128>}]} {
    %c0_i32 = arith.constant 0 : i32
    %0 = arith.cmpi eq, %arg1, %c0_i32 : i32
    %1 = arith.extui %0 : i1 to i32
    %c0_i32_0 = arith.constant 0 : i32
    %2 = arith.cmpi ne, %1, %c0_i32_0 : i32
    scf.if %2 {
      %cst_94 = arith.constant 0.000000e+00 : f32
      %120 = vector.broadcast %cst_94 : f32 to vector<2x8x128xf32>
      %c0_95 = arith.constant 0 : index
      %c0_96 = arith.constant 0 : index
      %c0_97 = arith.constant 0 : index
      %121 = vector.load %arg16[%c0_95, %c0_96, %c0_97] : memref<2x16x128xf32, #tpu.memory_space<vmem>>, vector<2x8x128xf32>
      tpu.vector_store %arg16[%c0_95, %c0_96, %c0_97], %120 {strides = array<i32>} : memref<2x16x128xf32, #tpu.memory_space<vmem>>, vector<2x8x128xf32>,
      %cst_98 = arith.constant 0.000000e+00 : f32
      %122 = vector.broadcast %cst_98 : f32 to vector<2x8x128xf32>
      %c0_99 = arith.constant 0 : index
      %c0_100 = arith.constant 0 : index
      %c0_101 = arith.constant 0 : index
      %123 = vector.load %arg17[%c0_99, %c0_100, %c0_101] : memref<2x16x128xf32, #tpu.memory_space<vmem>>, vector<2x8x128xf32>
      tpu.vector_store %arg17[%c0_99, %c0_100, %c0_101], %122 {strides = array<i32>} : memref<2x16x128xf32, #tpu.memory_space<vmem>>, vector<2x8x128xf32>,
      %cst_102 = arith.constant 0.000000e+00 : f32
      %124 = vector.broadcast %cst_102 : f32 to vector<2x128xf32>
      %c0_103 = arith.constant 0 : index
      %c0_104 = arith.constant 0 : index
      %125 = vector.load %arg18[%c0_103, %c0_104] : memref<2x128xf32, #tpu.memory_space<vmem>>, vector<2x128xf32>
      tpu.vector_store %arg18[%c0_103, %c0_104], %124 {strides = array<i32>} : memref<2x128xf32, #tpu.memory_space<vmem>>, vector<2x128xf32>,
    } else {
    }
    %c0 = arith.constant 0 : index
    %c0_1 = arith.constant 0 : index
    %c0_2 = arith.constant 0 : index
    %3 = vector.load %arg2[%c0, %c0_1, %c0_2] : memref<2x8x128xbf16, #tpu.memory_space<vmem>>, vector<2x8x128xbf16>
    %4 = vector.shape_cast %3 : vector<2x8x128xbf16> to vector<16x128xbf16>
    %c0_3 = arith.constant 0 : index
    %c0_4 = arith.constant 0 : index
    %5 = vector.load %arg3[%c0_3, %c0_4] : memref<128x128xbf16, #tpu.memory_space<vmem>>, vector<128x128xbf16>
    %cst = arith.constant dense<0.000000e+00> : vector<16x128xf32>
    %6 = tpu.matmul %4, %5, %cst {dimension_numbers = #tpu.dot_dimension_numbers<[1], [0], [0], [1], [0, 0, 1, 1], [], []>} : vector<16x128xbf16>, vector<128x128xbf16>, vector<16x128xf32> -> vector<16x128xf32>
    %c0_5 = arith.constant 0 : index
    %c0_6 = arith.constant 0 : index
    %7 = vector.load %arg4[%c0_5, %c0_6] : memref<1x128xf32, #tpu.memory_space<vmem>>, vector<1x128xf32>
    %8 = vector.broadcast %7 : vector<1x128xf32> to vector<16x128xf32>
    %9 = arith.addf %6, %8 : vector<16x128xf32>
    %10 = vector.shape_cast %9 : vector<16x128xf32> to vector<2x8x128xf32>
    %c0_7 = arith.constant 0 : index
    %c0_8 = arith.constant 0 : index
    %11 = vector.load %arg5[%c0_7, %c0_8] : memref<128x128xbf16, #tpu.memory_space<vmem>>, vector<128x128xbf16>
    %cst_9 = arith.constant dense<0.000000e+00> : vector<16x128xf32>
    %12 = tpu.matmul %4, %11, %cst_9 {dimension_numbers = #tpu.dot_dimension_numbers<[1], [0], [0], [1], [0, 0, 1, 1], [], []>} : vector<16x128xbf16>, vector<128x128xbf16>, vector<16x128xf32> -> vector<16x128xf32>
    %c0_10 = arith.constant 0 : index
    %c0_11 = arith.constant 0 : index
    %13 = vector.load %arg6[%c0_10, %c0_11] : memref<1x128xf32, #tpu.memory_space<vmem>>, vector<1x128xf32>
    %14 = vector.broadcast %13 : vector<1x128xf32> to vector<16x128xf32>
    %15 = arith.addf %12, %14 : vector<16x128xf32>
    %16 = vector.shape_cast %15 : vector<16x128xf32> to vector<2x8x128xf32>
    %c0_12 = arith.constant 0 : index
    %c8 = arith.constant 8 : index
    %c0_13 = arith.constant 0 : index
    %17 = vector.load %arg16[%c0_12, %c8, %c0_13] : memref<2x16x128xf32, #tpu.memory_space<vmem>>, vector<2x8x128xf32>
    tpu.vector_store %arg16[%c0_12, %c8, %c0_13], %10 {strides = array<i32>} : memref<2x16x128xf32, #tpu.memory_space<vmem>>, vector<2x8x128xf32>,
    %c0_14 = arith.constant 0 : index
    %c0_15 = arith.constant 0 : index
    %18 = vector.load %arg7[%c0_14, %c0_15] : memref<4x128xf32, #tpu.memory_space<vmem>>, vector<4x128xf32>
    %c0_16 = arith.constant 0 : index
    %c5 = arith.constant 5 : index
    %c0_17 = arith.constant 0 : index
    %19 = vector.load %arg16[%c0_16, %c5, %c0_17] : memref<2x16x128xf32, #tpu.memory_space<vmem>>, vector<2x8x128xf32>
    %20 = vector.extract_strided_slice %18 {offsets = [0, 0], sizes = [1, 128], strides = [1, 1]} : vector<4x128xf32> to vector<1x128xf32>
    %21 = vector.shape_cast %20 : vector<1x128xf32> to vector<1x1x128xf32>
    %22 = vector.broadcast %21 : vector<1x1x128xf32> to vector<2x8x128xf32>
    %23 = arith.mulf %19, %22 : vector<2x8x128xf32>
    %c0_18 = arith.constant 0 : index
    %c6 = arith.constant 6 : index
    %c0_19 = arith.constant 0 : index
    %24 = vector.load %arg16[%c0_18, %c6, %c0_19] : memref<2x16x128xf32, #tpu.memory_space<vmem>>, vector<2x8x128xf32>
    %25 = vector.extract_strided_slice %18 {offsets = [1, 0], sizes = [1, 128], strides = [1, 1]} : vector<4x128xf32> to vector<1x128xf32>
    %26 = vector.shape_cast %25 : vector<1x128xf32> to vector<1x1x128xf32>
    %27 = vector.broadcast %26 : vector<1x1x128xf32> to vector<2x8x128xf32>
    %28 = arith.mulf %24, %27 : vector<2x8x128xf32>
    %29 = arith.addf %23, %28 : vector<2x8x128xf32>
    %c0_20 = arith.constant 0 : index
    %c7 = arith.constant 7 : index
    %c0_21 = arith.constant 0 : index
    %30 = vector.load %arg16[%c0_20, %c7, %c0_21] : memref<2x16x128xf32, #tpu.memory_space<vmem>>, vector<2x8x128xf32>
    %31 = vector.extract_strided_slice %18 {offsets = [2, 0], sizes = [1, 128], strides = [1, 1]} : vector<4x128xf32> to vector<1x128xf32>
    %32 = vector.shape_cast %31 : vector<1x128xf32> to vector<1x1x128xf32>
    %33 = vector.broadcast %32 : vector<1x1x128xf32> to vector<2x8x128xf32>
    %34 = arith.mulf %30, %33 : vector<2x8x128xf32>
    %35 = arith.addf %29, %34 : vector<2x8x128xf32>
    %c0_22 = arith.constant 0 : index
    %c8_23 = arith.constant 8 : index
    %c0_24 = arith.constant 0 : index
    %36 = vector.load %arg16[%c0_22, %c8_23, %c0_24] : memref<2x16x128xf32, #tpu.memory_space<vmem>>, vector<2x8x128xf32>
    %37 = vector.extract_strided_slice %18 {offsets = [3, 0], sizes = [1, 128], strides = [1, 1]} : vector<4x128xf32> to vector<1x128xf32>
    %38 = vector.shape_cast %37 : vector<1x128xf32> to vector<1x1x128xf32>
    %39 = vector.broadcast %38 : vector<1x1x128xf32> to vector<2x8x128xf32>
    %40 = arith.mulf %36, %39 : vector<2x8x128xf32>
    %41 = arith.addf %35, %40 : vector<2x8x128xf32>
    %c0_25 = arith.constant 0 : index
    %c0_26 = arith.constant 0 : index
    %42 = vector.load %arg8[%c0_25, %c0_26] : memref<1x128xf32, #tpu.memory_space<vmem>>, vector<1x128xf32>
    %43 = vector.shape_cast %42 : vector<1x128xf32> to vector<1x1x128xf32>
    %44 = vector.broadcast %43 : vector<1x1x128xf32> to vector<2x8x128xf32>
    %45 = arith.addf %41, %44 : vector<2x8x128xf32>
    %46 = arith.negf %45 : vector<2x8x128xf32>
    %47 = math.exp %46 : vector<2x8x128xf32>
    %cst_27 = arith.constant 1.000000e+00 : f32
    %48 = vector.broadcast %cst_27 : f32 to vector<2x8x128xf32>
    %49 = arith.addf %48, %47 : vector<2x8x128xf32>
    %50 = arith.divf %48, %49 : vector<2x8x128xf32>
    %51 = arith.mulf %45, %50 : vector<2x8x128xf32>
    %c0_28 = arith.constant 0 : index
    %c13 = arith.constant 13 : index
    %c0_29 = arith.constant 0 : index
    %52 = vector.load %arg16[%c0_28, %c13, %c0_29] : memref<2x16x128xf32, #tpu.memory_space<vmem>>, vector<2x3x128xf32>
    %c0_30 = arith.constant 0 : index
    %c5_31 = arith.constant 5 : index
    %c0_32 = arith.constant 0 : index
    %53 = vector.load %arg16[%c0_30, %c5_31, %c0_32] : memref<2x16x128xf32, #tpu.memory_space<vmem>>, vector<2x3x128xf32>
    tpu.vector_store %arg16[%c0_30, %c5_31, %c0_32], %52 {strides = array<i32>} : memref<2x16x128xf32, #tpu.memory_space<vmem>>, vector<2x3x128xf32>,
    %54 = vector.shape_cast %51 : vector<2x8x128xf32> to vector<16x128xf32>
    %55 = arith.truncf %54 : vector<16x128xf32> to vector<16x128xbf16>
    %c0_33 = arith.constant 0 : index
    %c0_34 = arith.constant 0 : index
    %56 = vector.load %arg9[%c0_33, %c0_34] : memref<128x128xbf16, #tpu.memory_space<vmem>>, vector<128x128xbf16>
    %cst_35 = arith.constant dense<0.000000e+00> : vector<16x128xf32>
    %57 = tpu.matmul %55, %56, %cst_35 {dimension_numbers = #tpu.dot_dimension_numbers<[1], [0], [0], [1], [0, 0, 1, 1], [], []>} : vector<16x128xbf16>, vector<128x128xbf16>, vector<16x128xf32> -> vector<16x128xf32>
    %c0_36 = arith.constant 0 : index
    %c0_37 = arith.constant 0 : index
    %58 = vector.load %arg10[%c0_36, %c0_37] : memref<1x128xf32, #tpu.memory_space<vmem>>, vector<1x128xf32>
    %59 = vector.broadcast %58 : vector<1x128xf32> to vector<16x128xf32>
    %60 = arith.addf %57, %59 : vector<16x128xf32>
    %61 = vector.shape_cast %60 : vector<16x128xf32> to vector<2x8x128xf32>
    %c0_38 = arith.constant 0 : index
    %c0_39 = arith.constant 0 : index
    %62 = vector.load %arg11[%c0_38, %c0_39] : memref<1x128xf32, #tpu.memory_space<vmem>>, vector<1x128xf32>
    %c0_40 = arith.constant 0 : index
    %c8_41 = arith.constant 8 : index
    %c0_42 = arith.constant 0 : index
    %63 = vector.load %arg17[%c0_40, %c8_41, %c0_42] : memref<2x16x128xf32, #tpu.memory_space<vmem>>, vector<2x8x128xf32>
    tpu.vector_store %arg17[%c0_40, %c8_41, %c0_42], %61 {strides = array<i32>} : memref<2x16x128xf32, #tpu.memory_space<vmem>>, vector<2x8x128xf32>,
    %c0_43 = arith.constant 0 : index
    %c8_44 = arith.constant 8 : index
    %c0_45 = arith.constant 0 : index
    %64 = vector.load %arg17[%c0_43, %c8_44, %c0_45] : memref<2x16x128xf32, #tpu.memory_space<vmem>>, vector<2x1x128xf32>
    %c0_46 = arith.constant 0 : index
    %c0_47 = arith.constant 0 : index
    %65 = vector.load %arg18[%c0_46, %c0_47] : memref<2x128xf32, #tpu.memory_space<vmem>>, vector<2x128xf32>
    %66 = vector.broadcast %62 : vector<1x128xf32> to vector<2x128xf32>
    %67 = arith.mulf %65, %66 : vector<2x128xf32>
    %68 = vector.shape_cast %67 : vector<2x128xf32> to vector<2x1x128xf32>
    %69 = arith.addf %64, %68 : vector<2x1x128xf32>
    %c0_48 = arith.constant 0 : index
    %c8_49 = arith.constant 8 : index
    %c0_50 = arith.constant 0 : index
    %70 = vector.load %arg17[%c0_48, %c8_49, %c0_50] : memref<2x16x128xf32, #tpu.memory_space<vmem>>, vector<2x1x128xf32>
    tpu.vector_store %arg17[%c0_48, %c8_49, %c0_50], %69 {strides = array<i32>} : memref<2x16x128xf32, #tpu.memory_space<vmem>>, vector<2x1x128xf32>,
    %71 = vector.shape_cast %62 : vector<1x128xf32> to vector<1x1x128xf32>
    %c0_51 = arith.constant 0 : index
    %c7_52 = arith.constant 7 : index
    %c0_53 = arith.constant 0 : index
    %72 = vector.load %arg17[%c0_51, %c7_52, %c0_53] : memref<2x16x128xf32, #tpu.memory_space<vmem>>, vector<2x8x128xf32>
    %c0_54 = arith.constant 0 : index
    %c8_55 = arith.constant 8 : index
    %c0_56 = arith.constant 0 : index
    %73 = vector.load %arg17[%c0_54, %c8_55, %c0_56] : memref<2x16x128xf32, #tpu.memory_space<vmem>>, vector<2x8x128xf32>
    %74 = vector.broadcast %71 : vector<1x1x128xf32> to vector<2x8x128xf32>
    %75 = arith.mulf %74, %72 : vector<2x8x128xf32>
    %76 = arith.addf %73, %75 : vector<2x8x128xf32>
    %c0_57 = arith.constant 0 : index
    %c8_58 = arith.constant 8 : index
    %c0_59 = arith.constant 0 : index
    %77 = vector.load %arg17[%c0_57, %c8_58, %c0_59] : memref<2x16x128xf32, #tpu.memory_space<vmem>>, vector<2x8x128xf32>
    tpu.vector_store %arg17[%c0_57, %c8_58, %c0_59], %76 {strides = array<i32>} : memref<2x16x128xf32, #tpu.memory_space<vmem>>, vector<2x8x128xf32>,
    %78 = arith.mulf %71, %71 : vector<1x1x128xf32>
    %c0_60 = arith.constant 0 : index
    %c6_61 = arith.constant 6 : index
    %c0_62 = arith.constant 0 : index
    %79 = vector.load %arg17[%c0_60, %c6_61, %c0_62] : memref<2x16x128xf32, #tpu.memory_space<vmem>>, vector<2x8x128xf32>
    %c0_63 = arith.constant 0 : index
    %c8_64 = arith.constant 8 : index
    %c0_65 = arith.constant 0 : index
    %80 = vector.load %arg17[%c0_63, %c8_64, %c0_65] : memref<2x16x128xf32, #tpu.memory_space<vmem>>, vector<2x8x128xf32>
    %81 = vector.broadcast %78 : vector<1x1x128xf32> to vector<2x8x128xf32>
    %82 = arith.mulf %81, %79 : vector<2x8x128xf32>
    %83 = arith.addf %80, %82 : vector<2x8x128xf32>
    %c0_66 = arith.constant 0 : index
    %c8_67 = arith.constant 8 : index
    %c0_68 = arith.constant 0 : index
    %84 = vector.load %arg17[%c0_66, %c8_67, %c0_68] : memref<2x16x128xf32, #tpu.memory_space<vmem>>, vector<2x8x128xf32>
    tpu.vector_store %arg17[%c0_66, %c8_67, %c0_68], %83 {strides = array<i32>} : memref<2x16x128xf32, #tpu.memory_space<vmem>>, vector<2x8x128xf32>,
    %85 = arith.mulf %78, %78 : vector<1x1x128xf32>
    %c0_69 = arith.constant 0 : index
    %c4 = arith.constant 4 : index
    %c0_70 = arith.constant 0 : index
    %86 = vector.load %arg17[%c0_69, %c4, %c0_70] : memref<2x16x128xf32, #tpu.memory_space<vmem>>, vector<2x8x128xf32>
    %c0_71 = arith.constant 0 : index
    %c8_72 = arith.constant 8 : index
    %c0_73 = arith.constant 0 : index
    %87 = vector.load %arg17[%c0_71, %c8_72, %c0_73] : memref<2x16x128xf32, #tpu.memory_space<vmem>>, vector<2x8x128xf32>
    %88 = vector.broadcast %85 : vector<1x1x128xf32> to vector<2x8x128xf32>
    %89 = arith.mulf %88, %86 : vector<2x8x128xf32>
    %90 = arith.addf %87, %89 : vector<2x8x128xf32>
    %c0_74 = arith.constant 0 : index
    %c8_75 = arith.constant 8 : index
    %c0_76 = arith.constant 0 : index
    %91 = vector.load %arg17[%c0_74, %c8_75, %c0_76] : memref<2x16x128xf32, #tpu.memory_space<vmem>>, vector<2x8x128xf32>
    tpu.vector_store %arg17[%c0_74, %c8_75, %c0_76], %90 {strides = array<i32>} : memref<2x16x128xf32, #tpu.memory_space<vmem>>, vector<2x8x128xf32>,
    %c0_77 = arith.constant 0 : index
    %c8_78 = arith.constant 8 : index
    %c0_79 = arith.constant 0 : index
    %92 = vector.load %arg17[%c0_77, %c8_78, %c0_79] : memref<2x16x128xf32, #tpu.memory_space<vmem>>, vector<2x8x128xf32>
    %93 = vector.extract_strided_slice %92 {offsets = [0, 7, 0], sizes = [2, 1, 128], strides = [1, 1, 1]} : vector<2x8x128xf32> to vector<2x1x128xf32>
    %94 = vector.shape_cast %93 : vector<2x1x128xf32> to vector<2x128xf32>
    %c0_80 = arith.constant 0 : index
    %c0_81 = arith.constant 0 : index
    %95 = vector.load %arg18[%c0_80, %c0_81] : memref<2x128xf32, #tpu.memory_space<vmem>>, vector<2x128xf32>
    tpu.vector_store %arg18[%c0_80, %c0_81], %94 {strides = array<i32>} : memref<2x128xf32, #tpu.memory_space<vmem>>, vector<2x128xf32>,
    %cst_82 = arith.constant dense<0.000000e+00> : vector<2x8xf32>
    %96 = vector.multi_reduction <add>, %92, %cst_82 [2] : vector<2x8x128xf32> to vector<2x8xf32>
    %97 = vector.shape_cast %96 : vector<2x8xf32> to vector<2x8x1xf32>
    %c0_83 = arith.constant 0 : index
    %c0_84 = arith.constant 0 : index
    %98 = vector.load %arg12[%c0_83, %c0_84] : memref<1x128xf32, #tpu.memory_space<vmem>>, vector<1x128xf32>
    %99 = vector.shape_cast %98 : vector<1x128xf32> to vector<1x1x128xf32>
    %100 = vector.broadcast %97 : vector<2x8x1xf32> to vector<2x8x128xf32>
    %101 = vector.broadcast %99 : vector<1x1x128xf32> to vector<2x8x128xf32>
    %102 = arith.addf %100, %101 : vector<2x8x128xf32>
    %103 = arith.mulf %102, %51 : vector<2x8x128xf32>
    %104 = arith.negf %16 : vector<2x8x128xf32>
    %105 = math.exp %104 : vector<2x8x128xf32>
    %cst_85 = arith.constant 1.000000e+00 : f32
    %106 = vector.broadcast %cst_85 : f32 to vector<2x8x128xf32>
    %107 = arith.addf %106, %105 : vector<2x8x128xf32>
    %108 = arith.divf %106, %107 : vector<2x8x128xf32>
    %109 = arith.mulf %16, %108 : vector<2x8x128xf32>
    %110 = arith.mulf %103, %109 : vector<2x8x128xf32>
    %111 = vector.shape_cast %110 : vector<2x8x128xf32> to vector<16x128xf32>
    %112 = arith.truncf %111 : vector<16x128xf32> to vector<16x128xbf16>
    %c0_86 = arith.constant 0 : index
    %c0_87 = arith.constant 0 : index
    %113 = vector.load %arg13[%c0_86, %c0_87] : memref<128x128xbf16, #tpu.memory_space<vmem>>, vector<128x128xbf16>
    %cst_88 = arith.constant dense<0.000000e+00> : vector<16x128xf32>
    %114 = tpu.matmul %112, %113, %cst_88 {dimension_numbers = #tpu.dot_dimension_numbers<[1], [0], [0], [1], [0, 0, 1, 1], [], []>} : vector<16x128xbf16>, vector<128x128xbf16>, vector<16x128xf32> -> vector<16x128xf32>
    %c0_89 = arith.constant 0 : index
    %c0_90 = arith.constant 0 : index
    %115 = vector.load %arg14[%c0_89, %c0_90] : memref<1x128xf32, #tpu.memory_space<vmem>>, vector<1x128xf32>
    %116 = vector.broadcast %115 : vector<1x128xf32> to vector<16x128xf32>
    %117 = arith.addf %114, %116 : vector<16x128xf32>
    %118 = vector.shape_cast %117 : vector<16x128xf32> to vector<2x8x128xf32>
    %c0_91 = arith.constant 0 : index
    %c0_92 = arith.constant 0 : index
    %c0_93 = arith.constant 0 : index
    %119 = vector.load %arg15[%c0_91, %c0_92, %c0_93] : memref<2x8x128xf32, #tpu.memory_space<vmem>>, vector<2x8x128xf32>
    tpu.vector_store %arg15[%c0_91, %c0_92, %c0_93], %118 {strides = array<i32>} : memref<2x8x128xf32, #tpu.memory_space<vmem>>, vector<2x8x128xf32>,
    return
  }
  func.func @transform_0(%arg0: i32, %arg1: i32) -> (i32, i32, i32) {
    %c0_i32 = arith.constant 0 : i32
    %c0_i32_0 = arith.constant 0 : i32
    return %arg0, %arg1, %c0_i32 : i32, i32, i32
  }
  func.func @transform_1(%arg0: i32, %arg1: i32) -> (i32, i32) {
    %c0_i32 = arith.constant 0 : i32
    %c0_i32_0 = arith.constant 0 : i32
    %c0_i32_1 = arith.constant 0 : i32
    return %c0_i32, %c0_i32_0 : i32, i32
  }
  func.func @transform_2(%arg0: i32, %arg1: i32) -> (i32, i32) {
    %c0_i32 = arith.constant 0 : i32
    %c0_i32_0 = arith.constant 0 : i32
    %c0_i32_1 = arith.constant 0 : i32
    return %c0_i32, %c0_i32_0 : i32, i32
  }
  func.func @transform_3(%arg0: i32, %arg1: i32) -> (i32, i32) {
    %c0_i32 = arith.constant 0 : i32
    %c0_i32_0 = arith.constant 0 : i32
    %c0_i32_1 = arith.constant 0 : i32
    return %c0_i32, %c0_i32_0 : i32, i32
  }
  func.func @transform_4(%arg0: i32, %arg1: i32) -> (i32, i32) {
    %c0_i32 = arith.constant 0 : i32
    %c0_i32_0 = arith.constant 0 : i32
    %c0_i32_1 = arith.constant 0 : i32
    return %c0_i32, %c0_i32_0 : i32, i32
  }
  func.func @transform_5(%arg0: i32, %arg1: i32) -> (i32, i32) {
    %c0_i32 = arith.constant 0 : i32
    %c0_i32_0 = arith.constant 0 : i32
    %c0_i32_1 = arith.constant 0 : i32
    return %c0_i32, %c0_i32_0 : i32, i32
  }
  func.func @transform_6(%arg0: i32, %arg1: i32) -> (i32, i32) {
    %c0_i32 = arith.constant 0 : i32
    %c0_i32_0 = arith.constant 0 : i32
    %c0_i32_1 = arith.constant 0 : i32
    return %c0_i32, %c0_i32_0 : i32, i32
  }
  func.func @transform_7(%arg0: i32, %arg1: i32) -> (i32, i32) {
    %c0_i32 = arith.constant 0 : i32
    %c0_i32_0 = arith.constant 0 : i32
    %c0_i32_1 = arith.constant 0 : i32
    return %c0_i32, %c0_i32_0 : i32, i32
  }
  func.func @transform_8(%arg0: i32, %arg1: i32) -> (i32, i32) {
    %c0_i32 = arith.constant 0 : i32
    %c0_i32_0 = arith.constant 0 : i32
    %c0_i32_1 = arith.constant 0 : i32
    return %c0_i32, %c0_i32_0 : i32, i32
  }
  func.func @transform_9(%arg0: i32, %arg1: i32) -> (i32, i32) {
    %c0_i32 = arith.constant 0 : i32
    %c0_i32_0 = arith.constant 0 : i32
    %c0_i32_1 = arith.constant 0 : i32
    return %c0_i32, %c0_i32_0 : i32, i32
  }
  func.func @transform_10(%arg0: i32, %arg1: i32) -> (i32, i32) {
    %c0_i32 = arith.constant 0 : i32
    %c0_i32_0 = arith.constant 0 : i32
    %c0_i32_1 = arith.constant 0 : i32
    return %c0_i32, %c0_i32_0 : i32, i32
  }
  func.func @transform_11(%arg0: i32, %arg1: i32) -> (i32, i32) {
    %c0_i32 = arith.constant 0 : i32
    %c0_i32_0 = arith.constant 0 : i32
    %c0_i32_1 = arith.constant 0 : i32
    return %c0_i32, %c0_i32_0 : i32, i32
  }
  func.func @transform_12(%arg0: i32, %arg1: i32) -> (i32, i32) {
    %c0_i32 = arith.constant 0 : i32
    %c0_i32_0 = arith.constant 0 : i32
    %c0_i32_1 = arith.constant 0 : i32
    return %c0_i32, %c0_i32_0 : i32, i32
  }
  func.func @transform_13(%arg0: i32, %arg1: i32) -> (i32, i32, i32) {
    %c0_i32 = arith.constant 0 : i32
    %c0_i32_0 = arith.constant 0 : i32
    return %arg0, %arg1, %c0_i32 : i32, i32, i32
  }
}

</mosaic_0001>

<llo_original>
// kernel: tpu_custom_call.1
$region0: #{tpu_custom_call.1}
  #allocation0 [shape = 'u32[]', space=smem, size = 0x4, offset = 0x4, fixed_abs, tag = 'smem constant byte address 0x4 - core index']
  #allocation1 [shape = 'u32[144,128]{1,0:T(1,128)}', space=vmem, size = 0x12000, scoped, tag = 'internal scratch']
  #allocation2 [shape = 'f32[2,16,128]{2,1,0:T(8,128)}', space=vmem, size = 0x4000, scoped, tag = 'scratch operand']
  #allocation3 [shape = 'f32[2,16,128]{2,1,0:T(8,128)}', space=vmem, size = 0x4000, scoped, tag = 'scratch operand']
  #allocation4 [shape = 'f32[2,128]{1,0:T(2,128)}', space=vmem, size = 0x400, scoped, tag = 'scratch operand']
  %s0 = inlined_call_operand.hbm [shape: bf16[2,16,128], index: 0, kind: input, shape index: {}]
  %s1 = inlined_call_operand.hbm [shape: bf16[128,128], index: 1, kind: input, shape index: {}]
  %s2 = inlined_call_operand.vmem [shape: f32[1,128], index: 2, kind: input, shape index: {}]
  %s3 = inlined_call_operand.hbm [shape: bf16[128,128], index: 3, kind: input, shape index: {}]
  %s4 = inlined_call_operand.vmem [shape: f32[1,128], index: 4, kind: input, shape index: {}]
  %s5 = inlined_call_operand.vmem [shape: f32[4,128], index: 5, kind: input, shape index: {}]
  %s6 = inlined_call_operand.vmem [shape: f32[1,128], index: 6, kind: input, shape index: {}]
  %s7 = inlined_call_operand.hbm [shape: bf16[128,128], index: 7, kind: input, shape index: {}]
  %s8 = inlined_call_operand.vmem [shape: f32[1,128], index: 8, kind: input, shape index: {}]
  %s9 = inlined_call_operand.vmem [shape: f32[1,128], index: 9, kind: input, shape index: {}]
  %s10 = inlined_call_operand.vmem [shape: f32[1,128], index: 10, kind: input, shape index: {}]
  %s11 = inlined_call_operand.hbm [shape: bf16[128,128], index: 11, kind: input, shape index: {}]
  %s12 = inlined_call_operand.vmem [shape: f32[1,128], index: 12, kind: input, shape index: {}]
  %s13 = inlined_call_operand.hbm [shape: f32[2,16,128], index: 13, kind: output, shape index: {}]
  %s14 = sld [smem:[#allocation0]]
  $region109: #{tpu_custom_call.1} parent=0
    _
  %s16 = ssub.s32 1, %s14
  %s17 = scalar_select 0, %s16, %s14
  $region1: #{tpu_custom_call.1} parent=0
    #allocation5 [shape = 'u8[8192]{0}', space=vmem, size = 0x2000, scoped, tag = 'input window, operand 0']
    #allocation6 [shape = 's32[2]{0}', space=sflag, size = 0x8, scoped, tag = 'scoped memory for tpu_custom_call.1']
    #allocation7 [shape = 's32[2]{0}', space=sflag, size = 0x8, scoped, tag = 'scoped memory for tpu_custom_call.1']
    #allocation8 [shape = 'u8[32768]{0}', space=vmem, size = 0x8000, scoped, tag = 'input window, operand 1, single buffered']
    #allocation9 [shape = 's32[1]{0}', space=sflag, size = 0x4, scoped, tag = 'scoped memory for tpu_custom_call.1']
    #allocation10 [shape = 'u8[32768]{0}', space=vmem, size = 0x8000, scoped, tag = 'input window, operand 3, single buffered']
    #allocation11 [shape = 'u8[32768]{0}', space=vmem, size = 0x8000, scoped, tag = 'input window, operand 7, single buffered']
    #allocation12 [shape = 's32[1]{0}', space=sflag, size = 0x4, scoped, tag = 'scoped memory for tpu_custom_call.1']
    #allocation13 [shape = 'u8[32768]{0}', space=vmem, size = 0x8000, scoped, tag = 'input window, operand 11, single buffered']
    #allocation14 [shape = 'u8[16384]{0}', space=vmem, size = 0x4000, scoped, tag = 'output window, operand 0']
    %18 = vsyncpa [#allocation6], 0
    %s19 = scalar_lea.sflag [#allocation6], 1
    %20 = vsyncpa %s19, 0
    %21 = vsyncpa [#allocation9], 0
    %22 = vsyncpa [#allocation12], 0
    %23 = vsyncpa [#allocation7], 0
    %s24 = scalar_lea.sflag [#allocation7], 1
    %25 = vsyncpa %s24, 0
    loop: start=0, step=1, limit=4
    $region2: #{tpu_custom_call.1} parent=1 // loop_pre_header
      _
    $region3: #{tpu_custom_call.1} parent=1 // loop_header
      %s27 = sphi 0, %s31
      %p28 = scmp.ge.s32.totalorder %s27, 4
      %s34 = sphi 0, %s46
      %s35 = sphi 0, %s42
      %s36 = sphi 0, %s34
      %s37 = sphi 0, %s35
      %s38 = sphi 0, %s36
      %s39 = sphi 0, %s37
      %s51 = sphi 0, %s53
      %s54 = sphi 0, %s51
      %s55 = sphi 0, %s54
      %s71 = sphi 0, %s55
      %s75 = sphi 0, %s75
      %s77 = sphi 0, %s75
      %s78 = sphi 0, %s77
      %s92 = sphi 0, %s78
      %s96 = sphi 0, %s96
      %s98 = sphi 0, %s96
      %s99 = sphi 0, %s98
      %s113 = sphi 0, %s99
      %s117 = sphi 0, %s117
      %s119 = sphi 0, %s117
      %s120 = sphi 0, %s119
      %s134 = sphi 0, %s120
      %s138 = sphi 0, %s138
      %s140 = sphi 0, %s138
      %s141 = sphi 0, %s140
      %s155 = sphi 0, %s141
      %s159 = sphi 0, %s159
      %s161 = sphi 0, %s159
      %s162 = sphi 0, %s161
      %s176 = sphi 0, %s162
      %s180 = sphi 0, %s180
      %s182 = sphi 0, %s180
      %s183 = sphi 0, %s182
      %s197 = sphi 0, %s183
      %s201 = sphi 0, %s201
      %s203 = sphi 0, %s201
      %s204 = sphi 0, %s203
      %s218 = sphi 0, %s204
      %s222 = sphi 0, %s222
      %s224 = sphi 0, %s222
      %s225 = sphi 0, %s224
      %s239 = sphi 0, %s225
      %s243 = sphi 0, %s243
      %s245 = sphi 0, %s243
      %s246 = sphi 0, %s245
      %s260 = sphi 0, %s246
      %s264 = sphi 0, %s264
      %s266 = sphi 0, %s264
      %s267 = sphi 0, %s266
      %s281 = sphi 0, %s267
      %s285 = sphi 0, %s285
      %s287 = sphi 0, %s285
      %s288 = sphi 0, %s287
      %s302 = sphi 0, %s288
      %s306 = sphi 0, %s306
      %s308 = sphi 0, %s306
      %s309 = sphi 0, %s308
      %s323 = sphi 0, %s309
      %s331 = sphi 0, %s333
      %s334 = sphi 0, %s331
      %s335 = sphi 0, %s334
      %s351 = sphi 0, %s335
    $region4: #{tpu_custom_call.1} parent=1 // loop_header_branch
      %30 = sbr.rel (%p28) target = $region8
    $region5: #{tpu_custom_call.1} parent=1 // loop_body
      %s32 = ssub.s32 %s27, 1
      %s33 = ssub.s32 %s27, 2
      %s40 = sadd.s32 1, %s35
      %p41 = scmp.ge.s32.totalorder %s40, 2
      %s42 = scalar_select %p41, 0, %s40
      %s43 = sadd.s32 1, %s34
      %s44 = scalar_select %p41, %s43, %s34
      %p45 = scmp.ge.s32.totalorder %s44, 1
      %s46 = scalar_select %p45, 0, %s44
      %s47 = ssub.s32 %s34, %s46
      %s48 = ssub.s32 %s35, %s42
      %s49 = sor.u32 %s47, %s48
      %p50 = scmp.eq.s32.totalorder %s49, 0
      %s52 = sadd.s32 %s51, 1
      %s53 = scalar_select %p50, %s51, %s52
      %p56 = pneg %p50
      %p57 = scmp.eq.s32.totalorder %s27, 1
      %p58 = por %p56, %p57
      %p59 = scmp.ne.s32.totalorder %s51, %s54
      %p60 = scmp.eq.s32.totalorder %s27, 0
      %p61 = por %p59, %p60
      %p62 = scmp.ne.s32.totalorder %s51, %s54
      %p63 = scmp.eq.s32.totalorder %s32, 1
      %p64 = por %p62, %p63
      %p65 = scmp.ne.s32.totalorder %s54, %s55
      %p66 = scmp.eq.s32.totalorder %s32, 0
      %p67 = por %p65, %p66
      %p68 = scmp.ne.s32.totalorder %s54, %s55
      %p69 = scmp.eq.s32.totalorder %s33, 1
      %p70 = por %p68, %p69
      %p72 = scmp.ne.s32.totalorder %s55, %s71
      %p73 = scmp.eq.s32.totalorder %s33, 0
      %p74 = por %p72, %p73
      %s76 = sadd.s32 %s75, 1
      %p79 = scmp.eq.s32.totalorder %s27, 1
      %p80 = scmp.ne.s32.totalorder %s75, %s77
      %p81 = scmp.eq.s32.totalorder %s27, 0
      %p82 = por %p80, %p81
      %p83 = scmp.ne.s32.totalorder %s75, %s77
      %p84 = scmp.eq.s32.totalorder %s32, 1
      %p85 = por %p83, %p84
      %p86 = scmp.ne.s32.totalorder %s77, %s78
      %p87 = scmp.eq.s32.totalorder %s32, 0
      %p88 = por %p86, %p87
      %p89 = scmp.ne.s32.totalorder %s77, %s78
      %p90 = scmp.eq.s32.totalorder %s33, 1
      %p91 = por %p89, %p90
      %p93 = scmp.ne.s32.totalorder %s78, %s92
      %p94 = scmp.eq.s32.totalorder %s33, 0
      %p95 = por %p93, %p94
      %s97 = sadd.s32 %s96, 1
      %p100 = scmp.eq.s32.totalorder %s27, 1
      %p101 = scmp.ne.s32.totalorder %s96, %s98
      %p102 = scmp.eq.s32.totalorder %s27, 0
      %p103 = por %p101, %p102
      %p104 = scmp.ne.s32.totalorder %s96, %s98
      %p105 = scmp.eq.s32.totalorder %s32, 1
      %p106 = por %p104, %p105
      %p107 = scmp.ne.s32.totalorder %s98, %s99
      %p108 = scmp.eq.s32.totalorder %s32, 0
      %p109 = por %p107, %p108
      %p110 = scmp.ne.s32.totalorder %s98, %s99
      %p111 = scmp.eq.s32.totalorder %s33, 1
      %p112 = por %p110, %p111
      %p114 = scmp.ne.s32.totalorder %s99, %s113
      %p115 = scmp.eq.s32.totalorder %s33, 0
      %p116 = por %p114, %p115
      %s118 = sadd.s32 %s117, 1
      %p121 = scmp.eq.s32.totalorder %s27, 1
      %p122 = scmp.ne.s32.totalorder %s117, %s119
      %p123 = scmp.eq.s32.totalorder %s27, 0
      %p124 = por %p122, %p123
      %p125 = scmp.ne.s32.totalorder %s117, %s119
      %p126 = scmp.eq.s32.totalorder %s32, 1
      %p127 = por %p125, %p126
      %p128 = scmp.ne.s32.totalorder %s119, %s120
      %p129 = scmp.eq.s32.totalorder %s32, 0
      %p130 = por %p128, %p129
      %p131 = scmp.ne.s32.totalorder %s119, %s120
      %p132 = scmp.eq.s32.totalorder %s33, 1
      %p133 = por %p131, %p132
      %p135 = scmp.ne.s32.totalorder %s120, %s134
      %p136 = scmp.eq.s32.totalorder %s33, 0
      %p137 = por %p135, %p136
      %s139 = sadd.s32 %s138, 1
      %p142 = scmp.eq.s32.totalorder %s27, 1
      %p143 = scmp.ne.s32.totalorder %s138, %s140
      %p144 = scmp.eq.s32.totalorder %s27, 0
      %p145 = por %p143, %p144
      %p146 = scmp.ne.s32.totalorder %s138, %s140
      %p147 = scmp.eq.s32.totalorder %s32, 1
      %p148 = por %p146, %p147
      %p149 = scmp.ne.s32.totalorder %s140, %s141
      %p150 = scmp.eq.s32.totalorder %s32, 0
      %p151 = por %p149, %p150
      %p152 = scmp.ne.s32.totalorder %s140, %s141
      %p153 = scmp.eq.s32.totalorder %s33, 1
      %p154 = por %p152, %p153
      %p156 = scmp.ne.s32.totalorder %s141, %s155
      %p157 = scmp.eq.s32.totalorder %s33, 0
      %p158 = por %p156, %p157
      %s160 = sadd.s32 %s159, 1
      %p163 = scmp.eq.s32.totalorder %s27, 1
      %p164 = scmp.ne.s32.totalorder %s159, %s161
      %p165 = scmp.eq.s32.totalorder %s27, 0
      %p166 = por %p164, %p165
      %p167 = scmp.ne.s32.totalorder %s159, %s161
      %p168 = scmp.eq.s32.totalorder %s32, 1
      %p169 = por %p167, %p168
      %p170 = scmp.ne.s32.totalorder %s161, %s162
      %p171 = scmp.eq.s32.totalorder %s32, 0
      %p172 = por %p170, %p171
      %p173 = scmp.ne.s32.totalorder %s161, %s162
      %p174 = scmp.eq.s32.totalorder %s33, 1
      %p175 = por %p173, %p174
      %p177 = scmp.ne.s32.totalorder %s162, %s176
      %p178 = scmp.eq.s32.totalorder %s33, 0
      %p179 = por %p177, %p178
      %s181 = sadd.s32 %s180, 1
      %p184 = scmp.eq.s32.totalorder %s27, 1
      %p185 = scmp.ne.s32.totalorder %s180, %s182
      %p186 = scmp.eq.s32.totalorder %s27, 0
      %p187 = por %p185, %p186
      %p188 = scmp.ne.s32.totalorder %s180, %s182
      %p189 = scmp.eq.s32.totalorder %s32, 1
      %p190 = por %p188, %p189
      %p191 = scmp.ne.s32.totalorder %s182, %s183
      %p192 = scmp.eq.s32.totalorder %s32, 0
      %p193 = por %p191, %p192
      %p194 = scmp.ne.s32.totalorder %s182, %s183
      %p195 = scmp.eq.s32.totalorder %s33, 1
      %p196 = por %p194, %p195
      %p198 = scmp.ne.s32.totalorder %s183, %s197
      %p199 = scmp.eq.s32.totalorder %s33, 0
      %p200 = por %p198, %p199
      %s202 = sadd.s32 %s201, 1
      %p205 = scmp.eq.s32.totalorder %s27, 1
      %p206 = scmp.ne.s32.totalorder %s201, %s203
      %p207 = scmp.eq.s32.totalorder %s27, 0
      %p208 = por %p206, %p207
      %p209 = scmp.ne.s32.totalorder %s201, %s203
      %p210 = scmp.eq.s32.totalorder %s32, 1
      %p211 = por %p209, %p210
      %p212 = scmp.ne.s32.totalorder %s203, %s204
      %p213 = scmp.eq.s32.totalorder %s32, 0
      %p214 = por %p212, %p213
      %p215 = scmp.ne.s32.totalorder %s203, %s204
      %p216 = scmp.eq.s32.totalorder %s33, 1
      %p217 = por %p215, %p216
      %p219 = scmp.ne.s32.totalorder %s204, %s218
      %p220 = scmp.eq.s32.totalorder %s33, 0
      %p221 = por %p219, %p220
      %s223 = sadd.s32 %s222, 1
      %p226 = scmp.eq.s32.totalorder %s27, 1
      %p227 = scmp.ne.s32.totalorder %s222, %s224
      %p228 = scmp.eq.s32.totalorder %s27, 0
      %p229 = por %p227, %p228
      %p230 = scmp.ne.s32.totalorder %s222, %s224
      %p231 = scmp.eq.s32.totalorder %s32, 1
      %p232 = por %p230, %p231
      %p233 = scmp.ne.s32.totalorder %s224, %s225
      %p234 = scmp.eq.s32.totalorder %s32, 0
      %p235 = por %p233, %p234
      %p236 = scmp.ne.s32.totalorder %s224, %s225
      %p237 = scmp.eq.s32.totalorder %s33, 1
      %p238 = por %p236, %p237
      %p240 = scmp.ne.s32.totalorder %s225, %s239
      %p241 = scmp.eq.s32.totalorder %s33, 0
      %p242 = por %p240, %p241
      %s244 = sadd.s32 %s243, 1
      %p247 = scmp.eq.s32.totalorder %s27, 1
      %p248 = scmp.ne.s32.totalorder %s243, %s245
      %p249 = scmp.eq.s32.totalorder %s27, 0
      %p250 = por %p248, %p249
      %p251 = scmp.ne.s32.totalorder %s243, %s245
      %p252 = scmp.eq.s32.totalorder %s32, 1
      %p253 = por %p251, %p252
      %p254 = scmp.ne.s32.totalorder %s245, %s246
      %p255 = scmp.eq.s32.totalorder %s32, 0
      %p256 = por %p254, %p255
      %p257 = scmp.ne.s32.totalorder %s245, %s246
      %p258 = scmp.eq.s32.totalorder %s33, 1
      %p259 = por %p257, %p258
      %p261 = scmp.ne.s32.totalorder %s246, %s260
      %p262 = scmp.eq.s32.totalorder %s33, 0
      %p263 = por %p261, %p262
      %s265 = sadd.s32 %s264, 1
      %p268 = scmp.eq.s32.totalorder %s27, 1
      %p269 = scmp.ne.s32.totalorder %s264, %s266
      %p270 = scmp.eq.s32.totalorder %s27, 0
      %p271 = por %p269, %p270
      %p272 = scmp.ne.s32.totalorder %s264, %s266
      %p273 = scmp.eq.s32.totalorder %s32, 1
      %p274 = por %p272, %p273
      %p275 = scmp.ne.s32.totalorder %s266, %s267
      %p276 = scmp.eq.s32.totalorder %s32, 0
      %p277 = por %p275, %p276
      %p278 = scmp.ne.s32.totalorder %s266, %s267
      %p279 = scmp.eq.s32.totalorder %s33, 1
      %p280 = por %p278, %p279
      %p282 = scmp.ne.s32.totalorder %s267, %s281
      %p283 = scmp.eq.s32.totalorder %s33, 0
      %p284 = por %p282, %p283
      %s286 = sadd.s32 %s285, 1
      %p289 = scmp.eq.s32.totalorder %s27, 1
      %p290 = scmp.ne.s32.totalorder %s285, %s287
      %p291 = scmp.eq.s32.totalorder %s27, 0
      %p292 = por %p290, %p291
      %p293 = scmp.ne.s32.totalorder %s285, %s287
      %p294 = scmp.eq.s32.totalorder %s32, 1
      %p295 = por %p293, %p294
      %p296 = scmp.ne.s32.totalorder %s287, %s288
      %p297 = scmp.eq.s32.totalorder %s32, 0
      %p298 = por %p296, %p297
      %p299 = scmp.ne.s32.totalorder %s287, %s288
      %p300 = scmp.eq.s32.totalorder %s33, 1
      %p301 = por %p299, %p300
      %p303 = scmp.ne.s32.totalorder %s288, %s302
      %p304 = scmp.eq.s32.totalorder %s33, 0
      %p305 = por %p303, %p304
      %s307 = sadd.s32 %s306, 1
      %p310 = scmp.eq.s32.totalorder %s27, 1
      %p311 = scmp.ne.s32.totalorder %s306, %s308
      %p312 = scmp.eq.s32.totalorder %s27, 0
      %p313 = por %p311, %p312
      %p314 = scmp.ne.s32.totalorder %s306, %s308
      %p315 = scmp.eq.s32.totalorder %s32, 1
      %p316 = por %p314, %p315
      %p317 = scmp.ne.s32.totalorder %s308, %s309
      %p318 = scmp.eq.s32.totalorder %s32, 0
      %p319 = por %p317, %p318
      %p320 = scmp.ne.s32.totalorder %s308, %s309
      %p321 = scmp.eq.s32.totalorder %s33, 1
      %p322 = por %p320, %p321
      %p324 = scmp.ne.s32.totalorder %s309, %s323
      %p325 = scmp.eq.s32.totalorder %s33, 0
      %p326 = por %p324, %p325
      %s327 = ssub.s32 %s34, %s46
      %s328 = ssub.s32 %s35, %s42
      %s329 = sor.u32 %s327, %s328
      %p330 = scmp.eq.s32.totalorder %s329, 0
      %s332 = sadd.s32 %s331, 1
      %s333 = scalar_select %p330, %s331, %s332
      %p336 = pneg %p330
      %p337 = scmp.eq.s32.totalorder %s27, 1
      %p338 = por %p336, %p337
      %p339 = scmp.ne.s32.totalorder %s331, %s334
      %p340 = scmp.eq.s32.totalorder %s27, 0
      %p341 = por %p339, %p340
      %p342 = scmp.ne.s32.totalorder %s331, %s334
      %p343 = scmp.eq.s32.totalorder %s32, 1
      %p344 = por %p342, %p343
      %p345 = scmp.ne.s32.totalorder %s334, %s335
      %p346 = scmp.eq.s32.totalorder %s32, 0
      %p347 = por %p345, %p346
      %p348 = scmp.ne.s32.totalorder %s334, %s335
      %p349 = scmp.eq.s32.totalorder %s33, 1
      %p350 = por %p348, %p349
      %p352 = scmp.ne.s32.totalorder %s335, %s351
      %p353 = scmp.eq.s32.totalorder %s33, 0
      %p354 = por %p352, %p353
      %p355 = scmp.le.s32.totalorder 1, %s27
      %p356 = scmp.lt.s32.totalorder %s27, 3
      %p357 = pnand %p355, %p356
      %p358 = pneg %p357
      // Predicated region
      $region9: #{tpu_custom_call.1} parent=5 // pred_check
        _
      $region10: #{tpu_custom_call.1} parent=5 // pred_check_branch
        %360 = sbr.rel (%p357) target = $region12
      $region11: #{tpu_custom_call.1} parent=5 // pred_region
        %s361 = ssub.s32 %s27, 1
        // Predicated region
        $region13: #{tpu_custom_call.1} parent=11 // pred_check
          %p362 = pneg %p88
        $region14: #{tpu_custom_call.1} parent=11 // pred_check_branch
          %364 = sbr.rel (%p362) target = $region16
        $region15: #{tpu_custom_call.1} parent=11 // pred_region
          %s366 = ssub.s32 1024, 1024
          %367 = vsyncadd [#allocation9], %s366
          %s368 = sshll.u32 [#allocation8], 4
          %s369 = int_to_ptr.vmem [resolvable:$true] %s368
          %374 = dma.hbm_to_vmem [thread:$0]  %s1, 1024, %s369, [#allocation9], 64, 64, 4
        $region16: #{tpu_custom_call.1} parent=11 // pred_fallthru
          _
        // Predicated region
        $region17: #{tpu_custom_call.1} parent=11 // pred_check
          %p375 = pneg %p109
        $region18: #{tpu_custom_call.1} parent=11 // pred_check_branch
          %377 = sbr.rel (%p375) target = $region20
        $region19: #{tpu_custom_call.1} parent=11 // pred_region
          _
        $region20: #{tpu_custom_call.1} parent=11 // pred_fallthru
          _
        // Predicated region
        $region21: #{tpu_custom_call.1} parent=11 // pred_check
          %p378 = pneg %p130
        $region22: #{tpu_custom_call.1} parent=11 // pred_check_branch
          %380 = sbr.rel (%p378) target = $region24
        $region23: #{tpu_custom_call.1} parent=11 // pred_region
          %s382 = ssub.s32 1024, 1024
          %383 = vsyncadd [#allocation9], %s382
          %s384 = sshll.u32 [#allocation10], 4
          %s385 = int_to_ptr.vmem [resolvable:$true] %s384
          %390 = dma.hbm_to_vmem [thread:$0]  %s3, 1024, %s385, [#allocation9], 64, 64, 4
        $region24: #{tpu_custom_call.1} parent=11 // pred_fallthru
          _
        // Predicated region
        $region25: #{tpu_custom_call.1} parent=11 // pred_check
          %p391 = pneg %p151
        $region26: #{tpu_custom_call.1} parent=11 // pred_check_branch
          %393 = sbr.rel (%p391) target = $region28
        $region27: #{tpu_custom_call.1} parent=11 // pred_region
          _
        $region28: #{tpu_custom_call.1} parent=11 // pred_fallthru
          _
        // Predicated region
        $region29: #{tpu_custom_call.1} parent=11 // pred_check
          %p394 = pneg %p172
        $region30: #{tpu_custom_call.1} parent=11 // pred_check_branch
          %396 = sbr.rel (%p394) target = $region32
        $region31: #{tpu_custom_call.1} parent=11 // pred_region
          _
        $region32: #{tpu_custom_call.1} parent=11 // pred_fallthru
          _
        // Predicated region
        $region33: #{tpu_custom_call.1} parent=11 // pred_check
          %p397 = pneg %p193
        $region34: #{tpu_custom_call.1} parent=11 // pred_check_branch
          %399 = sbr.rel (%p397) target = $region36
        $region35: #{tpu_custom_call.1} parent=11 // pred_region
          _
        $region36: #{tpu_custom_call.1} parent=11 // pred_fallthru
          _
        // Predicated region
        $region37: #{tpu_custom_call.1} parent=11 // pred_check
          %p400 = pneg %p214
        $region38: #{tpu_custom_call.1} parent=11 // pred_check_branch
          %402 = sbr.rel (%p400) target = $region40
        $region39: #{tpu_custom_call.1} parent=11 // pred_region
          %s404 = ssub.s32 1024, 1024
          %405 = vsyncadd [#allocation12], %s404
          %s406 = sshll.u32 [#allocation11], 4
          %s407 = int_to_ptr.vmem [resolvable:$true] %s406
          %412 = dma.hbm_to_vmem [thread:$0]  %s7, 1024, %s407, [#allocation12], 64, 64, 4
        $region40: #{tpu_custom_call.1} parent=11 // pred_fallthru
          _
        // Predicated region
        $region41: #{tpu_custom_call.1} parent=11 // pred_check
          %p413 = pneg %p235
        $region42: #{tpu_custom_call.1} parent=11 // pred_check_branch
          %415 = sbr.rel (%p413) target = $region44
        $region43: #{tpu_custom_call.1} parent=11 // pred_region
          _
        $region44: #{tpu_custom_call.1} parent=11 // pred_fallthru
          _
        // Predicated region
        $region45: #{tpu_custom_call.1} parent=11 // pred_check
          %p416 = pneg %p256
        $region46: #{tpu_custom_call.1} parent=11 // pred_check_branch
          %418 = sbr.rel (%p416) target = $region48
        $region47: #{tpu_custom_call.1} parent=11 // pred_region
          _
        $region48: #{tpu_custom_call.1} parent=11 // pred_fallthru
          _
        // Predicated region
        $region49: #{tpu_custom_call.1} parent=11 // pred_check
          %p419 = pneg %p277
        $region50: #{tpu_custom_call.1} parent=11 // pred_check_branch
          %421 = sbr.rel (%p419) target = $region52
        $region51: #{tpu_custom_call.1} parent=11 // pred_region
          _
        $region52: #{tpu_custom_call.1} parent=11 // pred_fallthru
          _
        // Predicated region
        $region53: #{tpu_custom_call.1} parent=11 // pred_check
          %p422 = pneg %p298
        $region54: #{tpu_custom_call.1} parent=11 // pred_check_branch
          %424 = sbr.rel (%p422) target = $region56
        $region55: #{tpu_custom_call.1} parent=11 // pred_region
          %s426 = ssub.s32 1024, 1024
          %427 = vsyncadd [#allocation12], %s426
          %s428 = sshll.u32 [#allocation13], 4
          %s429 = int_to_ptr.vmem [resolvable:$true] %s428
          %434 = dma.hbm_to_vmem [thread:$0]  %s11, 1024, %s429, [#allocation12], 64, 64, 4
        $region56: #{tpu_custom_call.1} parent=11 // pred_fallthru
          _
        // Predicated region
        $region57: #{tpu_custom_call.1} parent=11 // pred_check
          %p435 = pneg %p319
        $region58: #{tpu_custom_call.1} parent=11 // pred_check_branch
          %437 = sbr.rel (%p435) target = $region60
        $region59: #{tpu_custom_call.1} parent=11 // pred_region
          _
        $region60: #{tpu_custom_call.1} parent=11 // pred_fallthru
          _
      $region12: #{tpu_custom_call.1} parent=5 // pred_fallthru
        _
      %p438 = scmp.lt.s32.totalorder %s27, 2
      // Predicated region
      $region61: #{tpu_custom_call.1} parent=5 // pred_check
        %p439 = pneg %p438
      $region62: #{tpu_custom_call.1} parent=5 // pred_check_branch
        %441 = sbr.rel (%p439) target = $region64
      $region63: #{tpu_custom_call.1} parent=5 // pred_region
        // Predicated region
        $region65: #{tpu_custom_call.1} parent=63 // pred_check
          %p442 = pneg %p61
        $region66: #{tpu_custom_call.1} parent=63 // pred_check_branch
          %444 = sbr.rel (%p442) target = $region68
        $region67: #{tpu_custom_call.1} parent=63 // pred_region
          %s445 = sand.u32 %s51, 1
          %s446 = scalar_lea.sflag [#allocation6], %s445
          %s447 = sand.u32 %s51, 1
          %s448 = smul.addr %s447, 8
          %s449 = scalar_lea.vmem [#allocation5], %s448
          %s450 = smul.u32 2, %s34
          %s452 = ssub.s32 128, 128
          %453 = vsyncadd %s446, %s452
          %s454 = smul.addr %s450, 2
          %s455 = sadd.s32 %s35, %s454
          %s456 = smul.addr %s455, 64
          %s457 = scalar_lea.hbm %s0, %s456
          %s458 = sshll.u32 %s449, 4
          %s459 = int_to_ptr.vmem [resolvable:$true] %s458
          %464 = dma.hbm_to_vmem [thread:$0]  %s457, 128, %s459, %s446, 128, 64, 4
        $region68: #{tpu_custom_call.1} parent=63 // pred_fallthru
          _
      $region64: #{tpu_custom_call.1} parent=5 // pred_fallthru
        _
      %p465 = scmp.le.s32.totalorder 1, %s27
      %p466 = scmp.lt.s32.totalorder %s27, 3
      %p467 = pnand %p465, %p466
      %p468 = pneg %p467
      // Predicated region
      $region69: #{tpu_custom_call.1} parent=5 // pred_check
        _
      $region70: #{tpu_custom_call.1} parent=5 // pred_check_branch
        %470 = sbr.rel (%p467) target = $region72
      $region71: #{tpu_custom_call.1} parent=5 // pred_region
        %s471 = ssub.s32 %s27, 1
        %s472 = sand.u32 %s54, 1
        %s473 = scalar_lea.sflag [#allocation6], %s472
        %s474 = sand.u32 %s54, 1
        %s475 = smul.addr %s474, 8
        %s476 = scalar_lea.vmem [#allocation5], %s475
        // Predicated region
        $region73: #{tpu_custom_call.1} parent=71 // pred_check
          %p477 = pneg %p67
        $region74: #{tpu_custom_call.1} parent=71 // pred_check_branch
          %479 = sbr.rel (%p477) target = $region76
        $region75: #{tpu_custom_call.1} parent=71 // pred_region
          %480 = dma.done %s473, 128
        $region76: #{tpu_custom_call.1} parent=71 // pred_fallthru
          _
        // Predicated region
        $region77: #{tpu_custom_call.1} parent=71 // pred_check
          %p481 = pneg %p88
        $region78: #{tpu_custom_call.1} parent=71 // pred_check_branch
          %483 = sbr.rel (%p481) target = $region80
        $region79: #{tpu_custom_call.1} parent=71 // pred_region
          %484 = dma.done [#allocation9], 1024
        $region80: #{tpu_custom_call.1} parent=71 // pred_fallthru
          _
        // Predicated region
        $region81: #{tpu_custom_call.1} parent=71 // pred_check
          %p485 = pneg %p130
        $region82: #{tpu_custom_call.1} parent=71 // pred_check_branch
          %487 = sbr.rel (%p485) target = $region84
        $region83: #{tpu_custom_call.1} parent=71 // pred_region
          %488 = dma.done [#allocation9], 1024
        $region84: #{tpu_custom_call.1} parent=71 // pred_fallthru
          _
        // Predicated region
        $region85: #{tpu_custom_call.1} parent=71 // pred_check
          %p489 = pneg %p214
        $region86: #{tpu_custom_call.1} parent=71 // pred_check_branch
          %491 = sbr.rel (%p489) target = $region88
        $region87: #{tpu_custom_call.1} parent=71 // pred_region
          %492 = dma.done [#allocation12], 1024
        $region88: #{tpu_custom_call.1} parent=71 // pred_fallthru
          _
        // Predicated region
        $region89: #{tpu_custom_call.1} parent=71 // pred_check
          %p493 = pneg %p298
        $region90: #{tpu_custom_call.1} parent=71 // pred_check_branch
          %495 = sbr.rel (%p493) target = $region92
        $region91: #{tpu_custom_call.1} parent=71 // pred_region
          %496 = dma.done [#allocation12], 1024
        $region92: #{tpu_custom_call.1} parent=71 // pred_fallthru
          _
        %s497 = sand.u32 %s54, 1
        %s498 = scalar_lea.sflag [#allocation6], %s497
        %s499 = sand.u32 %s54, 1
        %s500 = smul.addr %s499, 8
        %s501 = scalar_lea.vmem [#allocation5], %s500
        %p502 = pneg %p67
        %p503 = pneg %p64
        %p504 = pneg %p88
        %p505 = pneg %p85
        %p506 = pneg %p109
        %p507 = pneg %p106
        %p508 = pneg %p130
        %p509 = pneg %p127
        %p510 = pneg %p151
        %p511 = pneg %p148
        %p512 = pneg %p172
        %p513 = pneg %p169
        %p514 = pneg %p193
        %p515 = pneg %p190
        %p516 = pneg %p214
        %p517 = pneg %p211
        %p518 = pneg %p235
        %p519 = pneg %p232
        %p520 = pneg %p256
        %p521 = pneg %p253
        %p522 = pneg %p277
        %p523 = pneg %p274
        %p524 = pneg %p298
        %p525 = pneg %p295
        %p526 = pneg %p319
        %p527 = pneg %p316
        %p528 = pneg %p347
        %p529 = pneg %p344
        %s530 = sand.u32 %s334, 1
        %s531 = scalar_lea.sflag [#allocation7], %s530
        %s532 = sand.u32 %s334, 1
        %s533 = smul.addr %s532, 16
        %s534 = scalar_lea.vmem [#allocation14], %s533
        %s535 = smul.u32 2, %s36
        %s536 = smul.u32 2, %s36
        %p538 = scmp.eq.s32.totalorder %s37, 0
        // Predicated region
        $region93: #{tpu_custom_call.1} parent=71 // pred_check
          %p539 = pneg %p538
        $region94: #{tpu_custom_call.1} parent=71 // pred_check_branch
          %541 = sbr.rel (%p539) target = $region96
        $region95: #{tpu_custom_call.1} parent=71 // pred_region
          %542 = vst [vmem:[#allocation2] sm:$0xff] 0.0
          %543 = vst [vmem:[#allocation2 + $0x10] sm:$0xff] 0.0
          %544 = vst [vmem:[#allocation3] sm:$0xff] 0.0
          %545 = vst [vmem:[#allocation3 + $0x10] sm:$0xff] 0.0
          %546 = vst [vmem:[#allocation4] sm:$0x3] 0.0
        $region96: #{tpu_custom_call.1} parent=71 // pred_fallthru
          _
        %v547 = vld [vmem:[%s476] sm:$0xf]
        %v548 = vld [vmem:[%s476 + $0x4] sm:$0xf]
        %v549 = vld [vmem:[#allocation8] sm:$0xf]
        %v550 = vld [vmem:[#allocation8 + $0x4] sm:$0xf]
        %v551 = vld [vmem:[#allocation8 + $0x8] sm:$0xf]
        %v552 = vld [vmem:[#allocation8 + $0xc] sm:$0xf]
        %v553 = vld [vmem:[#allocation8 + $0x10] sm:$0xf]
        %v554 = vld [vmem:[#allocation8 + $0x14] sm:$0xf]
        %v555 = vld [vmem:[#allocation8 + $0x18] sm:$0xf]
        %v556 = vld [vmem:[#allocation8 + $0x1c] sm:$0xf]
        %v557 = vld [vmem:[#allocation8 + $0x20] sm:$0xf]
        %v558 = vld [vmem:[#allocation8 + $0x24] sm:$0xf]
        %v559 = vld [vmem:[#allocation8 + $0x28] sm:$0xf]
        %v560 = vld [vmem:[#allocation8 + $0x2c] sm:$0xf]
        %v561 = vld [vmem:[#allocation8 + $0x30] sm:$0xf]
        %v562 = vld [vmem:[#allocation8 + $0x34] sm:$0xf]
        %v563 = vld [vmem:[#allocation8 + $0x38] sm:$0xf]
        %v564 = vld [vmem:[#allocation8 + $0x3c] sm:$0xf]
        %v565 = vld [vmem:[%s2] sm:$0x1]
        %v567 = vlaneseq
        %v568 = vshrl.u32 %v567, 7
        %v569 = vsub.s32 0, %v568
        %v570 = vrot.slane %v565, %v569
        %v574 = vunpack.c.l.b16 %v547
        %v575 = vunpack.c.l.b16 %v548
        %v576 = vpack.c.b16 %v575, %v574
        %v594 = vunpack.c.l.b16 %v549
        %v595 = vunpack.c.l.b16 %v550
        %v596 = vunpack.c.l.b16 %v551
        %v597 = vunpack.c.l.b16 %v552
        %v598 = vunpack.c.l.b16 %v553
        %v599 = vunpack.c.l.b16 %v554
        %v600 = vunpack.c.l.b16 %v555
        %v601 = vunpack.c.l.b16 %v556
        %v602 = vunpack.c.l.b16 %v557
        %v603 = vunpack.c.l.b16 %v558
        %v604 = vunpack.c.l.b16 %v559
        %v605 = vunpack.c.l.b16 %v560
        %v606 = vunpack.c.l.b16 %v561
        %v607 = vunpack.c.l.b16 %v562
        %v608 = vunpack.c.l.b16 %v563
        %v609 = vunpack.c.l.b16 %v564
        %v610 = vpack.c.b16 %v595, %v594
        %v611 = vpack.c.b16 %v597, %v596
        %v612 = vpack.c.b16 %v599, %v598
        %v613 = vpack.c.b16 %v601, %v600
        %v614 = vpack.c.b16 %v603, %v602
        %v615 = vpack.c.b16 %v605, %v604
        %v616 = vpack.c.b16 %v607, %v606
        %v617 = vpack.c.b16 %v609, %v608
        %626 = vmatprep.subr.bf16.mxu0 0
        %627 = vmatpush1.bf16.msra.mxu0 %v617
        %628 = vmatprep.subr.bf16.mxu0 0
        %629 = vmatpush1.bf16.msra.mxu0 %v616
        %630 = vmatprep.subr.bf16.mxu0 0
        %631 = vmatpush1.bf16.msra.mxu0 %v615
        %632 = vmatprep.subr.bf16.mxu0 0
        %633 = vmatpush1.bf16.msra.mxu0 %v614
        %634 = vmatprep.subr.bf16.mxu0 0
        %635 = vmatpush1.bf16.msra.mxu0 %v613
        %636 = vmatprep.subr.bf16.mxu0 0
        %637 = vmatpush1.bf16.msra.mxu0 %v612
        %638 = vmatprep.subr.bf16.mxu0 0
        %639 = vmatpush1.bf16.msra.mxu0 %v611
        %640 = vmatprep.subr.bf16.mxu0 0
        %641 = vmatpush1.bf16.msra.mxu0 %v610
        %642 = vmatprep.subr.bf16.mxu0 0
        %643 = vmatpush2.bf16.msra.mxu0 0
        %644 = vmatprep.subr.bf16.mxu0 0
        %645 = vmatpush2.bf16.msra.mxu0 0
        %646 = vmatprep.subr.bf16.mxu0 0
        %647 = vmatpush2.bf16.msra.mxu0 0
        %648 = vmatprep.subr.bf16.mxu0 0
        %649 = vmatpush2.bf16.msra.mxu0 0
        %650 = vmatprep.subr.bf16.mxu0 0
        %651 = vmatpush2.bf16.msra.mxu0 0
        %652 = vmatprep.subr.bf16.mxu0 0
        %653 = vmatpush2.bf16.msra.mxu0 0
        %654 = vmatprep.subr.bf16.mxu0 0
        %655 = vmatpush2.bf16.msra.mxu0 0
        %656 = vmatprep.subr.bf16.mxu0 0
        %657 = vmatpush2.bf16.msra.mxu0 0
        %658 = vmatprep.mubr.bf16.mxu0 0
        %659 = vmatmul.mubr.bf16.gmra.mxu0 %v576
        %v660 = vpop.f32.mrf.mxu0
        %v661 = vadd.f32 %v570, %v660
        %v662 = vpop.f32.mrf.mxu0
        %v663 = vpop.f32.mrf.mxu0
        %v664 = vadd.f32 %v570, %v663
        %v665 = vpop.f32.mrf.mxu0
        %666 = vdwg.mxu0
        %v667 = vld [vmem:[#allocation10] sm:$0xf]
        %v668 = vld [vmem:[#allocation10 + $0x4] sm:$0xf]
        %v669 = vld [vmem:[#allocation10 + $0x8] sm:$0xf]
        %v670 = vld [vmem:[#allocation10 + $0xc] sm:$0xf]
        %v671 = vld [vmem:[#allocation10 + $0x10] sm:$0xf]
        %v672 = vld [vmem:[#allocation10 + $0x14] sm:$0xf]
        %v673 = vld [vmem:[#allocation10 + $0x18] sm:$0xf]
        %v674 = vld [vmem:[#allocation10 + $0x1c] sm:$0xf]
        %v675 = vld [vmem:[#allocation10 + $0x20] sm:$0xf]
        %v676 = vld [vmem:[#allocation10 + $0x24] sm:$0xf]
        %v677 = vld [vmem:[#allocation10 + $0x28] sm:$0xf]
        %v678 = vld [vmem:[#allocation10 + $0x2c] sm:$0xf]
        %v679 = vld [vmem:[#allocation10 + $0x30] sm:$0xf]
        %v680 = vld [vmem:[#allocation10 + $0x34] sm:$0xf]
        %v681 = vld [vmem:[#allocation10 + $0x38] sm:$0xf]
        %v682 = vld [vmem:[#allocation10 + $0x3c] sm:$0xf]
        %v683 = vld [vmem:[%s4] sm:$0x1]
        %v685 = vlaneseq
        %v686 = vshrl.u32 %v685, 7
        %v687 = vsub.s32 0, %v686
        %v688 = vrot.slane %v683, %v687
        %v706 = vunpack.c.l.b16 %v667
        %v707 = vunpack.c.l.b16 %v668
        %v708 = vunpack.c.l.b16 %v669
        %v709 = vunpack.c.l.b16 %v670
        %v710 = vunpack.c.l.b16 %v671
        %v711 = vunpack.c.l.b16 %v672
        %v712 = vunpack.c.l.b16 %v673
        %v713 = vunpack.c.l.b16 %v674
        %v714 = vunpack.c.l.b16 %v675
        %v715 = vunpack.c.l.b16 %v676
        %v716 = vunpack.c.l.b16 %v677
        %v717 = vunpack.c.l.b16 %v678
        %v718 = vunpack.c.l.b16 %v679
        %v719 = vunpack.c.l.b16 %v680
        %v720 = vunpack.c.l.b16 %v681
        %v721 = vunpack.c.l.b16 %v682
        %v722 = vpack.c.b16 %v707, %v706
        %v723 = vpack.c.b16 %v709, %v708
        %v724 = vpack.c.b16 %v711, %v710
        %v725 = vpack.c.b16 %v713, %v712
        %v726 = vpack.c.b16 %v715, %v714
        %v727 = vpack.c.b16 %v717, %v716
        %v728 = vpack.c.b16 %v719, %v718
        %v729 = vpack.c.b16 %v721, %v720
        %738 = vmatprep.subr.bf16.mxu0 0
        %739 = vmatpush1.bf16.msra.mxu0 %v729
        %740 = vmatprep.subr.bf16.mxu0 0
        %741 = vmatpush1.bf16.msra.mxu0 %v728
        %742 = vmatprep.subr.bf16.mxu0 0
        %743 = vmatpush1.bf16.msra.mxu0 %v727
        %744 = vmatprep.subr.bf16.mxu0 0
        %745 = vmatpush1.bf16.msra.mxu0 %v726
        %746 = vmatprep.subr.bf16.mxu0 0
        %747 = vmatpush1.bf16.msra.mxu0 %v725
        %748 = vmatprep.subr.bf16.mxu0 0
        %749 = vmatpush1.bf16.msra.mxu0 %v724
        %750 = vmatprep.subr.bf16.mxu0 0
        %751 = vmatpush1.bf16.msra.mxu0 %v723
        %752 = vmatprep.subr.bf16.mxu0 0
        %753 = vmatpush1.bf16.msra.mxu0 %v722
        %754 = vmatprep.subr.bf16.mxu0 0
        %755 = vmatpush2.bf16.msra.mxu0 0
        %756 = vmatprep.subr.bf16.mxu0 0
        %757 = vmatpush2.bf16.msra.mxu0 0
        %758 = vmatprep.subr.bf16.mxu0 0
        %759 = vmatpush2.bf16.msra.mxu0 0
        %760 = vmatprep.subr.bf16.mxu0 0
        %761 = vmatpush2.bf16.msra.mxu0 0
        %762 = vmatprep.subr.bf16.mxu0 0
        %763 = vmatpush2.bf16.msra.mxu0 0
        %764 = vmatprep.subr.bf16.mxu0 0
        %765 = vmatpush2.bf16.msra.mxu0 0
        %766 = vmatprep.subr.bf16.mxu0 0
        %767 = vmatpush2.bf16.msra.mxu0 0
        %768 = vmatprep.subr.bf16.mxu0 0
        %769 = vmatpush2.bf16.msra.mxu0 0
        %770 = vmatprep.mubr.bf16.mxu0 0
        %771 = vmatmul.mubr.bf16.gmra.mxu0 %v576
        %v772 = vpop.f32.mrf.mxu0
        %v773 = vadd.f32 %v688, %v772
        %v774 = vpop.f32.mrf.mxu0
        %v775 = vpop.f32.mrf.mxu0
        %v776 = vadd.f32 %v688, %v775
        %v777 = vpop.f32.mrf.mxu0
        %778 = vdwg.mxu0
        %779 = vst [vmem:[#allocation2 + $0x8] sm:$0xff] %v661
        %780 = vst [vmem:[#allocation2 + $0x18] sm:$0xff] %v664
        %v781 = vld [vmem:[%s5] sm:$0xf]
        %v782 = vld [vmem:[#allocation2 + $0x5] sm:$0xff]
        %v783 = vld [vmem:[#allocation2 + $0x15] sm:$0xff]
        %v784 = vlaneseq
        %v785 = vshrl.u32 %v784, 7
        %v786 = vsub.s32 0, %v785
        %v787 = vrot.slane %v781, %v786
        %v788 = vmul.f32 %v782, %v787
        %v789 = vmul.f32 %v783, %v787
        %v790 = vld [vmem:[#allocation2 + $0x6] sm:$0xff]
        %v791 = vld [vmem:[#allocation2 + $0x16] sm:$0xff]
        %v792 = vlaneseq
        %v793 = vshrl.u32 %v792, 7
        %v794 = vsub.s32 1, %v793
        %v795 = vrot.slane %v781, %v794
        %v796 = vmul.f32 %v790, %v795
        %v797 = vmul.f32 %v791, %v795
        %v798 = vadd.f32 %v788, %v796
        %v799 = vadd.f32 %v789, %v797
        %v800 = vld [vmem:[#allocation2 + $0x7] sm:$0xff]
        %v801 = vld [vmem:[#allocation2 + $0x17] sm:$0xff]
        %v802 = vlaneseq
        %v803 = vshrl.u32 %v802, 7
        %v804 = vsub.s32 2, %v803
        %v805 = vrot.slane %v781, %v804
        %v806 = vmul.f32 %v800, %v805
        %v807 = vmul.f32 %v801, %v805
        %v808 = vadd.f32 %v798, %v806
        %v809 = vadd.f32 %v799, %v807
        %v810 = vld [vmem:[#allocation2 + $0x8] sm:$0xff]
        %v811 = vld [vmem:[#allocation2 + $0x18] sm:$0xff]
        %v812 = vlaneseq
        %v813 = vshrl.u32 %v812, 7
        %v814 = vsub.s32 3, %v813
        %v815 = vrot.slane %v781, %v814
        %v816 = vmul.f32 %v810, %v815
        %v817 = vmul.f32 %v811, %v815
        %v818 = vadd.f32 %v808, %v816
        %v819 = vadd.f32 %v809, %v817
        %v820 = vld [vmem:[%s6] sm:$0x1]
        %v822 = vlaneseq
        %v823 = vshrl.u32 %v822, 7
        %v824 = vsub.s32 0, %v823
        %v825 = vrot.slane %v820, %v824
        %v827 = vadd.f32 %v818, %v825
        %v828 = vadd.f32 %v819, %v825
        %v829 = vxor.u32 %v827, 2147483648
        %v830 = vxor.u32 %v828, 2147483648
        %v831 = vmul.f32 %v829, 1.442695
        %v832 = vpow.pop %v831
        %v833 = vmul.f32 %v830, 1.442695
        %v834 = vpow.pop %v833
        %v835 = vadd.f32 %v832, 1.0
        %v836 = vadd.f32 %v834, 1.0
        %v837 = vrcp.pop %v835
        %v838 = vmul.f32 1.0, %v837
        %v839 = vrcp.pop %v836
        %v840 = vmul.f32 1.0, %v839
        %v841 = vmul.f32 %v827, %v838
        %v842 = vmul.f32 %v828, %v840
        %v843 = vld [vmem:[#allocation2 + $0xd] sm:$0x7]
        %v844 = vld [vmem:[#allocation2 + $0x1d] sm:$0x7]
        %845 = vst [vmem:[#allocation2 + $0x5] sm:$0x7] %v843
        %846 = vst [vmem:[#allocation2 + $0x15] sm:$0x7] %v844
        %v847 = vpack.c.bf16 %v842, %v841
        %v848 = vld [vmem:[#allocation11] sm:$0xf]
        %v849 = vld [vmem:[#allocation11 + $0x4] sm:$0xf]
        %v850 = vld [vmem:[#allocation11 + $0x8] sm:$0xf]
        %v851 = vld [vmem:[#allocation11 + $0xc] sm:$0xf]
        %v852 = vld [vmem:[#allocation11 + $0x10] sm:$0xf]
        %v853 = vld [vmem:[#allocation11 + $0x14] sm:$0xf]
        %v854 = vld [vmem:[#allocation11 + $0x18] sm:$0xf]
        %v855 = vld [vmem:[#allocation11 + $0x1c] sm:$0xf]
        %v856 = vld [vmem:[#allocation11 + $0x20] sm:$0xf]
        %v857 = vld [vmem:[#allocation11 + $0x24] sm:$0xf]
        %v858 = vld [vmem:[#allocation11 + $0x28] sm:$0xf]
        %v859 = vld [vmem:[#allocation11 + $0x2c] sm:$0xf]
        %v860 = vld [vmem:[#allocation11 + $0x30] sm:$0xf]
        %v861 = vld [vmem:[#allocation11 + $0x34] sm:$0xf]
        %v862 = vld [vmem:[#allocation11 + $0x38] sm:$0xf]
        %v863 = vld [vmem:[#allocation11 + $0x3c] sm:$0xf]
        %v864 = vld [vmem:[%s8] sm:$0x1]
        %v866 = vlaneseq
        %v867 = vshrl.u32 %v866, 7
        %v868 = vsub.s32 0, %v867
        %v869 = vrot.slane %v864, %v868
        %v887 = vunpack.c.l.b16 %v848
        %v888 = vunpack.c.l.b16 %v849
        %v889 = vunpack.c.l.b16 %v850
        %v890 = vunpack.c.l.b16 %v851
        %v891 = vunpack.c.l.b16 %v852
        %v892 = vunpack.c.l.b16 %v853
        %v893 = vunpack.c.l.b16 %v854
        %v894 = vunpack.c.l.b16 %v855
        %v895 = vunpack.c.l.b16 %v856
        %v896 = vunpack.c.l.b16 %v857
        %v897 = vunpack.c.l.b16 %v858
        %v898 = vunpack.c.l.b16 %v859
        %v899 = vunpack.c.l.b16 %v860
        %v900 = vunpack.c.l.b16 %v861
        %v901 = vunpack.c.l.b16 %v862
        %v902 = vunpack.c.l.b16 %v863
        %v903 = vpack.c.b16 %v888, %v887
        %v904 = vpack.c.b16 %v890, %v889
        %v905 = vpack.c.b16 %v892, %v891
        %v906 = vpack.c.b16 %v894, %v893
        %v907 = vpack.c.b16 %v896, %v895
        %v908 = vpack.c.b16 %v898, %v897
        %v909 = vpack.c.b16 %v900, %v899
        %v910 = vpack.c.b16 %v902, %v901
        %919 = vmatprep.subr.bf16.mxu0 0
        %920 = vmatpush1.bf16.msra.mxu0 %v910
        %921 = vmatprep.subr.bf16.mxu0 0
        %922 = vmatpush1.bf16.msra.mxu0 %v909
        %923 = vmatprep.subr.bf16.mxu0 0
        %924 = vmatpush1.bf16.msra.mxu0 %v908
        %925 = vmatprep.subr.bf16.mxu0 0
        %926 = vmatpush1.bf16.msra.mxu0 %v907
        %927 = vmatprep.subr.bf16.mxu0 0
        %928 = vmatpush1.bf16.msra.mxu0 %v906
        %929 = vmatprep.subr.bf16.mxu0 0
        %930 = vmatpush1.bf16.msra.mxu0 %v905
        %931 = vmatprep.subr.bf16.mxu0 0
        %932 = vmatpush1.bf16.msra.mxu0 %v904
        %933 = vmatprep.subr.bf16.mxu0 0
        %934 = vmatpush1.bf16.msra.mxu0 %v903
        %935 = vmatprep.subr.bf16.mxu0 0
        %936 = vmatpush2.bf16.msra.mxu0 0
        %937 = vmatprep.subr.bf16.mxu0 0
        %938 = vmatpush2.bf16.msra.mxu0 0
        %939 = vmatprep.subr.bf16.mxu0 0
        %940 = vmatpush2.bf16.msra.mxu0 0
        %941 = vmatprep.subr.bf16.mxu0 0
        %942 = vmatpush2.bf16.msra.mxu0 0
        %943 = vmatprep.subr.bf16.mxu0 0
        %944 = vmatpush2.bf16.msra.mxu0 0
        %945 = vmatprep.subr.bf16.mxu0 0
        %946 = vmatpush2.bf16.msra.mxu0 0
        %947 = vmatprep.subr.bf16.mxu0 0
        %948 = vmatpush2.bf16.msra.mxu0 0
        %949 = vmatprep.subr.bf16.mxu0 0
        %950 = vmatpush2.bf16.msra.mxu0 0
        %951 = vmatprep.mubr.bf16.mxu0 0
        %952 = vmatmul.mubr.bf16.gmra.mxu0 %v847
        %v953 = vpop.f32.mrf.mxu0
        %v954 = vadd.f32 %v869, %v953
        %v955 = vpop.f32.mrf.mxu0
        %v956 = vpop.f32.mrf.mxu0
        %v957 = vadd.f32 %v869, %v956
        %v958 = vpop.f32.mrf.mxu0
        %959 = vdwg.mxu0
        %v960 = vld [vmem:[%s9] sm:$0x1]
        %961 = vst [vmem:[#allocation3 + $0x8] sm:$0xff] %v954
        %962 = vst [vmem:[#allocation3 + $0x18] sm:$0xff] %v957
        %v963 = vld [vmem:[#allocation3 + $0x8] sm:$0x1]
        %v964 = vld [vmem:[#allocation3 + $0x18] sm:$0x1]
        %v965 = vld [vmem:[#allocation4] sm:$0x3]
        %v967 = vlaneseq
        %v968 = vshrl.u32 %v967, 7
        %v969 = vsub.s32 0, %v968
        %v970 = vrot.slane %v960, %v969
        %v972 = vmul.f32 %v965, %v970
        %v975 = vunpack.c.l.s4 1966171168
        %v976 = vunpack.c.0.s8 %v975
        %v977 = vlaneseq
        %v978 = vshrl.u32 %v977, 7
        %v979 = vsub.s32 %v976, %v978
        %v980 = vrot.slane %v972, %v979
        %v981 = vcombine.high %v980, %v980
        %v983 = vunpack.c.l.s4 1966171168
        %v984 = vunpack.c.0.s8 %v983
        %v985 = vlaneseq
        %v986 = vshrl.u32 %v985, 7
        %v987 = vsub.s32 %v984, %v986
        %v988 = vrot.slane %v980, %v987
        %v990 = vunpack.c.l.s4 1966171168
        %v991 = vunpack.c.0.s8 %v990
        %v992 = vlaneseq
        %v993 = vshrl.u32 %v992, 7
        %v994 = vsub.s32 %v991, %v993
        %v995 = vrot.slane %v981, %v994
        %v998 = vadd.f32 %v963, %v988
        %v999 = vadd.f32 %v964, %v995
        %1000 = vst [vmem:[#allocation3 + $0x8] sm:$0x1] %v998
        %1001 = vst [vmem:[#allocation3 + $0x18] sm:$0x1] %v999
        %v1002 = vld [vmem:[#allocation3 + $0x7] sm:$0xff]
        %v1003 = vld [vmem:[#allocation3 + $0x17] sm:$0xff]
        %v1004 = vld [vmem:[#allocation3 + $0x8] sm:$0xff]
        %v1005 = vld [vmem:[#allocation3 + $0x18] sm:$0xff]
        %v1006 = vmul.f32 %v970, %v1002
        %v1007 = vmul.f32 %v970, %v1003
        %v1008 = vadd.f32 %v1004, %v1006
        %v1009 = vadd.f32 %v1005, %v1007
        %1010 = vst [vmem:[#allocation3 + $0x8] sm:$0xff] %v1008
        %1011 = vst [vmem:[#allocation3 + $0x18] sm:$0xff] %v1009
        %v1012 = vmul.f32 %v960, %v960
        %v1013 = vld [vmem:[#allocation3 + $0x6] sm:$0xff]
        %v1014 = vld [vmem:[#allocation3 + $0x16] sm:$0xff]
        %v1015 = vld [vmem:[#allocation3 + $0x8] sm:$0xff]
        %v1016 = vld [vmem:[#allocation3 + $0x18] sm:$0xff]
        %v1018 = vlaneseq
        %v1019 = vshrl.u32 %v1018, 7
        %v1020 = vsub.s32 0, %v1019
        %v1021 = vrot.slane %v1012, %v1020
        %v1023 = vmul.f32 %v1021, %v1013
        %v1024 = vmul.f32 %v1021, %v1014
        %v1025 = vadd.f32 %v1015, %v1023
        %v1026 = vadd.f32 %v1016, %v1024
        %1027 = vst [vmem:[#allocation3 + $0x8] sm:$0xff] %v1025
        %1028 = vst [vmem:[#allocation3 + $0x18] sm:$0xff] %v1026
        %v1029 = vmul.f32 %v1012, %v1012
        %v1030 = vld [vmem:[#allocation3 + $0x4] sm:$0xff]
        %v1031 = vld [vmem:[#allocation3 + $0x14] sm:$0xff]
        %v1032 = vld [vmem:[#allocation3 + $0x8] sm:$0xff]
        %v1033 = vld [vmem:[#allocation3 + $0x18] sm:$0xff]
        %v1035 = vlaneseq
        %v1036 = vshrl.u32 %v1035, 7
        %v1037 = vsub.s32 0, %v1036
        %v1038 = vrot.slane %v1029, %v1037
        %v1040 = vmul.f32 %v1038, %v1030
        %v1041 = vmul.f32 %v1038, %v1031
        %v1042 = vadd.f32 %v1032, %v1040
        %v1043 = vadd.f32 %v1033, %v1041
        %1044 = vst [vmem:[#allocation3 + $0x8] sm:$0xff] %v1042
        %1045 = vst [vmem:[#allocation3 + $0x18] sm:$0xff] %v1043
        %v1046 = vld [vmem:[#allocation3 + $0x8] sm:$0xff]
        %v1047 = vld [vmem:[#allocation3 + $0x18] sm:$0xff]
        %v1050 = vrot.slane %v1047, 7
        %1053 = vst [vmem:[#allocation4 - $0x7] sm:$0x80] %v1046
        %1054 = vst [vmem:[#allocation4 + $0x1] sm:$0x1] %v1050
        %1055 = vadd.xlane.f32.xlu0 %v1046
        %v1056 = vpop.xlane.xlu0 %1055
        %1057 = vadd.xlane.f32.xlu0 %v1047
        %v1058 = vpop.xlane.xlu0 %1057
        %v1059 = vld [vmem:[%s10] sm:$0x1]
        %v1061 = vlaneseq
        %v1062 = vshrl.u32 %v1061, 7
        %v1063 = vsub.s32 0, %v1062
        %v1064 = vrot.slane %v1059, %v1063
        %v1066 = vadd.f32 %v1056, %v1064
        %v1067 = vadd.f32 %v1058, %v1064
        %v1068 = vmul.f32 %v1066, %v841
        %v1069 = vmul.f32 %v1067, %v842
        %v1070 = vxor.u32 %v773, 2147483648
        %v1071 = vxor.u32 %v776, 2147483648
        %v1072 = vmul.f32 %v1070, 1.442695
        %v1073 = vpow.pop %v1072
        %v1074 = vmul.f32 %v1071, 1.442695
        %v1075 = vpow.pop %v1074
        %v1076 = vadd.f32 %v1073, 1.0
        %v1077 = vadd.f32 %v1075, 1.0
        %v1078 = vrcp.pop %v1076
        %v1079 = vmul.f32 1.0, %v1078
        %v1080 = vrcp.pop %v1077
        %v1081 = vmul.f32 1.0, %v1080
        %v1082 = vmul.f32 %v773, %v1079
        %v1083 = vmul.f32 %v776, %v1081
        %v1084 = vmul.f32 %v1068, %v1082
        %v1085 = vmul.f32 %v1069, %v1083
        %v1086 = vpack.c.bf16 %v1085, %v1084
        %v1087 = vld [vmem:[#allocation13] sm:$0xf]
        %v1088 = vld [vmem:[#allocation13 + $0x4] sm:$0xf]
        %v1089 = vld [vmem:[#allocation13 + $0x8] sm:$0xf]
        %v1090 = vld [vmem:[#allocation13 + $0xc] sm:$0xf]
        %v1091 = vld [vmem:[#allocation13 + $0x10] sm:$0xf]
        %v1092 = vld [vmem:[#allocation13 + $0x14] sm:$0xf]
        %v1093 = vld [vmem:[#allocation13 + $0x18] sm:$0xf]
        %v1094 = vld [vmem:[#allocation13 + $0x1c] sm:$0xf]
        %v1095 = vld [vmem:[#allocation13 + $0x20] sm:$0xf]
        %v1096 = vld [vmem:[#allocation13 + $0x24] sm:$0xf]
        %v1097 = vld [vmem:[#allocation13 + $0x28] sm:$0xf]
        %v1098 = vld [vmem:[#allocation13 + $0x2c] sm:$0xf]
        %v1099 = vld [vmem:[#allocation13 + $0x30] sm:$0xf]
        %v1100 = vld [vmem:[#allocation13 + $0x34] sm:$0xf]
        %v1101 = vld [vmem:[#allocation13 + $0x38] sm:$0xf]
        %v1102 = vld [vmem:[#allocation13 + $0x3c] sm:$0xf]
        %v1103 = vld [vmem:[%s12] sm:$0x1]
        %v1105 = vlaneseq
        %v1106 = vshrl.u32 %v1105, 7
        %v1107 = vsub.s32 0, %v1106
        %v1108 = vrot.slane %v1103, %v1107
        %v1126 = vunpack.c.l.b16 %v1087
        %v1127 = vunpack.c.l.b16 %v1088
        %v1128 = vunpack.c.l.b16 %v1089
        %v1129 = vunpack.c.l.b16 %v1090
        %v1130 = vunpack.c.l.b16 %v1091
        %v1131 = vunpack.c.l.b16 %v1092
        %v1132 = vunpack.c.l.b16 %v1093
        %v1133 = vunpack.c.l.b16 %v1094
        %v1134 = vunpack.c.l.b16 %v1095
        %v1135 = vunpack.c.l.b16 %v1096
        %v1136 = vunpack.c.l.b16 %v1097
        %v1137 = vunpack.c.l.b16 %v1098
        %v1138 = vunpack.c.l.b16 %v1099
        %v1139 = vunpack.c.l.b16 %v1100
        %v1140 = vunpack.c.l.b16 %v1101
        %v1141 = vunpack.c.l.b16 %v1102
        %v1142 = vpack.c.b16 %v1127, %v1126
        %v1143 = vpack.c.b16 %v1129, %v1128
        %v1144 = vpack.c.b16 %v1131, %v1130
        %v1145 = vpack.c.b16 %v1133, %v1132
        %v1146 = vpack.c.b16 %v1135, %v1134
        %v1147 = vpack.c.b16 %v1137, %v1136
        %v1148 = vpack.c.b16 %v1139, %v1138
        %v1149 = vpack.c.b16 %v1141, %v1140
        %1158 = vmatprep.subr.bf16.mxu0 0
        %1159 = vmatpush1.bf16.msra.mxu0 %v1149
        %1160 = vmatprep.subr.bf16.mxu0 0
        %1161 = vmatpush1.bf16.msra.mxu0 %v1148
        %1162 = vmatprep.subr.bf16.mxu0 0
        %1163 = vmatpush1.bf16.msra.mxu0 %v1147
        %1164 = vmatprep.subr.bf16.mxu0 0
        %1165 = vmatpush1.bf16.msra.mxu0 %v1146
        %1166 = vmatprep.subr.bf16.mxu0 0
        %1167 = vmatpush1.bf16.msra.mxu0 %v1145
        %1168 = vmatprep.subr.bf16.mxu0 0
        %1169 = vmatpush1.bf16.msra.mxu0 %v1144
        %1170 = vmatprep.subr.bf16.mxu0 0
        %1171 = vmatpush1.bf16.msra.mxu0 %v1143
        %1172 = vmatprep.subr.bf16.mxu0 0
        %1173 = vmatpush1.bf16.msra.mxu0 %v1142
        %1174 = vmatprep.subr.bf16.mxu0 0
        %1175 = vmatpush2.bf16.msra.mxu0 0
        %1176 = vmatprep.subr.bf16.mxu0 0
        %1177 = vmatpush2.bf16.msra.mxu0 0
        %1178 = vmatprep.subr.bf16.mxu0 0
        %1179 = vmatpush2.bf16.msra.mxu0 0
        %1180 = vmatprep.subr.bf16.mxu0 0
        %1181 = vmatpush2.bf16.msra.mxu0 0
        %1182 = vmatprep.subr.bf16.mxu0 0
        %1183 = vmatpush2.bf16.msra.mxu0 0
        %1184 = vmatprep.subr.bf16.mxu0 0
        %1185 = vmatpush2.bf16.msra.mxu0 0
        %1186 = vmatprep.subr.bf16.mxu0 0
        %1187 = vmatpush2.bf16.msra.mxu0 0
        %1188 = vmatprep.subr.bf16.mxu0 0
        %1189 = vmatpush2.bf16.msra.mxu0 0
        %1190 = vmatprep.mubr.bf16.mxu0 0
        %1191 = vmatmul.mubr.bf16.gmra.mxu0 %v1086
        %v1192 = vpop.f32.mrf.mxu0
        %v1193 = vadd.f32 %v1108, %v1192
        %v1194 = vpop.f32.mrf.mxu0
        %v1195 = vpop.f32.mrf.mxu0
        %v1196 = vadd.f32 %v1108, %v1195
        %v1197 = vpop.f32.mrf.mxu0
        %1198 = vdwg.mxu0
        %1199 = vst [vmem:[%s534] sm:$0xff] %v1193
        %1200 = vst [vmem:[%s534 + $0x8] sm:$0xff] %v1196
        %s1201 = sand.u32 %s334, 1
        %s1202 = scalar_lea.sflag [#allocation7], %s1201
        %s1203 = sand.u32 %s334, 1
        %s1204 = smul.addr %s1203, 16
        %s1205 = scalar_lea.vmem [#allocation14], %s1204
        // Predicated region
        $region97: #{tpu_custom_call.1} parent=71 // pred_check
          %p1206 = pneg %p344
        $region98: #{tpu_custom_call.1} parent=71 // pred_check_branch
          %1208 = sbr.rel (%p1206) target = $region100
        $region99: #{tpu_custom_call.1} parent=71 // pred_region
          %s1209 = smul.u32 2, %s36
          %s1211 = ssub.s32 256, 256
          %1212 = vsyncadd %s1202, %s1211
          %s1213 = smul.addr %s1209, 2
          %s1214 = sadd.s32 %s37, %s1213
          %s1215 = smul.addr %s1214, 128
          %s1216 = scalar_lea.hbm %s13, %s1215
          %s1217 = sshll.u32 %s1205, 4
          %s1218 = int_to_ptr.vmem [resolvable:$true] %s1217
          %1223 = dma.vmem_to_hbm [thread:$0]  %s1218, 256, %s1216, %s1202, 128, 256, 8
        $region100: #{tpu_custom_call.1} parent=71 // pred_fallthru
          _
      $region72: #{tpu_custom_call.1} parent=5 // pred_fallthru
        _
      %p1224 = scmp.le.s32.totalorder 2, %s27
      // Predicated region
      $region101: #{tpu_custom_call.1} parent=5 // pred_check
        %p1225 = pneg %p1224
      $region102: #{tpu_custom_call.1} parent=5 // pred_check_branch
        %1227 = sbr.rel (%p1225) target = $region104
      $region103: #{tpu_custom_call.1} parent=5 // pred_region
        %s1228 = ssub.s32 %s27, 2
        // Predicated region
        $region105: #{tpu_custom_call.1} parent=103 // pred_check
          %p1229 = pneg %p350
        $region106: #{tpu_custom_call.1} parent=103 // pred_check_branch
          %1231 = sbr.rel (%p1229) target = $region108
        $region107: #{tpu_custom_call.1} parent=103 // pred_region
          %s1232 = sand.u32 %s335, 1
          %s1233 = scalar_lea.sflag [#allocation7], %s1232
          %s1234 = sand.u32 %s335, 1
          %s1235 = smul.addr %s1234, 16
          %s1236 = scalar_lea.vmem [#allocation14], %s1235
          %1237 = dma.done %s1233, 256
        $region108: #{tpu_custom_call.1} parent=103 // pred_fallthru
          _
      $region104: #{tpu_custom_call.1} parent=5 // pred_fallthru
        _
    $region6: #{tpu_custom_call.1} parent=1 // loop_footer
      %s31 = sadd.s32 1, %s27
    $region7: #{tpu_custom_call.1} parent=1 // loop_footer_branch
      %26 = sbr.rel target = $region3
    $region8: #{tpu_custom_call.1} parent=1 // loop_exit
      _
    %1238 = vsyncpa [#allocation6], 1
    %s1239 = scalar_lea.sflag [#allocation6], 1
    %1240 = vsyncpa %s1239, 1
    %1241 = vsyncpa [#allocation9], 1
    %1242 = vsyncpa [#allocation12], 1
    %1243 = vsyncpa [#allocation7], 1
    %s1244 = scalar_lea.sflag [#allocation7], 1
    %1245 = vsyncpa %s1244, 1

// kernel: tpu_custom_call.1
$region0: #{tpu_custom_call.1}
  #allocation0 [shape = 'u32[]', space=smem, size = 0x4, offset = 0x4, fixed_abs, tag = 'smem constant byte address 0x4 - core index']
  #allocation1 [shape = 'u32[144,128]{1,0:T(1,128)}', space=vmem, size = 0x12000, scoped, tag = 'internal scratch']
  #allocation2 [shape = 'f32[2,16,128]{2,1,0:T(8,128)}', space=vmem, size = 0x4000, scoped, tag = 'scratch operand']
  #allocation3 [shape = 'f32[2,16,128]{2,1,0:T(8,128)}', space=vmem, size = 0x4000, scoped, tag = 'scratch operand']
  #allocation4 [shape = 'f32[2,128]{1,0:T(2,128)}', space=vmem, size = 0x400, scoped, tag = 'scratch operand']
  %s0 = inlined_call_operand.hbm [shape: bf16[2,16,128], index: 0, kind: input, shape index: {}]
  %s1 = inlined_call_operand.hbm [shape: bf16[128,128], index: 1, kind: input, shape index: {}]
  %s2 = inlined_call_operand.vmem [shape: f32[1,128], index: 2, kind: input, shape index: {}]
  %s3 = inlined_call_operand.hbm [shape: bf16[128,128], index: 3, kind: input, shape index: {}]
  %s4 = inlined_call_operand.vmem [shape: f32[1,128], index: 4, kind: input, shape index: {}]
  %s5 = inlined_call_operand.vmem [shape: f32[4,128], index: 5, kind: input, shape index: {}]
  %s6 = inlined_call_operand.vmem [shape: f32[1,128], index: 6, kind: input, shape index: {}]
  %s7 = inlined_call_operand.hbm [shape: bf16[128,128], index: 7, kind: input, shape index: {}]
  %s8 = inlined_call_operand.vmem [shape: f32[1,128], index: 8, kind: input, shape index: {}]
  %s9 = inlined_call_operand.vmem [shape: f32[1,128], index: 9, kind: input, shape index: {}]
  %s10 = inlined_call_operand.vmem [shape: f32[1,128], index: 10, kind: input, shape index: {}]
  %s11 = inlined_call_operand.hbm [shape: bf16[128,128], index: 11, kind: input, shape index: {}]
  %s12 = inlined_call_operand.vmem [shape: f32[1,128], index: 12, kind: input, shape index: {}]
  %s13 = inlined_call_operand.hbm [shape: f32[2,16,128], index: 13, kind: output, shape index: {}]
  %s14 = sld [smem:[#allocation0]]
  $region109: #{tpu_custom_call.1} parent=0
    _
  %s16 = ssub.s32 1, %s14
  %s17 = scalar_select 0, %s16, %s14
  $region1: #{tpu_custom_call.1} parent=0
    #allocation5 [shape = 'u8[8192]{0}', space=vmem, size = 0x2000, scoped, tag = 'input window, operand 0']
    #allocation6 [shape = 's32[2]{0}', space=sflag, size = 0x8, scoped, tag = 'scoped memory for tpu_custom_call.1']
    #allocation7 [shape = 's32[2]{0}', space=sflag, size = 0x8, scoped, tag = 'scoped memory for tpu_custom_call.1']
    #allocation8 [shape = 'u8[32768]{0}', space=vmem, size = 0x8000, scoped, tag = 'input window, operand 1, single buffered']
    #allocation9 [shape = 's32[1]{0}', space=sflag, size = 0x4, scoped, tag = 'scoped memory for tpu_custom_call.1']
    #allocation10 [shape = 'u8[32768]{0}', space=vmem, size = 0x8000, scoped, tag = 'input window, operand 3, single buffered']
    #allocation11 [shape = 'u8[32768]{0}', space=vmem, size = 0x8000, scoped, tag = 'input window, operand 7, single buffered']
    #allocation12 [shape = 's32[1]{0}', space=sflag, size = 0x4, scoped, tag = 'scoped memory for tpu_custom_call.1']
    #allocation13 [shape = 'u8[32768]{0}', space=vmem, size = 0x8000, scoped, tag = 'input window, operand 11, single buffered']
    #allocation14 [shape = 'u8[16384]{0}', space=vmem, size = 0x4000, scoped, tag = 'output window, operand 0']
    %18 = vsyncpa [#allocation6], 0
    %s19 = scalar_lea.sflag [#allocation6], 1
    %20 = vsyncpa %s19, 0
    %21 = vsyncpa [#allocation9], 0
    %22 = vsyncpa [#allocation12], 0
    %23 = vsyncpa [#allocation7], 0
    %s24 = scalar_lea.sflag [#allocation7], 1
    %25 = vsyncpa %s24, 0
    loop: start=0, step=1, limit=4
    $region2: #{tpu_custom_call.1} parent=1 // loop_pre_header
      _
    $region3: #{tpu_custom_call.1} parent=1 // loop_header
      %s27 = sphi 0, %s31
      %p28 = scmp.ge.s32.totalorder %s27, 4
      %s34 = sphi 0, %s46
      %s35 = sphi 0, %s42
      %s36 = sphi 0, %s34
      %s37 = sphi 0, %s35
      %s38 = sphi 0, %s36
      %s39 = sphi 0, %s37
      %s51 = sphi 0, %s53
      %s54 = sphi 0, %s51
      %s55 = sphi 0, %s54
      %s71 = sphi 0, %s55
      %s75 = sphi 0, %s75
      %s77 = sphi 0, %s75
      %s78 = sphi 0, %s77
      %s92 = sphi 0, %s78
      %s96 = sphi 0, %s96
      %s98 = sphi 0, %s96
      %s99 = sphi 0, %s98
      %s113 = sphi 0, %s99
      %s117 = sphi 0, %s117
      %s119 = sphi 0, %s117
      %s120 = sphi 0, %s119
      %s134 = sphi 0, %s120
      %s138 = sphi 0, %s138
      %s140 = sphi 0, %s138
      %s141 = sphi 0, %s140
      %s155 = sphi 0, %s141
      %s159 = sphi 0, %s159
      %s161 = sphi 0, %s159
      %s162 = sphi 0, %s161
      %s176 = sphi 0, %s162
      %s180 = sphi 0, %s180
      %s182 = sphi 0, %s180
      %s183 = sphi 0, %s182
      %s197 = sphi 0, %s183
      %s201 = sphi 0, %s201
      %s203 = sphi 0, %s201
      %s204 = sphi 0, %s203
      %s218 = sphi 0, %s204
      %s222 = sphi 0, %s222
      %s224 = sphi 0, %s222
      %s225 = sphi 0, %s224
      %s239 = sphi 0, %s225
      %s243 = sphi 0, %s243
      %s245 = sphi 0, %s243
      %s246 = sphi 0, %s245
      %s260 = sphi 0, %s246
      %s264 = sphi 0, %s264
      %s266 = sphi 0, %s264
      %s267 = sphi 0, %s266
      %s281 = sphi 0, %s267
      %s285 = sphi 0, %s285
      %s287 = sphi 0, %s285
      %s288 = sphi 0, %s287
      %s302 = sphi 0, %s288
      %s306 = sphi 0, %s306
      %s308 = sphi 0, %s306
      %s309 = sphi 0, %s308
      %s323 = sphi 0, %s309
      %s331 = sphi 0, %s333
      %s334 = sphi 0, %s331
      %s335 = sphi 0, %s334
      %s351 = sphi 0, %s335
    $region4: #{tpu_custom_call.1} parent=1 // loop_header_branch
      %30 = sbr.rel (%p28) target = $region8
    $region5: #{tpu_custom_call.1} parent=1 // loop_body
      %s32 = ssub.s32 %s27, 1
      %s33 = ssub.s32 %s27, 2
      %s40 = sadd.s32 1, %s35
      %p41 = scmp.ge.s32.totalorder %s40, 2
      %s42 = scalar_select %p41, 0, %s40
      %s43 = sadd.s32 1, %s34
      %s44 = scalar_select %p41, %s43, %s34
      %p45 = scmp.ge.s32.totalorder %s44, 1
      %s46 = scalar_select %p45, 0, %s44
      %s47 = ssub.s32 %s34, %s46
      %s48 = ssub.s32 %s35, %s42
      %s49 = sor.u32 %s47, %s48
      %p50 = scmp.eq.s32.totalorder %s49, 0
      %s52 = sadd.s32 %s51, 1
      %s53 = scalar_select %p50, %s51, %s52
      %p56 = pneg %p50
      %p57 = scmp.eq.s32.totalorder %s27, 1
      %p58 = por %p56, %p57
      %p59 = scmp.ne.s32.totalorder %s51, %s54
      %p60 = scmp.eq.s32.totalorder %s27, 0
      %p61 = por %p59, %p60
      %p62 = scmp.ne.s32.totalorder %s51, %s54
      %p63 = scmp.eq.s32.totalorder %s32, 1
      %p64 = por %p62, %p63
      %p65 = scmp.ne.s32.totalorder %s54, %s55
      %p66 = scmp.eq.s32.totalorder %s32, 0
      %p67 = por %p65, %p66
      %p68 = scmp.ne.s32.totalorder %s54, %s55
      %p69 = scmp.eq.s32.totalorder %s33, 1
      %p70 = por %p68, %p69
      %p72 = scmp.ne.s32.totalorder %s55, %s71
      %p73 = scmp.eq.s32.totalorder %s33, 0
      %p74 = por %p72, %p73
      %s76 = sadd.s32 %s75, 1
      %p79 = scmp.eq.s32.totalorder %s27, 1
      %p80 = scmp.ne.s32.totalorder %s75, %s77
      %p81 = scmp.eq.s32.totalorder %s27, 0
      %p82 = por %p80, %p81
      %p83 = scmp.ne.s32.totalorder %s75, %s77
      %p84 = scmp.eq.s32.totalorder %s32, 1
      %p85 = por %p83, %p84
      %p86 = scmp.ne.s32.totalorder %s77, %s78
      %p87 = scmp.eq.s32.totalorder %s32, 0
      %p88 = por %p86, %p87
      %p89 = scmp.ne.s32.totalorder %s77, %s78
      %p90 = scmp.eq.s32.totalorder %s33, 1
      %p91 = por %p89, %p90
      %p93 = scmp.ne.s32.totalorder %s78, %s92
      %p94 = scmp.eq.s32.totalorder %s33, 0
      %p95 = por %p93, %p94
      %s97 = sadd.s32 %s96, 1
      %p100 = scmp.eq.s32.totalorder %s27, 1
      %p101 = scmp.ne.s32.totalorder %s96, %s98
      %p102 = scmp.eq.s32.totalorder %s27, 0
      %p103 = por %p101, %p102
      %p104 = scmp.ne.s32.totalorder %s96, %s98
      %p105 = scmp.eq.s32.totalorder %s32, 1
      %p106 = por %p104, %p105
      %p107 = scmp.ne.s32.totalorder %s98, %s99
      %p108 = scmp.eq.s32.totalorder %s32, 0
      %p109 = por %p107, %p108
      %p110 = scmp.ne.s32.totalorder %s98, %s99
      %p111 = scmp.eq.s32.totalorder %s33, 1
      %p112 = por %p110, %p111
      %p114 = scmp.ne.s32.totalorder %s99, %s113
      %p115 = scmp.eq.s32.totalorder %s33, 0
      %p116 = por %p114, %p115
      %s118 = sadd.s32 %s117, 1
      %p121 = scmp.eq.s32.totalorder %s27, 1
      %p122 = scmp.ne.s32.totalorder %s117, %s119
      %p123 = scmp.eq.s32.totalorder %s27, 0
      %p124 = por %p122, %p123
      %p125 = scmp.ne.s32.totalorder %s117, %s119
      %p126 = scmp.eq.s32.totalorder %s32, 1
      %p127 = por %p125, %p126
      %p128 = scmp.ne.s32.totalorder %s119, %s120
      %p129 = scmp.eq.s32.totalorder %s32, 0
      %p130 = por %p128, %p129
      %p131 = scmp.ne.s32.totalorder %s119, %s120
      %p132 = scmp.eq.s32.totalorder %s33, 1
      %p133 = por %p131, %p132
      %p135 = scmp.ne.s32.totalorder %s120, %s134
      %p136 = scmp.eq.s32.totalorder %s33, 0
      %p137 = por %p135, %p136
      %s139 = sadd.s32 %s138, 1
      %p142 = scmp.eq.s32.totalorder %s27, 1
      %p143 = scmp.ne.s32.totalorder %s138, %s140
      %p144 = scmp.eq.s32.totalorder %s27, 0
      %p145 = por %p143, %p144
      %p146 = scmp.ne.s32.totalorder %s138, %s140
      %p147 = scmp.eq.s32.totalorder %s32, 1
      %p148 = por %p146, %p147
      %p149 = scmp.ne.s32.totalorder %s140, %s141
      %p150 = scmp.eq.s32.totalorder %s32, 0
      %p151 = por %p149, %p150
      %p152 = scmp.ne.s32.totalorder %s140, %s141
      %p153 = scmp.eq.s32.totalorder %s33, 1
      %p154 = por %p152, %p153
      %p156 = scmp.ne.s32.totalorder %s141, %s155
      %p157 = scmp.eq.s32.totalorder %s33, 0
      %p158 = por %p156, %p157
      %s160 = sadd.s32 %s159, 1
      %p163 = scmp.eq.s32.totalorder %s27, 1
      %p164 = scmp.ne.s32.totalorder %s159, %s161
      %p165 = scmp.eq.s32.totalorder %s27, 0
      %p166 = por %p164, %p165
      %p167 = scmp.ne.s32.totalorder %s159, %s161
      %p168 = scmp.eq.s32.totalorder %s32, 1
      %p169 = por %p167, %p168
      %p170 = scmp.ne.s32.totalorder %s161, %s162
      %p171 = scmp.eq.s32.totalorder %s32, 0
      %p172 = por %p170, %p171
      %p173 = scmp.ne.s32.totalorder %s161, %s162
      %p174 = scmp.eq.s32.totalorder %s33, 1
      %p175 = por %p173, %p174
      %p177 = scmp.ne.s32.totalorder %s162, %s176
      %p178 = scmp.eq.s32.totalorder %s33, 0
      %p179 = por %p177, %p178
      %s181 = sadd.s32 %s180, 1
      %p184 = scmp.eq.s32.totalorder %s27, 1
      %p185 = scmp.ne.s32.totalorder %s180, %s182
      %p186 = scmp.eq.s32.totalorder %s27, 0
      %p187 = por %p185, %p186
      %p188 = scmp.ne.s32.totalorder %s180, %s182
      %p189 = scmp.eq.s32.totalorder %s32, 1
      %p190 = por %p188, %p189
      %p191 = scmp.ne.s32.totalorder %s182, %s183
      %p192 = scmp.eq.s32.totalorder %s32, 0
      %p193 = por %p191, %p192
      %p194 = scmp.ne.s32.totalorder %s182, %s183
      %p195 = scmp.eq.s32.totalorder %s33, 1
      %p196 = por %p194, %p195
      %p198 = scmp.ne.s32.totalorder %s183, %s197
      %p199 = scmp.eq.s32.totalorder %s33, 0
      %p200 = por %p198, %p199
      %s202 = sadd.s32 %s201, 1
      %p205 = scmp.eq.s32.totalorder %s27, 1
      %p206 = scmp.ne.s32.totalorder %s201, %s203
      %p207 = scmp.eq.s32.totalorder %s27, 0
      %p208 = por %p206, %p207
      %p209 = scmp.ne.s32.totalorder %s201, %s203
      %p210 = scmp.eq.s32.totalorder %s32, 1
      %p211 = por %p209, %p210
      %p212 = scmp.ne.s32.totalorder %s203, %s204
      %p213 = scmp.eq.s32.totalorder %s32, 0
      %p214 = por %p212, %p213
      %p215 = scmp.ne.s32.totalorder %s203, %s204
      %p216 = scmp.eq.s32.totalorder %s33, 1
      %p217 = por %p215, %p216
      %p219 = scmp.ne.s32.totalorder %s204, %s218
      %p220 = scmp.eq.s32.totalorder %s33, 0
      %p221 = por %p219, %p220
      %s223 = sadd.s32 %s222, 1
      %p226 = scmp.eq.s32.totalorder %s27, 1
      %p227 = scmp.ne.s32.totalorder %s222, %s224
      %p228 = scmp.eq.s32.totalorder %s27, 0
      %p229 = por %p227, %p228
      %p230 = scmp.ne.s32.totalorder %s222, %s224
      %p231 = scmp.eq.s32.totalorder %s32, 1
      %p232 = por %p230, %p231
      %p233 = scmp.ne.s32.totalorder %s224, %s225
      %p234 = scmp.eq.s32.totalorder %s32, 0
      %p235 = por %p233, %p234
      %p236 = scmp.ne.s32.totalorder %s224, %s225
      %p237 = scmp.eq.s32.totalorder %s33, 1
      %p238 = por %p236, %p237
      %p240 = scmp.ne.s32.totalorder %s225, %s239
      %p241 = scmp.eq.s32.totalorder %s33, 0
      %p242 = por %p240, %p241
      %s244 = sadd.s32 %s243, 1
      %p247 = scmp.eq.s32.totalorder %s27, 1
      %p248 = scmp.ne.s32.totalorder %s243, %s245
      %p249 = scmp.eq.s32.totalorder %s27, 0
      %p250 = por %p248, %p249
      %p251 = scmp.ne.s32.totalorder %s243, %s245
      %p252 = scmp.eq.s32.totalorder %s32, 1
      %p253 = por %p251, %p252
      %p254 = scmp.ne.s32.totalorder %s245, %s246
      %p255 = scmp.eq.s32.totalorder %s32, 0
      %p256 = por %p254, %p255
      %p257 = scmp.ne.s32.totalorder %s245, %s246
      %p258 = scmp.eq.s32.totalorder %s33, 1
      %p259 = por %p257, %p258
      %p261 = scmp.ne.s32.totalorder %s246, %s260
      %p262 = scmp.eq.s32.totalorder %s33, 0
      %p263 = por %p261, %p262
      %s265 = sadd.s32 %s264, 1
      %p268 = scmp.eq.s32.totalorder %s27, 1
      %p269 = scmp.ne.s32.totalorder %s264, %s266
      %p270 = scmp.eq.s32.totalorder %s27, 0
      %p271 = por %p269, %p270
      %p272 = scmp.ne.s32.totalorder %s264, %s266
      %p273 = scmp.eq.s32.totalorder %s32, 1
      %p274 = por %p272, %p273
      %p275 = scmp.ne.s32.totalorder %s266, %s267
      %p276 = scmp.eq.s32.totalorder %s32, 0
      %p277 = por %p275, %p276
      %p278 = scmp.ne.s32.totalorder %s266, %s267
      %p279 = scmp.eq.s32.totalorder %s33, 1
      %p280 = por %p278, %p279
      %p282 = scmp.ne.s32.totalorder %s267, %s281
      %p283 = scmp.eq.s32.totalorder %s33, 0
      %p284 = por %p282, %p283
      %s286 = sadd.s32 %s285, 1
      %p289 = scmp.eq.s32.totalorder %s27, 1
      %p290 = scmp.ne.s32.totalorder %s285, %s287
      %p291 = scmp.eq.s32.totalorder %s27, 0
      %p292 = por %p290, %p291
      %p293 = scmp.ne.s32.totalorder %s285, %s287
      %p294 = scmp.eq.s32.totalorder %s32, 1
      %p295 = por %p293, %p294
      %p296 = scmp.ne.s32.totalorder %s287, %s288
      %p297 = scmp.eq.s32.totalorder %s32, 0
      %p298 = por %p296, %p297
      %p299 = scmp.ne.s32.totalorder %s287, %s288
      %p300 = scmp.eq.s32.totalorder %s33, 1
      %p301 = por %p299, %p300
      %p303 = scmp.ne.s32.totalorder %s288, %s302
      %p304 = scmp.eq.s32.totalorder %s33, 0
      %p305 = por %p303, %p304
      %s307 = sadd.s32 %s306, 1
      %p310 = scmp.eq.s32.totalorder %s27, 1
      %p311 = scmp.ne.s32.totalorder %s306, %s308
      %p312 = scmp.eq.s32.totalorder %s27, 0
      %p313 = por %p311, %p312
      %p314 = scmp.ne.s32.totalorder %s306, %s308
      %p315 = scmp.eq.s32.totalorder %s32, 1
      %p316 = por %p314, %p315
      %p317 = scmp.ne.s32.totalorder %s308, %s309
      %p318 = scmp.eq.s32.totalorder %s32, 0
      %p319 = por %p317, %p318
      %p320 = scmp.ne.s32.totalorder %s308, %s309
      %p321 = scmp.eq.s32.totalorder %s33, 1
      %p322 = por %p320, %p321
      %p324 = scmp.ne.s32.totalorder %s309, %s323
      %p325 = scmp.eq.s32.totalorder %s33, 0
      %p326 = por %p324, %p325
      %s327 = ssub.s32 %s34, %s46
      %s328 = ssub.s32 %s35, %s42
      %s329 = sor.u32 %s327, %s328
      %p330 = scmp.eq.s32.totalorder %s329, 0
      %s332 = sadd.s32 %s331, 1
      %s333 = scalar_select %p330, %s331, %s332
      %p336 = pneg %p330
      %p337 = scmp.eq.s32.totalorder %s27, 1
      %p338 = por %p336, %p337
      %p339 = scmp.ne.s32.totalorder %s331, %s334
      %p340 = scmp.eq.s32.totalorder %s27, 0
      %p341 = por %p339, %p340
      %p342 = scmp.ne.s32.totalorder %s331, %s334
      %p343 = scmp.eq.s32.totalorder %s32, 1
      %p344 = por %p342, %p343
      %p345 = scmp.ne.s32.totalorder %s334, %s335
      %p346 = scmp.eq.s32.totalorder %s32, 0
      %p347 = por %p345, %p346
      %p348 = scmp.ne.s32.totalorder %s334, %s335
      %p349 = scmp.eq.s32.totalorder %s33, 1
      %p350 = por %p348, %p349
      %p352 = scmp.ne.s32.totalorder %s335, %s351
      %p353 = scmp.eq.s32.totalorder %s33, 0
      %p354 = por %p352, %p353
      %p355 = scmp.le.s32.totalorder 1, %s27
      %p356 = scmp.lt.s32.totalorder %s27, 3
      %p357 = pnand %p355, %p356
      %p358 = pneg %p357
      // Predicated region
      $region9: #{tpu_custom_call.1} parent=5 // pred_check
        _
      $region10: #{tpu_custom_call.1} parent=5 // pred_check_branch
        %360 = sbr.rel (%p357) target = $region12
      $region11: #{tpu_custom_call.1} parent=5 // pred_region
        %s361 = ssub.s32 %s27, 1
        // Predicated region
        $region13: #{tpu_custom_call.1} parent=11 // pred_check
          %p362 = pneg %p88
        $region14: #{tpu_custom_call.1} parent=11 // pred_check_branch
          %364 = sbr.rel (%p362) target = $region16
        $region15: #{tpu_custom_call.1} parent=11 // pred_region
          %s366 = ssub.s32 1024, 1024
          %367 = vsyncadd [#allocation9], %s366
          %s368 = sshll.u32 [#allocation8], 4
          %s369 = int_to_ptr.vmem [resolvable:$true] %s368
          %374 = dma.hbm_to_vmem [thread:$0]  %s1, 1024, %s369, [#allocation9], 64, 64, 4
        $region16: #{tpu_custom_call.1} parent=11 // pred_fallthru
          _
        // Predicated region
        $region17: #{tpu_custom_call.1} parent=11 // pred_check
          %p375 = pneg %p109
        $region18: #{tpu_custom_call.1} parent=11 // pred_check_branch
          %377 = sbr.rel (%p375) target = $region20
        $region19: #{tpu_custom_call.1} parent=11 // pred_region
          _
        $region20: #{tpu_custom_call.1} parent=11 // pred_fallthru
          _
        // Predicated region
        $region21: #{tpu_custom_call.1} parent=11 // pred_check
          %p378 = pneg %p130
        $region22: #{tpu_custom_call.1} parent=11 // pred_check_branch
          %380 = sbr.rel (%p378) target = $region24
        $region23: #{tpu_custom_call.1} parent=11 // pred_region
          %s382 = ssub.s32 1024, 1024
          %383 = vsyncadd [#allocation9], %s382
          %s384 = sshll.u32 [#allocation10], 4
          %s385 = int_to_ptr.vmem [resolvable:$true] %s384
          %390 = dma.hbm_to_vmem [thread:$0]  %s3, 1024, %s385, [#allocation9], 64, 64, 4
        $region24: #{tpu_custom_call.1} parent=11 // pred_fallthru
          _
        // Predicated region
        $region25: #{tpu_custom_call.1} parent=11 // pred_check
          %p391 = pneg %p151
        $region26: #{tpu_custom_call.1} parent=11 // pred_check_branch
          %393 = sbr.rel (%p391) target = $region28
        $region27: #{tpu_custom_call.1} parent=11 // pred_region
          _
        $region28: #{tpu_custom_call.1} parent=11 // pred_fallthru
          _
        // Predicated region
        $region29: #{tpu_custom_call.1} parent=11 // pred_check
          %p394 = pneg %p172
        $region30: #{tpu_custom_call.1} parent=11 // pred_check_branch
          %396 = sbr.rel (%p394) target = $region32
        $region31: #{tpu_custom_call.1} parent=11 // pred_region
          _
        $region32: #{tpu_custom_call.1} parent=11 // pred_fallthru
          _
        // Predicated region
        $region33: #{tpu_custom_call.1} parent=11 // pred_check
          %p397 = pneg %p193
        $region34: #{tpu_custom_call.1} parent=11 // pred_check_branch
          %399 = sbr.rel (%p397) target = $region36
        $region35: #{tpu_custom_call.1} parent=11 // pred_region
          _
        $region36: #{tpu_custom_call.1} parent=11 // pred_fallthru
          _
        // Predicated region
        $region37: #{tpu_custom_call.1} parent=11 // pred_check
          %p400 = pneg %p214
        $region38: #{tpu_custom_call.1} parent=11 // pred_check_branch
          %402 = sbr.rel (%p400) target = $region40
        $region39: #{tpu_custom_call.1} parent=11 // pred_region
          %s404 = ssub.s32 1024, 1024
          %405 = vsyncadd [#allocation12], %s404
          %s406 = sshll.u32 [#allocation11], 4
          %s407 = int_to_ptr.vmem [resolvable:$true] %s406
          %412 = dma.hbm_to_vmem [thread:$0]  %s7, 1024, %s407, [#allocation12], 64, 64, 4
        $region40: #{tpu_custom_call.1} parent=11 // pred_fallthru
          _
        // Predicated region
        $region41: #{tpu_custom_call.1} parent=11 // pred_check
          %p413 = pneg %p235
        $region42: #{tpu_custom_call.1} parent=11 // pred_check_branch
          %415 = sbr.rel (%p413) target = $region44
        $region43: #{tpu_custom_call.1} parent=11 // pred_region
          _
        $region44: #{tpu_custom_call.1} parent=11 // pred_fallthru
          _
        // Predicated region
        $region45: #{tpu_custom_call.1} parent=11 // pred_check
          %p416 = pneg %p256
        $region46: #{tpu_custom_call.1} parent=11 // pred_check_branch
          %418 = sbr.rel (%p416) target = $region48
        $region47: #{tpu_custom_call.1} parent=11 // pred_region
          _
        $region48: #{tpu_custom_call.1} parent=11 // pred_fallthru
          _
        // Predicated region
        $region49: #{tpu_custom_call.1} parent=11 // pred_check
          %p419 = pneg %p277
        $region50: #{tpu_custom_call.1} parent=11 // pred_check_branch
          %421 = sbr.rel (%p419) target = $region52
        $region51: #{tpu_custom_call.1} parent=11 // pred_region
          _
        $region52: #{tpu_custom_call.1} parent=11 // pred_fallthru
          _
        // Predicated region
        $region53: #{tpu_custom_call.1} parent=11 // pred_check
          %p422 = pneg %p298
        $region54: #{tpu_custom_call.1} parent=11 // pred_check_branch
          %424 = sbr.rel (%p422) target = $region56
        $region55: #{tpu_custom_call.1} parent=11 // pred_region
          %s426 = ssub.s32 1024, 1024
          %427 = vsyncadd [#allocation12], %s426
          %s428 = sshll.u32 [#allocation13], 4
          %s429 = int_to_ptr.vmem [resolvable:$true] %s428
          %434 = dma.hbm_to_vmem [thread:$0]  %s11, 1024, %s429, [#allocation12], 64, 64, 4
        $region56: #{tpu_custom_call.1} parent=11 // pred_fallthru
          _
        // Predicated region
        $region57: #{tpu_custom_call.1} parent=11 // pred_check
          %p435 = pneg %p319
        $region58: #{tpu_custom_call.1} parent=11 // pred_check_branch
          %437 = sbr.rel (%p435) target = $region60
        $region59: #{tpu_custom_call.1} parent=11 // pred_region
          _
        $region60: #{tpu_custom_call.1} parent=11 // pred_fallthru
          _
      $region12: #{tpu_custom_call.1} parent=5 // pred_fallthru
        _
      %p438 = scmp.lt.s32.totalorder %s27, 2
      // Predicated region
      $region61: #{tpu_custom_call.1} parent=5 // pred_check
        %p439 = pneg %p438
      $region62: #{tpu_custom_call.1} parent=5 // pred_check_branch
        %441 = sbr.rel (%p439) target = $region64
      $region63: #{tpu_custom_call.1} parent=5 // pred_region
        // Predicated region
        $region65: #{tpu_custom_call.1} parent=63 // pred_check
          %p442 = pneg %p61
        $region66: #{tpu_custom_call.1} parent=63 // pred_check_branch
          %444 = sbr.rel (%p442) target = $region68
        $region67: #{tpu_custom_call.1} parent=63 // pred_region
          %s445 = sand.u32 %s51, 1
          %s446 = scalar_lea.sflag [#allocation6], %s445
          %s447 = sand.u32 %s51, 1
          %s448 = smul.addr %s447, 8
          %s449 = scalar_lea.vmem [#allocation5], %s448
          %s450 = smul.u32 2, %s34
          %s452 = ssub.s32 128, 128
          %453 = vsyncadd %s446, %s452
          %s454 = smul.addr %s450, 2
          %s455 = sadd.s32 %s35, %s454
          %s456 = smul.addr %s455, 64
          %s457 = scalar_lea.hbm %s0, %s456
          %s458 = sshll.u32 %s449, 4
          %s459 = int_to_ptr.vmem [resolvable:$true] %s458
          %464 = dma.hbm_to_vmem [thread:$0]  %s457, 128, %s459, %s446, 128, 64, 4
        $region68: #{tpu_custom_call.1} parent=63 // pred_fallthru
          _
      $region64: #{tpu_custom_call.1} parent=5 // pred_fallthru
        _
      %p465 = scmp.le.s32.totalorder 1, %s27
      %p466 = scmp.lt.s32.totalorder %s27, 3
      %p467 = pnand %p465, %p466
      %p468 = pneg %p467
      // Predicated region
      $region69: #{tpu_custom_call.1} parent=5 // pred_check
        _
      $region70: #{tpu_custom_call.1} parent=5 // pred_check_branch
        %470 = sbr.rel (%p467) target = $region72
      $region71: #{tpu_custom_call.1} parent=5 // pred_region
        %s471 = ssub.s32 %s27, 1
        %s472 = sand.u32 %s54, 1
        %s473 = scalar_lea.sflag [#allocation6], %s472
        %s474 = sand.u32 %s54, 1
        %s475 = smul.addr %s474, 8
        %s476 = scalar_lea.vmem [#allocation5], %s475
        // Predicated region
        $region73: #{tpu_custom_call.1} parent=71 // pred_check
          %p477 = pneg %p67
        $region74: #{tpu_custom_call.1} parent=71 // pred_check_branch
          %479 = sbr.rel (%p477) target = $region76
        $region75: #{tpu_custom_call.1} parent=71 // pred_region
          %480 = dma.done %s473, 128
        $region76: #{tpu_custom_call.1} parent=71 // pred_fallthru
          _
        // Predicated region
        $region77: #{tpu_custom_call.1} parent=71 // pred_check
          %p481 = pneg %p88
        $region78: #{tpu_custom_call.1} parent=71 // pred_check_branch
          %483 = sbr.rel (%p481) target = $region80
        $region79: #{tpu_custom_call.1} parent=71 // pred_region
          %484 = dma.done [#allocation9], 1024
        $region80: #{tpu_custom_call.1} parent=71 // pred_fallthru
          _
        // Predicated region
        $region81: #{tpu_custom_call.1} parent=71 // pred_check
          %p485 = pneg %p130
        $region82: #{tpu_custom_call.1} parent=71 // pred_check_branch
          %487 = sbr.rel (%p485) target = $region84
        $region83: #{tpu_custom_call.1} parent=71 // pred_region
          %488 = dma.done [#allocation9], 1024
        $region84: #{tpu_custom_call.1} parent=71 // pred_fallthru
          _
        // Predicated region
        $region85: #{tpu_custom_call.1} parent=71 // pred_check
          %p489 = pneg %p214
        $region86: #{tpu_custom_call.1} parent=71 // pred_check_branch
          %491 = sbr.rel (%p489) target = $region88
        $region87: #{tpu_custom_call.1} parent=71 // pred_region
          %492 = dma.done [#allocation12], 1024
        $region88: #{tpu_custom_call.1} parent=71 // pred_fallthru
          _
        // Predicated region
        $region89: #{tpu_custom_call.1} parent=71 // pred_check
          %p493 = pneg %p298
        $region90: #{tpu_custom_call.1} parent=71 // pred_check_branch
          %495 = sbr.rel (%p493) target = $region92
        $region91: #{tpu_custom_call.1} parent=71 // pred_region
          %496 = dma.done [#allocation12], 1024
        $region92: #{tpu_custom_call.1} parent=71 // pred_fallthru
          _
        %s497 = sand.u32 %s54, 1
        %s498 = scalar_lea.sflag [#allocation6], %s497
        %s499 = sand.u32 %s54, 1
        %s500 = smul.addr %s499, 8
        %s501 = scalar_lea.vmem [#allocation5], %s500
        %p502 = pneg %p67
        %p503 = pneg %p64
        %p504 = pneg %p88
        %p505 = pneg %p85
        %p506 = pneg %p109
        %p507 = pneg %p106
        %p508 = pneg %p130
        %p509 = pneg %p127
        %p510 = pneg %p151
        %p511 = pneg %p148
        %p512 = pneg %p172
        %p513 = pneg %p169
        %p514 = pneg %p193
        %p515 = pneg %p190
        %p516 = pneg %p214
        %p517 = pneg %p211
        %p518 = pneg %p235
        %p519 = pneg %p232
        %p520 = pneg %p256
        %p521 = pneg %p253
        %p522 = pneg %p277
        %p523 = pneg %p274
        %p524 = pneg %p298
        %p525 = pneg %p295
        %p526 = pneg %p319
        %p527 = pneg %p316
        %p528 = pneg %p347
        %p529 = pneg %p344
        %s530 = sand.u32 %s334, 1
        %s531 = scalar_lea.sflag [#allocation7], %s530
        %s532 = sand.u32 %s334, 1
        %s533 = smul.addr %s532, 16
        %s534 = scalar_lea.vmem [#allocation14], %s533
        %s535 = smul.u32 2, %s36
        %s536 = smul.u32 2, %s36
        %p538 = scmp.eq.s32.totalorder %s37, 0
        // Predicated region
        $region93: #{tpu_custom_call.1} parent=71 // pred_check
          %p539 = pneg %p538
        $region94: #{tpu_custom_call.1} parent=71 // pred_check_branch
          %541 = sbr.rel (%p539) target = $region96
        $region95: #{tpu_custom_call.1} parent=71 // pred_region
          %542 = vst [vmem:[#allocation2] sm:$0xff] 0.0
          %543 = vst [vmem:[#allocation2 + $0x10] sm:$0xff] 0.0
          %544 = vst [vmem:[#allocation3] sm:$0xff] 0.0
          %545 = vst [vmem:[#allocation3 + $0x10] sm:$0xff] 0.0
          %546 = vst [vmem:[#allocation4] sm:$0x3] 0.0
        $region96: #{tpu_custom_call.1} parent=71 // pred_fallthru
          _
        %v547 = vld [vmem:[%s476] sm:$0xf]
        %v548 = vld [vmem:[%s476 + $0x4] sm:$0xf]
        %v549 = vld [vmem:[#allocation8] sm:$0xf]
        %v550 = vld [vmem:[#allocation8 + $0x4] sm:$0xf]
        %v551 = vld [vmem:[#allocation8 + $0x8] sm:$0xf]
        %v552 = vld [vmem:[#allocation8 + $0xc] sm:$0xf]
        %v553 = vld [vmem:[#allocation8 + $0x10] sm:$0xf]
        %v554 = vld [vmem:[#allocation8 + $0x14] sm:$0xf]
        %v555 = vld [vmem:[#allocation8 + $0x18] sm:$0xf]
        %v556 = vld [vmem:[#allocation8 + $0x1c] sm:$0xf]
        %v557 = vld [vmem:[#allocation8 + $0x20] sm:$0xf]
        %v558 = vld [vmem:[#allocation8 + $0x24] sm:$0xf]
        %v559 = vld [vmem:[#allocation8 + $0x28] sm:$0xf]
        %v560 = vld [vmem:[#allocation8 + $0x2c] sm:$0xf]
        %v561 = vld [vmem:[#allocation8 + $0x30] sm:$0xf]
        %v562 = vld [vmem:[#allocation8 + $0x34] sm:$0xf]
        %v563 = vld [vmem:[#allocation8 + $0x38] sm:$0xf]
        %v564 = vld [vmem:[#allocation8 + $0x3c] sm:$0xf]
        %v565 = vld [vmem:[%s2] sm:$0x1]
        %v567 = vlaneseq
        %v568 = vshrl.u32 %v567, 7
        %v569 = vsub.s32 0, %v568
        %v570 = vrot.slane %v565, %v569
        %v574 = vunpack.c.l.b16 %v547
        %v575 = vunpack.c.l.b16 %v548
        %v576 = vpack.c.b16 %v575, %v574
        %v594 = vunpack.c.l.b16 %v549
        %v595 = vunpack.c.l.b16 %v550
        %v596 = vunpack.c.l.b16 %v551
        %v597 = vunpack.c.l.b16 %v552
        %v598 = vunpack.c.l.b16 %v553
        %v599 = vunpack.c.l.b16 %v554
        %v600 = vunpack.c.l.b16 %v555
        %v601 = vunpack.c.l.b16 %v556
        %v602 = vunpack.c.l.b16 %v557
        %v603 = vunpack.c.l.b16 %v558
        %v604 = vunpack.c.l.b16 %v559
        %v605 = vunpack.c.l.b16 %v560
        %v606 = vunpack.c.l.b16 %v561
        %v607 = vunpack.c.l.b16 %v562
        %v608 = vunpack.c.l.b16 %v563
        %v609 = vunpack.c.l.b16 %v564
        %v610 = vpack.c.b16 %v595, %v594
        %v611 = vpack.c.b16 %v597, %v596
        %v612 = vpack.c.b16 %v599, %v598
        %v613 = vpack.c.b16 %v601, %v600
        %v614 = vpack.c.b16 %v603, %v602
        %v615 = vpack.c.b16 %v605, %v604
        %v616 = vpack.c.b16 %v607, %v606
        %v617 = vpack.c.b16 %v609, %v608
        %626 = vmatprep.subr.bf16.mxu0 0
        %627 = vmatpush1.bf16.msra.mxu0 %v617
        %628 = vmatprep.subr.bf16.mxu0 0
        %629 = vmatpush1.bf16.msra.mxu0 %v616
        %630 = vmatprep.subr.bf16.mxu0 0
        %631 = vmatpush1.bf16.msra.mxu0 %v615
        %632 = vmatprep.subr.bf16.mxu0 0
        %633 = vmatpush1.bf16.msra.mxu0 %v614
        %634 = vmatprep.subr.bf16.mxu0 0
        %635 = vmatpush1.bf16.msra.mxu0 %v613
        %636 = vmatprep.subr.bf16.mxu0 0
        %637 = vmatpush1.bf16.msra.mxu0 %v612
        %638 = vmatprep.subr.bf16.mxu0 0
        %639 = vmatpush1.bf16.msra.mxu0 %v611
        %640 = vmatprep.subr.bf16.mxu0 0
        %641 = vmatpush1.bf16.msra.mxu0 %v610
        %642 = vmatprep.subr.bf16.mxu0 0
        %643 = vmatpush2.bf16.msra.mxu0 0
        %644 = vmatprep.subr.bf16.mxu0 0
        %645 = vmatpush2.bf16.msra.mxu0 0
        %646 = vmatprep.subr.bf16.mxu0 0
        %647 = vmatpush2.bf16.msra.mxu0 0
        %648 = vmatprep.subr.bf16.mxu0 0
        %649 = vmatpush2.bf16.msra.mxu0 0
        %650 = vmatprep.subr.bf16.mxu0 0
        %651 = vmatpush2.bf16.msra.mxu0 0
        %652 = vmatprep.subr.bf16.mxu0 0
        %653 = vmatpush2.bf16.msra.mxu0 0
        %654 = vmatprep.subr.bf16.mxu0 0
        %655 = vmatpush2.bf16.msra.mxu0 0
        %656 = vmatprep.subr.bf16.mxu0 0
        %657 = vmatpush2.bf16.msra.mxu0 0
        %658 = vmatprep.mubr.bf16.mxu0 0
        %659 = vmatmul.mubr.bf16.gmra.mxu0 %v576
        %v660 = vpop.f32.mrf.mxu0
        %v661 = vadd.f32 %v570, %v660
        %v662 = vpop.f32.mrf.mxu0
        %v663 = vpop.f32.mrf.mxu0
        %v664 = vadd.f32 %v570, %v663
        %v665 = vpop.f32.mrf.mxu0
        %666 = vdwg.mxu0
        %v667 = vld [vmem:[#allocation10] sm:$0xf]
        %v668 = vld [vmem:[#allocation10 + $0x4] sm:$0xf]
        %v669 = vld [vmem:[#allocation10 + $0x8] sm:$0xf]
        %v670 = vld [vmem:[#allocation10 + $0xc] sm:$0xf]
        %v671 = vld [vmem:[#allocation10 + $0x10] sm:$0xf]
        %v672 = vld [vmem:[#allocation10 + $0x14] sm:$0xf]
        %v673 = vld [vmem:[#allocation10 + $0x18] sm:$0xf]
        %v674 = vld [vmem:[#allocation10 + $0x1c] sm:$0xf]
        %v675 = vld [vmem:[#allocation10 + $0x20] sm:$0xf]
        %v676 = vld [vmem:[#allocation10 + $0x24] sm:$0xf]
        %v677 = vld [vmem:[#allocation10 + $0x28] sm:$0xf]
        %v678 = vld [vmem:[#allocation10 + $0x2c] sm:$0xf]
        %v679 = vld [vmem:[#allocation10 + $0x30] sm:$0xf]
        %v680 = vld [vmem:[#allocation10 + $0x34] sm:$0xf]
        %v681 = vld [vmem:[#allocation10 + $0x38] sm:$0xf]
        %v682 = vld [vmem:[#allocation10 + $0x3c] sm:$0xf]
        %v683 = vld [vmem:[%s4] sm:$0x1]
        %v685 = vlaneseq
        %v686 = vshrl.u32 %v685, 7
        %v687 = vsub.s32 0, %v686
        %v688 = vrot.slane %v683, %v687
        %v706 = vunpack.c.l.b16 %v667
        %v707 = vunpack.c.l.b16 %v668
        %v708 = vunpack.c.l.b16 %v669
        %v709 = vunpack.c.l.b16 %v670
        %v710 = vunpack.c.l.b16 %v671
        %v711 = vunpack.c.l.b16 %v672
        %v712 = vunpack.c.l.b16 %v673
        %v713 = vunpack.c.l.b16 %v674
        %v714 = vunpack.c.l.b16 %v675
        %v715 = vunpack.c.l.b16 %v676
        %v716 = vunpack.c.l.b16 %v677
        %v717 = vunpack.c.l.b16 %v678
        %v718 = vunpack.c.l.b16 %v679
        %v719 = vunpack.c.l.b16 %v680
        %v720 = vunpack.c.l.b16 %v681
        %v721 = vunpack.c.l.b16 %v682
        %v722 = vpack.c.b16 %v707, %v706
        %v723 = vpack.c.b16 %v709, %v708
        %v724 = vpack.c.b16 %v711, %v710
        %v725 = vpack.c.b16 %v713, %v712
        %v726 = vpack.c.b16 %v715, %v714
        %v727 = vpack.c.b16 %v717, %v716
        %v728 = vpack.c.b16 %v719, %v718
        %v729 = vpack.c.b16 %v721, %v720
        %738 = vmatprep.subr.bf16.mxu0 0
        %739 = vmatpush1.bf16.msra.mxu0 %v729
        %740 = vmatprep.subr.bf16.mxu0 0
        %741 = vmatpush1.bf16.msra.mxu0 %v728
        %742 = vmatprep.subr.bf16.mxu0 0
        %743 = vmatpush1.bf16.msra.mxu0 %v727
        %744 = vmatprep.subr.bf16.mxu0 0
        %745 = vmatpush1.bf16.msra.mxu0 %v726
        %746 = vmatprep.subr.bf16.mxu0 0
        %747 = vmatpush1.bf16.msra.mxu0 %v725
        %748 = vmatprep.subr.bf16.mxu0 0
        %749 = vmatpush1.bf16.msra.mxu0 %v724
        %750 = vmatprep.subr.bf16.mxu0 0
        %751 = vmatpush1.bf16.msra.mxu0 %v723
        %752 = vmatprep.subr.bf16.mxu0 0
        %753 = vmatpush1.bf16.msra.mxu0 %v722
        %754 = vmatprep.subr.bf16.mxu0 0
        %755 = vmatpush2.bf16.msra.mxu0 0
        %756 = vmatprep.subr.bf16.mxu0 0
        %757 = vmatpush2.bf16.msra.mxu0 0
        %758 = vmatprep.subr.bf16.mxu0 0
        %759 = vmatpush2.bf16.msra.mxu0 0
        %760 = vmatprep.subr.bf16.mxu0 0
        %761 = vmatpush2.bf16.msra.mxu0 0
        %762 = vmatprep.subr.bf16.mxu0 0
        %763 = vmatpush2.bf16.msra.mxu0 0
        %764 = vmatprep.subr.bf16.mxu0 0
        %765 = vmatpush2.bf16.msra.mxu0 0
        %766 = vmatprep.subr.bf16.mxu0 0
        %767 = vmatpush2.bf16.msra.mxu0 0
        %768 = vmatprep.subr.bf16.mxu0 0
        %769 = vmatpush2.bf16.msra.mxu0 0
        %770 = vmatprep.mubr.bf16.mxu0 0
        %771 = vmatmul.mubr.bf16.gmra.mxu0 %v576
        %v772 = vpop.f32.mrf.mxu0
        %v773 = vadd.f32 %v688, %v772
        %v774 = vpop.f32.mrf.mxu0
        %v775 = vpop.f32.mrf.mxu0
        %v776 = vadd.f32 %v688, %v775
        %v777 = vpop.f32.mrf.mxu0
        %778 = vdwg.mxu0
        %779 = vst [vmem:[#allocation2 + $0x8] sm:$0xff] %v661
        %780 = vst [vmem:[#allocation2 + $0x18] sm:$0xff] %v664
        %v781 = vld [vmem:[%s5] sm:$0xf]
        %v782 = vld [vmem:[#allocation2 + $0x5] sm:$0xff]
        %v783 = vld [vmem:[#allocation2 + $0x15] sm:$0xff]
        %v784 = vlaneseq
        %v785 = vshrl.u32 %v784, 7
        %v786 = vsub.s32 0, %v785
        %v787 = vrot.slane %v781, %v786
        %v788 = vmul.f32 %v782, %v787
        %v789 = vmul.f32 %v783, %v787
        %v790 = vld [vmem:[#allocation2 + $0x6] sm:$0xff]
        %v791 = vld [vmem:[#allocation2 + $0x16] sm:$0xff]
        %v792 = vlaneseq
        %v793 = vshrl.u32 %v792, 7
        %v794 = vsub.s32 1, %v793
        %v795 = vrot.slane %v781, %v794
        %v796 = vmul.f32 %v790, %v795
        %v797 = vmul.f32 %v791, %v795
        %v798 = vadd.f32 %v788, %v796
        %v799 = vadd.f32 %v789, %v797
        %v800 = vld [vmem:[#allocation2 + $0x7] sm:$0xff]
        %v801 = vld [vmem:[#allocation2 + $0x17] sm:$0xff]
        %v802 = vlaneseq
        %v803 = vshrl.u32 %v802, 7
        %v804 = vsub.s32 2, %v803
        %v805 = vrot.slane %v781, %v804
        %v806 = vmul.f32 %v800, %v805
        %v807 = vmul.f32 %v801, %v805
        %v808 = vadd.f32 %v798, %v806
        %v809 = vadd.f32 %v799, %v807
        %v810 = vld [vmem:[#allocation2 + $0x8] sm:$0xff]
        %v811 = vld [vmem:[#allocation2 + $0x18] sm:$0xff]
        %v812 = vlaneseq
        %v813 = vshrl.u32 %v812, 7
        %v814 = vsub.s32 3, %v813
        %v815 = vrot.slane %v781, %v814
        %v816 = vmul.f32 %v810, %v815
        %v817 = vmul.f32 %v811, %v815
        %v818 = vadd.f32 %v808, %v816
        %v819 = vadd.f32 %v809, %v817
        %v820 = vld [vmem:[%s6] sm:$0x1]
        %v822 = vlaneseq
        %v823 = vshrl.u32 %v822, 7
        %v824 = vsub.s32 0, %v823
        %v825 = vrot.slane %v820, %v824
        %v827 = vadd.f32 %v818, %v825
        %v828 = vadd.f32 %v819, %v825
        %v829 = vxor.u32 %v827, 2147483648
        %v830 = vxor.u32 %v828, 2147483648
        %v831 = vmul.f32 %v829, 1.442695
        %v832 = vpow.pop %v831
        %v833 = vmul.f32 %v830, 1.442695
        %v834 = vpow.pop %v833
        %v835 = vadd.f32 %v832, 1.0
        %v836 = vadd.f32 %v834, 1.0
        %v837 = vrcp.pop %v835
        %v838 = vmul.f32 1.0, %v837
        %v839 = vrcp.pop %v836
        %v840 = vmul.f32 1.0, %v839
        %v841 = vmul.f32 %v827, %v838
        %v842 = vmul.f32 %v828, %v840
        %v843 = vld [vmem:[#allocation2 + $0xd] sm:$0x7]
        %v844 = vld [vmem:[#allocation2 + $0x1d] sm:$0x7]
        %845 = vst [vmem:[#allocation2 + $0x5] sm:$0x7] %v843
        %846 = vst [vmem:[#allocation2 + $0x15] sm:$0x7] %v844
        %v847 = vpack.c.bf16 %v842, %v841
        %v848 = vld [vmem:[#allocation11] sm:$0xf]
        %v849 = vld [vmem:[#allocation11 + $0x4] sm:$0xf]
        %v850 = vld [vmem:[#allocation11 + $0x8] sm:$0xf]
        %v851 = vld [vmem:[#allocation11 + $0xc] sm:$0xf]
        %v852 = vld [vmem:[#allocation11 + $0x10] sm:$0xf]
        %v853 = vld [vmem:[#allocation11 + $0x14] sm:$0xf]
        %v854 = vld [vmem:[#allocation11 + $0x18] sm:$0xf]
        %v855 = vld [vmem:[#allocation11 + $0x1c] sm:$0xf]
        %v856 = vld [vmem:[#allocation11 + $0x20] sm:$0xf]
        %v857 = vld [vmem:[#allocation11 + $0x24] sm:$0xf]
        %v858 = vld [vmem:[#allocation11 + $0x28] sm:$0xf]
        %v859 = vld [vmem:[#allocation11 + $0x2c] sm:$0xf]
        %v860 = vld [vmem:[#allocation11 + $0x30] sm:$0xf]
        %v861 = vld [vmem:[#allocation11 + $0x34] sm:$0xf]
        %v862 = vld [vmem:[#allocation11 + $0x38] sm:$0xf]
        %v863 = vld [vmem:[#allocation11 + $0x3c] sm:$0xf]
        %v864 = vld [vmem:[%s8] sm:$0x1]
        %v866 = vlaneseq
        %v867 = vshrl.u32 %v866, 7
        %v868 = vsub.s32 0, %v867
        %v869 = vrot.slane %v864, %v868
        %v887 = vunpack.c.l.b16 %v848
        %v888 = vunpack.c.l.b16 %v849
        %v889 = vunpack.c.l.b16 %v850
        %v890 = vunpack.c.l.b16 %v851
        %v891 = vunpack.c.l.b16 %v852
        %v892 = vunpack.c.l.b16 %v853
        %v893 = vunpack.c.l.b16 %v854
        %v894 = vunpack.c.l.b16 %v855
        %v895 = vunpack.c.l.b16 %v856
        %v896 = vunpack.c.l.b16 %v857
        %v897 = vunpack.c.l.b16 %v858
        %v898 = vunpack.c.l.b16 %v859
        %v899 = vunpack.c.l.b16 %v860
        %v900 = vunpack.c.l.b16 %v861
        %v901 = vunpack.c.l.b16 %v862
        %v902 = vunpack.c.l.b16 %v863
        %v903 = vpack.c.b16 %v888, %v887
        %v904 = vpack.c.b16 %v890, %v889
        %v905 = vpack.c.b16 %v892, %v891
        %v906 = vpack.c.b16 %v894, %v893
        %v907 = vpack.c.b16 %v896, %v895
        %v908 = vpack.c.b16 %v898, %v897
        %v909 = vpack.c.b16 %v900, %v899
        %v910 = vpack.c.b16 %v902, %v901
        %919 = vmatprep.subr.bf16.mxu0 0
        %920 = vmatpush1.bf16.msra.mxu0 %v910
        %921 = vmatprep.subr.bf16.mxu0 0
        %922 = vmatpush1.bf16.msra.mxu0 %v909
        %923 = vmatprep.subr.bf16.mxu0 0
        %924 = vmatpush1.bf16.msra.mxu0 %v908
        %925 = vmatprep.subr.bf16.mxu0 0
        %926 = vmatpush1.bf16.msra.mxu0 %v907
        %927 = vmatprep.subr.bf16.mxu0 0
        %928 = vmatpush1.bf16.msra.mxu0 %v906
        %929 = vmatprep.subr.bf16.mxu0 0
        %930 = vmatpush1.bf16.msra.mxu0 %v905
        %931 = vmatprep.subr.bf16.mxu0 0
        %932 = vmatpush1.bf16.msra.mxu0 %v904
        %933 = vmatprep.subr.bf16.mxu0 0
        %934 = vmatpush1.bf16.msra.mxu0 %v903
        %935 = vmatprep.subr.bf16.mxu0 0
        %936 = vmatpush2.bf16.msra.mxu0 0
        %937 = vmatprep.subr.bf16.mxu0 0
        %938 = vmatpush2.bf16.msra.mxu0 0
        %939 = vmatprep.subr.bf16.mxu0 0
        %940 = vmatpush2.bf16.msra.mxu0 0
        %941 = vmatprep.subr.bf16.mxu0 0
        %942 = vmatpush2.bf16.msra.mxu0 0
        %943 = vmatprep.subr.bf16.mxu0 0
        %944 = vmatpush2.bf16.msra.mxu0 0
        %945 = vmatprep.subr.bf16.mxu0 0
        %946 = vmatpush2.bf16.msra.mxu0 0
        %947 = vmatprep.subr.bf16.mxu0 0
        %948 = vmatpush2.bf16.msra.mxu0 0
        %949 = vmatprep.subr.bf16.mxu0 0
        %950 = vmatpush2.bf16.msra.mxu0 0
        %951 = vmatprep.mubr.bf16.mxu0 0
        %952 = vmatmul.mubr.bf16.gmra.mxu0 %v847
        %v953 = vpop.f32.mrf.mxu0
        %v954 = vadd.f32 %v869, %v953
        %v955 = vpop.f32.mrf.mxu0
        %v956 = vpop.f32.mrf.mxu0
        %v957 = vadd.f32 %v869, %v956
        %v958 = vpop.f32.mrf.mxu0
        %959 = vdwg.mxu0
        %v960 = vld [vmem:[%s9] sm:$0x1]
        %961 = vst [vmem:[#allocation3 + $0x8] sm:$0xff] %v954
        %962 = vst [vmem:[#allocation3 + $0x18] sm:$0xff] %v957
        %v963 = vld [vmem:[#allocation3 + $0x8] sm:$0x1]
        %v964 = vld [vmem:[#allocation3 + $0x18] sm:$0x1]
        %v965 = vld [vmem:[#allocation4] sm:$0x3]
        %v967 = vlaneseq
        %v968 = vshrl.u32 %v967, 7
        %v969 = vsub.s32 0, %v968
        %v970 = vrot.slane %v960, %v969
        %v972 = vmul.f32 %v965, %v970
        %v975 = vunpack.c.l.s4 1966171168
        %v976 = vunpack.c.0.s8 %v975
        %v977 = vlaneseq
        %v978 = vshrl.u32 %v977, 7
        %v979 = vsub.s32 %v976, %v978
        %v980 = vrot.slane %v972, %v979
        %v981 = vcombine.high %v980, %v980
        %v983 = vunpack.c.l.s4 1966171168
        %v984 = vunpack.c.0.s8 %v983
        %v985 = vlaneseq
        %v986 = vshrl.u32 %v985, 7
        %v987 = vsub.s32 %v984, %v986
        %v988 = vrot.slane %v980, %v987
        %v990 = vunpack.c.l.s4 1966171168
        %v991 = vunpack.c.0.s8 %v990
        %v992 = vlaneseq
        %v993 = vshrl.u32 %v992, 7
        %v994 = vsub.s32 %v991, %v993
        %v995 = vrot.slane %v981, %v994
        %v998 = vadd.f32 %v963, %v988
        %v999 = vadd.f32 %v964, %v995
        %1000 = vst [vmem:[#allocation3 + $0x8] sm:$0x1] %v998
        %1001 = vst [vmem:[#allocation3 + $0x18] sm:$0x1] %v999
        %v1002 = vld [vmem:[#allocation3 + $0x7] sm:$0xff]
        %v1003 = vld [vmem:[#allocation3 + $0x17] sm:$0xff]
        %v1004 = vld [vmem:[#allocation3 + $0x8] sm:$0xff]
        %v1005 = vld [vmem:[#allocation3 + $0x18] sm:$0xff]
        %v1006 = vmul.f32 %v970, %v1002
        %v1007 = vmul.f32 %v970, %v1003
        %v1008 = vadd.f32 %v1004, %v1006
        %v1009 = vadd.f32 %v1005, %v1007
        %1010 = vst [vmem:[#allocation3 + $0x8] sm:$0xff] %v1008
        %1011 = vst [vmem:[#allocation3 + $0x18] sm:$0xff] %v1009
        %v1012 = vmul.f32 %v960, %v960
        %v1013 = vld [vmem:[#allocation3 + $0x6] sm:$0xff]
        %v1014 = vld [vmem:[#allocation3 + $0x16] sm:$0xff]
        %v1015 = vld [vmem:[#allocation3 + $0x8] sm:$0xff]
        %v1016 = vld [vmem:[#allocation3 + $0x18] sm:$0xff]
        %v1018 = vlaneseq
        %v1019 = vshrl.u32 %v1018, 7
        %v1020 = vsub.s32 0, %v1019
        %v1021 = vrot.slane %v1012, %v1020
        %v1023 = vmul.f32 %v1021, %v1013
        %v1024 = vmul.f32 %v1021, %v1014
        %v1025 = vadd.f32 %v1015, %v1023
        %v1026 = vadd.f32 %v1016, %v1024
        %1027 = vst [vmem:[#allocation3 + $0x8] sm:$0xff] %v1025
        %1028 = vst [vmem:[#allocation3 + $0x18] sm:$0xff] %v1026
        %v1029 = vmul.f32 %v1012, %v1012
        %v1030 = vld [vmem:[#allocation3 + $0x4] sm:$0xff]
        %v1031 = vld [vmem:[#allocation3 + $0x14] sm:$0xff]
        %v1032 = vld [vmem:[#allocation3 + $0x8] sm:$0xff]
        %v1033 = vld [vmem:[#allocation3 + $0x18] sm:$0xff]
        %v1035 = vlaneseq
        %v1036 = vshrl.u32 %v1035, 7
        %v1037 = vsub.s32 0, %v1036
        %v1038 = vrot.slane %v1029, %v1037
        %v1040 = vmul.f32 %v1038, %v1030
        %v1041 = vmul.f32 %v1038, %v1031
        %v1042 = vadd.f32 %v1032, %v1040
        %v1043 = vadd.f32 %v1033, %v1041
        %1044 = vst [vmem:[#allocation3 + $0x8] sm:$0xff] %v1042
        %1045 = vst [vmem:[#allocation3 + $0x18] sm:$0xff] %v1043
        %v1046 = vld [vmem:[#allocation3 + $0x8] sm:$0xff]
        %v1047 = vld [vmem:[#allocation3 + $0x18] sm:$0xff]
        %v1050 = vrot.slane %v1047, 7
        %1053 = vst [vmem:[#allocation4 - $0x7] sm:$0x80] %v1046
        %1054 = vst [vmem:[#allocation4 + $0x1] sm:$0x1] %v1050
        %1055 = vadd.xlane.f32.xlu0 %v1046
        %v1056 = vpop.xlane.xlu0 %1055
        %1057 = vadd.xlane.f32.xlu0 %v1047
        %v1058 = vpop.xlane.xlu0 %1057
        %v1059 = vld [vmem:[%s10] sm:$0x1]
        %v1061 = vlaneseq
        %v1062 = vshrl.u32 %v1061, 7
        %v1063 = vsub.s32 0, %v1062
        %v1064 = vrot.slane %v1059, %v1063
        %v1066 = vadd.f32 %v1056, %v1064
        %v1067 = vadd.f32 %v1058, %v1064
        %v1068 = vmul.f32 %v1066, %v841
        %v1069 = vmul.f32 %v1067, %v842
        %v1070 = vxor.u32 %v773, 2147483648
        %v1071 = vxor.u32 %v776, 2147483648
        %v1072 = vmul.f32 %v1070, 1.442695
        %v1073 = vpow.pop %v1072
        %v1074 = vmul.f32 %v1071, 1.442695
        %v1075 = vpow.pop %v1074
        %v1076 = vadd.f32 %v1073, 1.0
        %v1077 = vadd.f32 %v1075, 1.0
        %v1078 = vrcp.pop %v1076
        %v1079 = vmul.f32 1.0, %v1078
        %v1080 = vrcp.pop %v1077
        %v1081 = vmul.f32 1.0, %v1080
        %v1082 = vmul.f32 %v773, %v1079
        %v1083 = vmul.f32 %v776, %v1081
        %v1084 = vmul.f32 %v1068, %v1082
        %v1085 = vmul.f32 %v1069, %v1083
        %v1086 = vpack.c.bf16 %v1085, %v1084
        %v1087 = vld [vmem:[#allocation13] sm:$0xf]
        %v1088 = vld [vmem:[#allocation13 + $0x4] sm:$0xf]
        %v1089 = vld [vmem:[#allocation13 + $0x8] sm:$0xf]
        %v1090 = vld [vmem:[#allocation13 + $0xc] sm:$0xf]
        %v1091 = vld [vmem:[#allocation13 + $0x10] sm:$0xf]
        %v1092 = vld [vmem:[#allocation13 + $0x14] sm:$0xf]
        %v1093 = vld [vmem:[#allocation13 + $0x18] sm:$0xf]
        %v1094 = vld [vmem:[#allocation13 + $0x1c] sm:$0xf]
        %v1095 = vld [vmem:[#allocation13 + $0x20] sm:$0xf]
        %v1096 = vld [vmem:[#allocation13 + $0x24] sm:$0xf]
        %v1097 = vld [vmem:[#allocation13 + $0x28] sm:$0xf]
        %v1098 = vld [vmem:[#allocation13 + $0x2c] sm:$0xf]
        %v1099 = vld [vmem:[#allocation13 + $0x30] sm:$0xf]
        %v1100 = vld [vmem:[#allocation13 + $0x34] sm:$0xf]
        %v1101 = vld [vmem:[#allocation13 + $0x38] sm:$0xf]
        %v1102 = vld [vmem:[#allocation13 + $0x3c] sm:$0xf]
        %v1103 = vld [vmem:[%s12] sm:$0x1]
        %v1105 = vlaneseq
        %v1106 = vshrl.u32 %v1105, 7
        %v1107 = vsub.s32 0, %v1106
        %v1108 = vrot.slane %v1103, %v1107
        %v1126 = vunpack.c.l.b16 %v1087
        %v1127 = vunpack.c.l.b16 %v1088
        %v1128 = vunpack.c.l.b16 %v1089
        %v1129 = vunpack.c.l.b16 %v1090
        %v1130 = vunpack.c.l.b16 %v1091
        %v1131 = vunpack.c.l.b16 %v1092
        %v1132 = vunpack.c.l.b16 %v1093
        %v1133 = vunpack.c.l.b16 %v1094
        %v1134 = vunpack.c.l.b16 %v1095
        %v1135 = vunpack.c.l.b16 %v1096
        %v1136 = vunpack.c.l.b16 %v1097
        %v1137 = vunpack.c.l.b16 %v1098
        %v1138 = vunpack.c.l.b16 %v1099
        %v1139 = vunpack.c.l.b16 %v1100
        %v1140 = vunpack.c.l.b16 %v1101
        %v1141 = vunpack.c.l.b16 %v1102
        %v1142 = vpack.c.b16 %v1127, %v1126
        %v1143 = vpack.c.b16 %v1129, %v1128
        %v1144 = vpack.c.b16 %v1131, %v1130
        %v1145 = vpack.c.b16 %v1133, %v1132
        %v1146 = vpack.c.b16 %v1135, %v1134
        %v1147 = vpack.c.b16 %v1137, %v1136
        %v1148 = vpack.c.b16 %v1139, %v1138
        %v1149 = vpack.c.b16 %v1141, %v1140
        %1158 = vmatprep.subr.bf16.mxu0 0
        %1159 = vmatpush1.bf16.msra.mxu0 %v1149
        %1160 = vmatprep.subr.bf16.mxu0 0
        %1161 = vmatpush1.bf16.msra.mxu0 %v1148
        %1162 = vmatprep.subr.bf16.mxu0 0
        %1163 = vmatpush1.bf16.msra.mxu0 %v1147
        %1164 = vmatprep.subr.bf16.mxu0 0
        %1165 = vmatpush1.bf16.msra.mxu0 %v1146
        %1166 = vmatprep.subr.bf16.mxu0 0
        %1167 = vmatpush1.bf16.msra.mxu0 %v1145
        %1168 = vmatprep.subr.bf16.mxu0 0
        %1169 = vmatpush1.bf16.msra.mxu0 %v1144
        %1170 = vmatprep.subr.bf16.mxu0 0
        %1171 = vmatpush1.bf16.msra.mxu0 %v1143
        %1172 = vmatprep.subr.bf16.mxu0 0
        %1173 = vmatpush1.bf16.msra.mxu0 %v1142
        %1174 = vmatprep.subr.bf16.mxu0 0
        %1175 = vmatpush2.bf16.msra.mxu0 0
        %1176 = vmatprep.subr.bf16.mxu0 0
        %1177 = vmatpush2.bf16.msra.mxu0 0
        %1178 = vmatprep.subr.bf16.mxu0 0
        %1179 = vmatpush2.bf16.msra.mxu0 0
        %1180 = vmatprep.subr.bf16.mxu0 0
        %1181 = vmatpush2.bf16.msra.mxu0 0
        %1182 = vmatprep.subr.bf16.mxu0 0
        %1183 = vmatpush2.bf16.msra.mxu0 0
        %1184 = vmatprep.subr.bf16.mxu0 0
        %1185 = vmatpush2.bf16.msra.mxu0 0
        %1186 = vmatprep.subr.bf16.mxu0 0
        %1187 = vmatpush2.bf16.msra.mxu0 0
        %1188 = vmatprep.subr.bf16.mxu0 0
        %1189 = vmatpush2.bf16.msra.mxu0 0
        %1190 = vmatprep.mubr.bf16.mxu0 0
        %1191 = vmatmul.mubr.bf16.gmra.mxu0 %v1086
        %v1192 = vpop.f32.mrf.mxu0
        %v1193 = vadd.f32 %v1108, %v1192
        %v1194 = vpop.f32.mrf.mxu0
        %v1195 = vpop.f32.mrf.mxu0
        %v1196 = vadd.f32 %v1108, %v1195
        %v1197 = vpop.f32.mrf.mxu0
        %1198 = vdwg.mxu0
        %1199 = vst [vmem:[%s534] sm:$0xff] %v1193
        %1200 = vst [vmem:[%s534 + $0x8] sm:$0xff] %v1196
        %s1201 = sand.u32 %s334, 1
        %s1202 = scalar_lea.sflag [#allocation7], %s1201
        %s1203 = sand.u32 %s334, 1
        %s1204 = smul.addr %s1203, 16
        %s1205 = scalar_lea.vmem [#allocation14], %s1204
        // Predicated region
        $region97: #{tpu_custom_call.1} parent=71 // pred_check
          %p1206 = pneg %p344
        $region98: #{tpu_custom_call.1} parent=71 // pred_check_branch
          %1208 = sbr.rel (%p1206) target = $region100
        $region99: #{tpu_custom_call.1} parent=71 // pred_region
          %s1209 = smul.u32 2, %s36
          %s1211 = ssub.s32 256, 256
          %1212 = vsyncadd %s1202, %s1211
          %s1213 = smul.addr %s1209, 2
          %s1214 = sadd.s32 %s37, %s1213
          %s1215 = smul.addr %s1214, 128
          %s1216 = scalar_lea.hbm %s13, %s1215
          %s1217 = sshll.u32 %s1205, 4
          %s1218 = int_to_ptr.vmem [resolvable:$true] %s1217
          %1223 = dma.vmem_to_hbm [thread:$0]  %s1218, 256, %s1216, %s1202, 128, 256, 8
        $region100: #{tpu_custom_call.1} parent=71 // pred_fallthru
          _
      $region72: #{tpu_custom_call.1} parent=5 // pred_fallthru
        _
      %p1224 = scmp.le.s32.totalorder 2, %s27
      // Predicated region
      $region101: #{tpu_custom_call.1} parent=5 // pred_check
        %p1225 = pneg %p1224
      $region102: #{tpu_custom_call.1} parent=5 // pred_check_branch
        %1227 = sbr.rel (%p1225) target = $region104
      $region103: #{tpu_custom_call.1} parent=5 // pred_region
        %s1228 = ssub.s32 %s27, 2
        // Predicated region
        $region105: #{tpu_custom_call.1} parent=103 // pred_check
          %p1229 = pneg %p350
        $region106: #{tpu_custom_call.1} parent=103 // pred_check_branch
          %1231 = sbr.rel (%p1229) target = $region108
        $region107: #{tpu_custom_call.1} parent=103 // pred_region
          %s1232 = sand.u32 %s335, 1
          %s1233 = scalar_lea.sflag [#allocation7], %s1232
          %s1234 = sand.u32 %s335, 1
          %s1235 = smul.addr %s1234, 16
          %s1236 = scalar_lea.vmem [#allocation14], %s1235
          %1237 = dma.done %s1233, 256
        $region108: #{tpu_custom_call.1} parent=103 // pred_fallthru
          _
      $region104: #{tpu_custom_call.1} parent=5 // pred_fallthru
        _
    $region6: #{tpu_custom_call.1} parent=1 // loop_footer
      %s31 = sadd.s32 1, %s27
    $region7: #{tpu_custom_call.1} parent=1 // loop_footer_branch
      %26 = sbr.rel target = $region3
    $region8: #{tpu_custom_call.1} parent=1 // loop_exit
      _
    %1238 = vsyncpa [#allocation6], 1
    %s1239 = scalar_lea.sflag [#allocation6], 1
    %1240 = vsyncpa %s1239, 1
    %1241 = vsyncpa [#allocation9], 1
    %1242 = vsyncpa [#allocation12], 1
    %1243 = vsyncpa [#allocation7], 1
    %s1244 = scalar_lea.sflag [#allocation7], 1
    %1245 = vsyncpa %s1244, 1

</llo_original>
